<compile_context>
chip_gen: v5e
topology: v5e:2x2
jax: 0.10.0
libtpu: 0.0.40
codegen_flags: <defaults>
</compile_context>

<pallas_src>
import functools

import jax
import jax.numpy as jnp
from jax.experimental import pallas as pl
from jax.experimental.pallas import tpu as pltpu


# ----------------------------------------------------------------------------
# Pallas kernel: fused matmul + bias + activation
# ----------------------------------------------------------------------------
def _matmul_bias_act_kernel(x_ref, w_ref, b_ref, o_ref, *, activation):
    """o = act(X @ W + b); bf16 MXU inputs, f32 accumulation/epilogue."""
    acc = jnp.dot(x_ref[...], w_ref[...], preferred_element_type=jnp.float32)
    acc = acc + b_ref[...]                      # (1, N) broadcast over rows
    if activation == "relu":
        acc = jnp.maximum(acc, 0.0)
    elif activation == "sigmoid":
        acc = 1.0 / (1.0 + jnp.exp(-acc))
    o_ref[...] = acc.astype(o_ref.dtype)


_BLOCK_M = 512  # rows per grid step: fits comfortably in v7x's 32 MiB scoped VMEM
                # (double-buffered bf16 patch tile + resident weights << 8 MiB),
                # big enough to amortize per-step overhead on v5e/v6e.


def pallas_matmul_bias_act(x, w, b, *, activation, out_dtype=jnp.float32):
    """x: (M, K) bf16, w: (K, N) bf16, b: (1, N) f32 -> (M, N) out_dtype.

    Tiled over M; the (small) weight and bias stay resident as full blocks.
    """
    M, K = x.shape
    K2, N = w.shape
    assert K == K2 and b.shape == (1, N)
    tm = min(_BLOCK_M, M)                 # tm == M (full dim) or multiple of 8
    grid_m = pl.cdiv(M, tm)
    kernel = functools.partial(_matmul_bias_act_kernel, activation=activation)
    return pl.pallas_call(
        kernel,
        out_shape=jax.ShapeDtypeStruct((M, N), out_dtype),
        grid=(grid_m,),
        in_specs=[
            pl.BlockSpec((tm, K), lambda i: (i, 0)),   # activations: tiled over M
            pl.BlockSpec((K, N), lambda i: (0, 0)),    # weight: resident
            pl.BlockSpec((1, N), lambda i: (0, 0)),    # bias: resident
        ],
        out_specs=pl.BlockSpec((tm, N), lambda i: (i, 0)),
        compiler_params=pltpu.CompilerParams(
            dimension_semantics=("parallel",),         # shard M across TCs (v7x)
        ),
    )(x, w, b)


# ----------------------------------------------------------------------------
# One-time weight preparation (matmul layouts, bf16, flips) -- not per forward
# ----------------------------------------------------------------------------
def _deconv1x1_to_matmul(w, b):
    """ConvTranspose2d(L, C, 4, 1, 0) applied to a 1x1 map == dense layer.

    w: (Cin, Cout, 4, 4) PyTorch layout -> (Cin, 4*4*Cout), columns = (h, w, c).
    """
    cin, cout, k, _ = w.shape
    w_mat = w.transpose(0, 2, 3, 1).reshape(cin, k * k * cout)
    b_vec = jnp.tile(b, k * k).reshape(1, k * k * cout)
    return w_mat.astype(jnp.bfloat16), b_vec.astype(jnp.float32)


def _deconv_s2_to_matmul(w, b):
    """ConvTranspose2d(Cin, Cout, 4, stride=2, pad=1) as a superpixel matmul.

    Output pixel (2i'+pi, 2j'+pj) depends on input offsets d = i - i' with
    kernel tap k = 2 - 2d + pi - 1, i.e.
        pi=0: (d=0 -> k=1), (d=-1 -> k=3);   pi=1: (d=+1 -> k=0), (d=0 -> k=2)
    Rows of the matmul weight are ordered (d_i+1, d_j+1, ci) to match the 3x3
    im2col below; columns are ordered (pi, pj, co).
    """
    cin, cout, _, _ = w.shape
    w_big = jnp.zeros((3, 3, cin, 2, 2, cout), jnp.float32)
    taps = {(0, 0): 1, (0, -1): 3, (1, 1): 0, (1, 0): 2}   # (parity, offset) -> tap
    for (pi, di), kh in taps.items():
        for (pj, dj), kw in taps.items():
            w_big = w_big.at[di + 1, dj + 1, :, pi, pj, :].set(w[:, :, kh, kw])
    w_mat = w_big.reshape(9 * cin, 4 * cout)
    b_vec = jnp.tile(b, 4).reshape(1, 4 * cout)
    return w_mat.astype(jnp.bfloat16), b_vec.astype(jnp.float32)


def prepare_decoder_params(params):
    return {
        "l1": _deconv1x1_to_matmul(*params["l1"]),
        "l2": _deconv_s2_to_matmul(*params["l2"]),
        "l3": _deconv_s2_to_matmul(*params["l3"]),
        "l4": _deconv_s2_to_matmul(*params["l4"]),
    }


# ----------------------------------------------------------------------------
# Stride-2 deconv layer: NHWC in -> NHWC out (spatially doubled)
# ----------------------------------------------------------------------------
def deconv_s2_pallas(x, w_mat, b_vec, *, activation, out_dtype):
    """x: (B, H, W, Cin) -> (B, 2H, 2W, Cout) via 3x3 im2col + fused matmul."""
    B, H, W, Cin = x.shape
    Cout = w_mat.shape[1] // 4
    xp = jnp.pad(x, ((0, 0), (1, 1), (1, 1), (0, 0)))
    # 3x3 stride-1 "same" im2col, built directly in final (di, dj, ci) layout.
    cols = [xp[:, a:a + H, c:c + W, :] for a in range(3) for c in range(3)]
    pat = jnp.concatenate(cols, axis=-1).reshape(B * H * W, 9 * Cin)
    out = pallas_matmul_bias_act(
        pat.astype(jnp.bfloat16), w_mat, b_vec,
        activation=activation, out_dtype=out_dtype)
    # (B*H*W, 4*Cout) with columns (pi, pj, co) -> interleave to (B, 2H, 2W, Cout)
    out = out.reshape(B, H, W, 2, 2, Cout).transpose(0, 1, 3, 2, 4, 5)
    return out.reshape(B, 2 * H, 2 * W, Cout)


# ----------------------------------------------------------------------------
# CIFARDecoder forward
# ----------------------------------------------------------------------------
def init_params(key, latent_dim):
    """Deterministic synthetic parameters with PyTorch ConvTranspose2d shapes."""
    ks = jax.random.split(key, 8)

    def deconv_params(kw, kb, cin, cout, ksz):
        bound = (1.0 / (cin * ksz * ksz)) ** 0.5
        w = jax.random.uniform(kw, (cin, cout, ksz, ksz), jnp.float32, -bound, bound)
        b = jax.random.uniform(kb, (cout,), jnp.float32, -bound, bound)
        return w, b

    return {
        "l1": deconv_params(ks[0], ks[1], latent_dim, 128, 4),
        "l2": deconv_params(ks[2], ks[3], 128, 64, 4),
        "l3": deconv_params(ks[4], ks[5], 64, 32, 4),
        "l4": deconv_params(ks[6], ks[7], 32, 3, 4),
    }


def cifar_decoder_forward(prepped, z):
    """z: (..., latent_dim) -> (..., 3, 32, 32), matching the PyTorch forward."""
    lead = z.shape[:-1]
    zb = z.reshape(-1, z.shape[-1]).astype(jnp.bfloat16)
    B = zb.shape[0]

    # Layer 1: ConvTranspose2d(L, 128, 4, 1, 0) on 1x1 map == dense layer.
    w1, b1 = prepped["l1"]
    h = pallas_matmul_bias_act(zb, w1, b1, activation="relu",
                               out_dtype=jnp.bfloat16)
    h = h.reshape(B, 4, 4, 128)                     # NHWC, kept throughout

    h = deconv_s2_pallas(h, *prepped["l2"], activation="relu",
                         out_dtype=jnp.bfloat16)    # (B, 8, 8, 64)
    h = deconv_s2_pallas(h, *prepped["l3"], activation="relu",
                         out_dtype=jnp.bfloat16)    # (B, 16, 16, 32)
    h = deconv_s2_pallas(h, *prepped["l4"], activation="sigmoid",
                         out_dtype=jnp.float32)     # (B, 32, 32, 3)

    out = h.transpose(0, 3, 1, 2)                   # NHWC -> NCHW at boundary only
    return out.reshape(*lead, 3, 32, 32)


# ----------------------------------------------------------------------------
# Pure-JAX reference (f32, lax conv) for a correctness check
# ----------------------------------------------------------------------------
def _deconv_ref(x, w, b, stride, padding):
    """PyTorch ConvTranspose2d semantics. x NCHW, w (Cin, Cout, k, k)."""
    k = w.shape[-1]
    rhs = jnp.flip(w, (2, 3)).transpose(1, 0, 2, 3)         # (Cout, Cin, k, k)
    pad = k - 1 - padding
    y = jax.lax.conv_general_dilated(
        x, rhs, window_strides=(1, 1), padding=[(pad, pad), (pad, pad)],
        lhs_dilation=(stride, stride),
        dimension_numbers=("NCHW", "OIHW", "NCHW"))
    return y + b.reshape(1, -1, 1, 1)


def cifar_decoder_reference(params, z):
    x = z.reshape(-1, z.shape[-1], 1, 1)
    x = jax.nn.relu(_deconv_ref(x, *params["l1"], 1, 0))
    x = jax.nn.relu(_deconv_ref(x, *params["l2"], 2, 1))
    x = jax.nn.relu(_deconv_ref(x, *params["l3"], 2, 1))
    x = jax.nn.sigmoid(_deconv_ref(x, *params["l4"], 2, 1))
    return x.reshape(*z.shape[:-1], 3, 32, 32)


if __name__ == "__main__":
    latent_dim = 16
    key = jax.random.PRNGKey(0)
    kz, kp = jax.random.split(key)

    z = jax.random.normal(kz, (2, latent_dim), dtype=jnp.float32)
    params = init_params(kp, latent_dim)
    prepped = prepare_decoder_params(params)

    fwd = jax.jit(cifar_decoder_forward)
    out = fwd(prepped, z)
    jax.block_until_ready(out)

    assert out.shape == (2, 3, 32, 32)
    assert bool(jnp.all((out >= 0.0) & (out <= 1.0)))       # post-sigmoid range

    ref = cifar_decoder_reference(params, z)
    max_err = float(jnp.max(jnp.abs(out - ref)))
    assert max_err < 5e-2, f"max abs error vs f32 reference: {max_err}"

    print("KERNEL_OK")
</pallas_src>

<mosaic_0001>
module attributes {stable_mosaic.version = 11 : i64} {
  func.func @_matmul_bias_act_kernel(%arg0: i32, %arg1: memref<2x16xbf16, #tpu.memory_space<vmem>>, %arg2: memref<16x2048xbf16, #tpu.memory_space<vmem>>, %arg3: memref<1x2048xf32, #tpu.memory_space<vmem>>, %arg4: memref<2x2048xbf16, #tpu.memory_space<vmem>>) attributes {dimension_semantics = [#tpu.dimension_semantics<parallel>], iteration_bounds = array<i64: 1>, scalar_prefetch = 0 : i64, scratch_operands = 0 : i64, tpu.core_type = #tpu.core_type<tc>, window_params = [{transform_indices = @transform_0, window_bounds = array<i64: 2, 16>}, {pipeline_mode = #tpu.pipeline_mode<synchronous>, transform_indices = @transform_1, window_bounds = array<i64: 16, 2048>}, {pipeline_mode = #tpu.pipeline_mode<synchronous>, transform_indices = @transform_2, window_bounds = array<i64: 1, 2048>}, {transform_indices = @transform_3, window_bounds = array<i64: 2, 2048>}]} {
    %c0 = arith.constant 0 : index
    %c0_0 = arith.constant 0 : index
    %0 = vector.load %arg1[%c0, %c0_0] : memref<2x16xbf16, #tpu.memory_space<vmem>>, vector<2x16xbf16>
    %c0_1 = arith.constant 0 : index
    %c0_2 = arith.constant 0 : index
    %1 = vector.load %arg2[%c0_1, %c0_2] : memref<16x2048xbf16, #tpu.memory_space<vmem>>, vector<16x2048xbf16>
    %cst = arith.constant dense<0.000000e+00> : vector<2x2048xf32>
    %2 = tpu.matmul %0, %1, %cst {dimension_numbers = #tpu.dot_dimension_numbers<[1], [0], [0], [1], [0, 0, 1, 1], [], []>} : vector<2x16xbf16>, vector<16x2048xbf16>, vector<2x2048xf32> -> vector<2x2048xf32>
    %c0_3 = arith.constant 0 : index
    %c0_4 = arith.constant 0 : index
    %3 = vector.load %arg3[%c0_3, %c0_4] : memref<1x2048xf32, #tpu.memory_space<vmem>>, vector<1x2048xf32>
    %4 = vector.broadcast %3 : vector<1x2048xf32> to vector<2x2048xf32>
    %5 = arith.addf %2, %4 : vector<2x2048xf32>
    %cst_5 = arith.constant 0.000000e+00 : f32
    %6 = vector.broadcast %cst_5 : f32 to vector<2x2048xf32>
    %7 = arith.maximumf %5, %6 : vector<2x2048xf32>
    %8 = arith.truncf %7 : vector<2x2048xf32> to vector<2x2048xbf16>
    %c0_6 = arith.constant 0 : index
    %c0_7 = arith.constant 0 : index
    %9 = vector.load %arg4[%c0_6, %c0_7] : memref<2x2048xbf16, #tpu.memory_space<vmem>>, vector<2x2048xbf16>
    tpu.vector_store %arg4[%c0_6, %c0_7], %8 {strides = array<i32>} : memref<2x2048xbf16, #tpu.memory_space<vmem>>, vector<2x2048xbf16>,
    return
  }
  func.func @transform_0(%arg0: i32) -> (i32, i32) {
    %c0_i32 = arith.constant 0 : i32
    %c0_i32_0 = arith.constant 0 : i32
    return %arg0, %c0_i32 : i32, i32
  }
  func.func @transform_1(%arg0: i32) -> (i32, i32) {
    %c0_i32 = arith.constant 0 : i32
    %c0_i32_0 = arith.constant 0 : i32
    %c0_i32_1 = arith.constant 0 : i32
    return %c0_i32, %c0_i32_0 : i32, i32
  }
  func.func @transform_2(%arg0: i32) -> (i32, i32) {
    %c0_i32 = arith.constant 0 : i32
    %c0_i32_0 = arith.constant 0 : i32
    %c0_i32_1 = arith.constant 0 : i32
    return %c0_i32, %c0_i32_0 : i32, i32
  }
  func.func @transform_3(%arg0: i32) -> (i32, i32) {
    %c0_i32 = arith.constant 0 : i32
    %c0_i32_0 = arith.constant 0 : i32
    return %arg0, %c0_i32 : i32, i32
  }
}

module attributes {stable_mosaic.version = 11 : i64} {
  func.func @_matmul_bias_act_kernel(%arg0: i32, %arg1: memref<32x1152xbf16, #tpu.memory_space<vmem>>, %arg2: memref<1152x256xbf16, #tpu.memory_space<vmem>>, %arg3: memref<1x256xf32, #tpu.memory_space<vmem>>, %arg4: memref<32x256xbf16, #tpu.memory_space<vmem>>) attributes {dimension_semantics = [#tpu.dimension_semantics<parallel>], iteration_bounds = array<i64: 1>, scalar_prefetch = 0 : i64, scratch_operands = 0 : i64, tpu.core_type = #tpu.core_type<tc>, window_params = [{transform_indices = @transform_0, window_bounds = array<i64: 32, 1152>}, {pipeline_mode = #tpu.pipeline_mode<synchronous>, transform_indices = @transform_1, window_bounds = array<i64: 1152, 256>}, {pipeline_mode = #tpu.pipeline_mode<synchronous>, transform_indices = @transform_2, window_bounds = array<i64: 1, 256>}, {transform_indices = @transform_3, window_bounds = array<i64: 32, 256>}]} {
    %c0 = arith.constant 0 : index
    %c0_0 = arith.constant 0 : index
    %0 = vector.load %arg1[%c0, %c0_0] : memref<32x1152xbf16, #tpu.memory_space<vmem>>, vector<32x1152xbf16>
    %c0_1 = arith.constant 0 : index
    %c0_2 = arith.constant 0 : index
    %1 = vector.load %arg2[%c0_1, %c0_2] : memref<1152x256xbf16, #tpu.memory_space<vmem>>, vector<1152x256xbf16>
    %cst = arith.constant dense<0.000000e+00> : vector<32x256xf32>
    %2 = tpu.matmul %0, %1, %cst {dimension_numbers = #tpu.dot_dimension_numbers<[1], [0], [0], [1], [0, 0, 1, 1], [], []>} : vector<32x1152xbf16>, vector<1152x256xbf16>, vector<32x256xf32> -> vector<32x256xf32>
    %c0_3 = arith.constant 0 : index
    %c0_4 = arith.constant 0 : index
    %3 = vector.load %arg3[%c0_3, %c0_4] : memref<1x256xf32, #tpu.memory_space<vmem>>, vector<1x256xf32>
    %4 = vector.broadcast %3 : vector<1x256xf32> to vector<32x256xf32>
    %5 = arith.addf %2, %4 : vector<32x256xf32>
    %cst_5 = arith.constant 0.000000e+00 : f32
    %6 = vector.broadcast %cst_5 : f32 to vector<32x256xf32>
    %7 = arith.maximumf %5, %6 : vector<32x256xf32>
    %8 = arith.truncf %7 : vector<32x256xf32> to vector<32x256xbf16>
    %c0_6 = arith.constant 0 : index
    %c0_7 = arith.constant 0 : index
    %9 = vector.load %arg4[%c0_6, %c0_7] : memref<32x256xbf16, #tpu.memory_space<vmem>>, vector<32x256xbf16>
    tpu.vector_store %arg4[%c0_6, %c0_7], %8 {strides = array<i32>} : memref<32x256xbf16, #tpu.memory_space<vmem>>, vector<32x256xbf16>,
    return
  }
  func.func @transform_0(%arg0: i32) -> (i32, i32) {
    %c0_i32 = arith.constant 0 : i32
    %c0_i32_0 = arith.constant 0 : i32
    return %arg0, %c0_i32 : i32, i32
  }
  func.func @transform_1(%arg0: i32) -> (i32, i32) {
    %c0_i32 = arith.constant 0 : i32
    %c0_i32_0 = arith.constant 0 : i32
    %c0_i32_1 = arith.constant 0 : i32
    return %c0_i32, %c0_i32_0 : i32, i32
  }
  func.func @transform_2(%arg0: i32) -> (i32, i32) {
    %c0_i32 = arith.constant 0 : i32
    %c0_i32_0 = arith.constant 0 : i32
    %c0_i32_1 = arith.constant 0 : i32
    return %c0_i32, %c0_i32_0 : i32, i32
  }
  func.func @transform_3(%arg0: i32) -> (i32, i32) {
    %c0_i32 = arith.constant 0 : i32
    %c0_i32_0 = arith.constant 0 : i32
    return %arg0, %c0_i32 : i32, i32
  }
}

module attributes {stable_mosaic.version = 11 : i64} {
  func.func @_matmul_bias_act_kernel(%arg0: i32, %arg1: memref<128x576xbf16, #tpu.memory_space<vmem>>, %arg2: memref<576x128xbf16, #tpu.memory_space<vmem>>, %arg3: memref<1x128xf32, #tpu.memory_space<vmem>>, %arg4: memref<128x128xbf16, #tpu.memory_space<vmem>>) attributes {dimension_semantics = [#tpu.dimension_semantics<parallel>], iteration_bounds = array<i64: 1>, scalar_prefetch = 0 : i64, scratch_operands = 0 : i64, tpu.core_type = #tpu.core_type<tc>, window_params = [{transform_indices = @transform_0, window_bounds = array<i64: 128, 576>}, {pipeline_mode = #tpu.pipeline_mode<synchronous>, transform_indices = @transform_1, window_bounds = array<i64: 576, 128>}, {pipeline_mode = #tpu.pipeline_mode<synchronous>, transform_indices = @transform_2, window_bounds = array<i64: 1, 128>}, {transform_indices = @transform_3, window_bounds = array<i64: 128, 128>}]} {
    %c0 = arith.constant 0 : index
    %c0_0 = arith.constant 0 : index
    %0 = vector.load %arg1[%c0, %c0_0] : memref<128x576xbf16, #tpu.memory_space<vmem>>, vector<128x576xbf16>
    %c0_1 = arith.constant 0 : index
    %c0_2 = arith.constant 0 : index
    %1 = vector.load %arg2[%c0_1, %c0_2] : memref<576x128xbf16, #tpu.memory_space<vmem>>, vector<576x128xbf16>
    %cst = arith.constant dense<0.000000e+00> : vector<128x128xf32>
    %2 = tpu.matmul %0, %1, %cst {dimension_numbers = #tpu.dot_dimension_numbers<[1], [0], [0], [1], [0, 0, 1, 1], [], []>} : vector<128x576xbf16>, vector<576x128xbf16>, vector<128x128xf32> -> vector<128x128xf32>
    %c0_3 = arith.constant 0 : index
    %c0_4 = arith.constant 0 : index
    %3 = vector.load %arg3[%c0_3, %c0_4] : memref<1x128xf32, #tpu.memory_space<vmem>>, vector<1x128xf32>
    %4 = vector.broadcast %3 : vector<1x128xf32> to vector<128x128xf32>
    %5 = arith.addf %2, %4 : vector<128x128xf32>
    %cst_5 = arith.constant 0.000000e+00 : f32
    %6 = vector.broadcast %cst_5 : f32 to vector<128x128xf32>
    %7 = arith.maximumf %5, %6 : vector<128x128xf32>
    %8 = arith.truncf %7 : vector<128x128xf32> to vector<128x128xbf16>
    %c0_6 = arith.constant 0 : index
    %c0_7 = arith.constant 0 : index
    %9 = vector.load %arg4[%c0_6, %c0_7] : memref<128x128xbf16, #tpu.memory_space<vmem>>, vector<128x128xbf16>
    tpu.vector_store %arg4[%c0_6, %c0_7], %8 {strides = array<i32>} : memref<128x128xbf16, #tpu.memory_space<vmem>>, vector<128x128xbf16>,
    return
  }
  func.func @transform_0(%arg0: i32) -> (i32, i32) {
    %c0_i32 = arith.constant 0 : i32
    %c0_i32_0 = arith.constant 0 : i32
    return %arg0, %c0_i32 : i32, i32
  }
  func.func @transform_1(%arg0: i32) -> (i32, i32) {
    %c0_i32 = arith.constant 0 : i32
    %c0_i32_0 = arith.constant 0 : i32
    %c0_i32_1 = arith.constant 0 : i32
    return %c0_i32, %c0_i32_0 : i32, i32
  }
  func.func @transform_2(%arg0: i32) -> (i32, i32) {
    %c0_i32 = arith.constant 0 : i32
    %c0_i32_0 = arith.constant 0 : i32
    %c0_i32_1 = arith.constant 0 : i32
    return %c0_i32, %c0_i32_0 : i32, i32
  }
  func.func @transform_3(%arg0: i32) -> (i32, i32) {
    %c0_i32 = arith.constant 0 : i32
    %c0_i32_0 = arith.constant 0 : i32
    return %arg0, %c0_i32 : i32, i32
  }
}

module attributes {stable_mosaic.version = 11 : i64} {
  func.func @_matmul_bias_act_kernel(%arg0: i32, %arg1: memref<512x288xbf16, #tpu.memory_space<vmem>>, %arg2: memref<288x12xbf16, #tpu.memory_space<vmem>>, %arg3: memref<1x12xf32, #tpu.memory_space<vmem>>, %arg4: memref<512x12xf32, #tpu.memory_space<vmem>>) attributes {dimension_semantics = [#tpu.dimension_semantics<parallel>], iteration_bounds = array<i64: 1>, scalar_prefetch = 0 : i64, scratch_operands = 0 : i64, tpu.core_type = #tpu.core_type<tc>, window_params = [{transform_indices = @transform_0, window_bounds = array<i64: 512, 288>}, {pipeline_mode = #tpu.pipeline_mode<synchronous>, transform_indices = @transform_1, window_bounds = array<i64: 288, 12>}, {pipeline_mode = #tpu.pipeline_mode<synchronous>, transform_indices = @transform_2, window_bounds = array<i64: 1, 12>}, {transform_indices = @transform_3, window_bounds = array<i64: 512, 12>}]} {
    %c0 = arith.constant 0 : index
    %c0_0 = arith.constant 0 : index
    %0 = vector.load %arg1[%c0, %c0_0] : memref<512x288xbf16, #tpu.memory_space<vmem>>, vector<512x288xbf16>
    %c0_1 = arith.constant 0 : index
    %c0_2 = arith.constant 0 : index
    %1 = vector.load %arg2[%c0_1, %c0_2] : memref<288x12xbf16, #tpu.memory_space<vmem>>, vector<288x12xbf16>
    %cst = arith.constant dense<0.000000e+00> : vector<512x12xf32>
    %2 = tpu.matmul %0, %1, %cst {dimension_numbers = #tpu.dot_dimension_numbers<[1], [0], [0], [1], [0, 0, 1, 1], [], []>} : vector<512x288xbf16>, vector<288x12xbf16>, vector<512x12xf32> -> vector<512x12xf32>
    %c0_3 = arith.constant 0 : index
    %c0_4 = arith.constant 0 : index
    %3 = vector.load %arg3[%c0_3, %c0_4] : memref<1x12xf32, #tpu.memory_space<vmem>>, vector<1x12xf32>
    %4 = vector.broadcast %3 : vector<1x12xf32> to vector<512x12xf32>
    %5 = arith.addf %2, %4 : vector<512x12xf32>
    %cst_5 = arith.constant 0.000000e+00 : f32
    %6 = vector.broadcast %cst_5 : f32 to vector<512x12xf32>
    %7 = arith.subf %6, %5 : vector<512x12xf32>
    %8 = math.exp %7 : vector<512x12xf32>
    %cst_6 = arith.constant 1.000000e+00 : f32
    %9 = vector.broadcast %cst_6 : f32 to vector<512x12xf32>
    %10 = arith.addf %9, %8 : vector<512x12xf32>
    %cst_7 = arith.constant 1.000000e+00 : f32
    %11 = vector.broadcast %cst_7 : f32 to vector<512x12xf32>
    %12 = arith.divf %11, %10 : vector<512x12xf32>
    %c0_8 = arith.constant 0 : index
    %c0_9 = arith.constant 0 : index
    %13 = vector.load %arg4[%c0_8, %c0_9] : memref<512x12xf32, #tpu.memory_space<vmem>>, vector<512x12xf32>
    tpu.vector_store %arg4[%c0_8, %c0_9], %12 {strides = array<i32>} : memref<512x12xf32, #tpu.memory_space<vmem>>, vector<512x12xf32>,
    return
  }
  func.func @transform_0(%arg0: i32) -> (i32, i32) {
    %c0_i32 = arith.constant 0 : i32
    %c0_i32_0 = arith.constant 0 : i32
    return %arg0, %c0_i32 : i32, i32
  }
  func.func @transform_1(%arg0: i32) -> (i32, i32) {
    %c0_i32 = arith.constant 0 : i32
    %c0_i32_0 = arith.constant 0 : i32
    %c0_i32_1 = arith.constant 0 : i32
    return %c0_i32, %c0_i32_0 : i32, i32
  }
  func.func @transform_2(%arg0: i32) -> (i32, i32) {
    %c0_i32 = arith.constant 0 : i32
    %c0_i32_0 = arith.constant 0 : i32
    %c0_i32_1 = arith.constant 0 : i32
    return %c0_i32, %c0_i32_0 : i32, i32
  }
  func.func @transform_3(%arg0: i32) -> (i32, i32) {
    %c0_i32 = arith.constant 0 : i32
    %c0_i32_0 = arith.constant 0 : i32
    return %arg0, %c0_i32 : i32, i32
  }
}

</mosaic_0001>

<llo_original>
// kernel: cifar_decoder_forward.4
$region0: #{cifar_decoder_forward.4}
  #allocation0 [shape = 'u32[]', space=smem, size = 0x4, offset = 0x4, fixed_abs, tag = 'smem constant byte address 0x4 - core index']
  #allocation1 [shape = 'u32[72,128]{1,0:T(1,128)}', space=vmem, size = 0x9000, scoped, tag = 'internal scratch']
  %s0 = inlined_call_operand.vmem [shape: bf16[2,16], index: 0, kind: input, shape index: {}]
  %s1 = inlined_call_operand.hbm [shape: bf16[16,2048], index: 1, kind: input, shape index: {}]
  %s2 = inlined_call_operand.hbm [shape: f32[1,2048], index: 2, kind: input, shape index: {}]
  %s3 = inlined_call_operand.vmem [shape: bf16[2,2048], index: 3, kind: output, shape index: {}]
  %s4 = sld [smem:[#allocation0]]
  $region30: #{cifar_decoder_forward.4} parent=0
    _
  %s6 = ssub.s32 1, %s4
  %s7 = scalar_select 0, %s6, %s4
  $region1: #{cifar_decoder_forward.4} parent=0
    #allocation2 [shape = 'u8[65536]{0}', space=vmem, size = 0x10000, scoped, tag = 'input window, operand 1, single buffered']
    #allocation3 [shape = 's32[1]{0}', space=sflag, size = 0x4, scoped, tag = 'scoped memory for cifar_decoder_forward.4']
    #allocation4 [shape = 'u8[8192]{0}', space=vmem, size = 0x2000, scoped, tag = 'input window, operand 2, single buffered']
    #allocation5 [shape = 's32[1]{0}', space=sflag, size = 0x4, scoped, tag = 'scoped memory for cifar_decoder_forward.4']
    %8 = vsyncpa [#allocation3], 0
    %9 = vsyncpa [#allocation5], 0
    // Predicated region
    $region2: #{cifar_decoder_forward.4} parent=1 // pred_check
      _
    $region3: #{cifar_decoder_forward.4} parent=1 // pred_check_branch
      %11 = sbr.rel (0) target = $region5
    $region4: #{cifar_decoder_forward.4} parent=1 // pred_region
      _
    $region5: #{cifar_decoder_forward.4} parent=1 // pred_fallthru
      _
    // Predicated region
    $region6: #{cifar_decoder_forward.4} parent=1 // pred_check
      _
    $region7: #{cifar_decoder_forward.4} parent=1 // pred_check_branch
      %13 = sbr.rel (0) target = $region9
    $region8: #{cifar_decoder_forward.4} parent=1 // pred_region
      %15 = vsyncadd [#allocation3], 0
      %s16 = sshll.u32 %s1, 4
      %s17 = int_to_ptr.hbm [resolvable:$true] %s16
      %s18 = sshll.u32 [#allocation2], 4
      %s19 = int_to_ptr.vmem [resolvable:$true] %s18
      %24 = dma.hbm_to_vmem [thread:$0]  %s17, 2048, %s19, [#allocation3], 1024, 1024, 64
    $region9: #{cifar_decoder_forward.4} parent=1 // pred_fallthru
      _
    // Predicated region
    $region10: #{cifar_decoder_forward.4} parent=1 // pred_check
      _
    $region11: #{cifar_decoder_forward.4} parent=1 // pred_check_branch
      %26 = sbr.rel (0) target = $region13
    $region12: #{cifar_decoder_forward.4} parent=1 // pred_region
      %28 = vsyncadd [#allocation5], 0
      %s30 = sshll.u32 %s2, 4
      %s31 = int_to_ptr.hbm [resolvable:$true] %s30
      %s32 = sshll.u32 [#allocation4], 4
      %s33 = int_to_ptr.vmem [resolvable:$true] %s32
      %35 = dma.hbm_to_vmem [thread:$0]  %s31, 256, %s33, [#allocation5]
    $region13: #{cifar_decoder_forward.4} parent=1 // pred_fallthru
      _
    // Predicated region
    $region14: #{cifar_decoder_forward.4} parent=1 // pred_check
      _
    $region15: #{cifar_decoder_forward.4} parent=1 // pred_check_branch
      %37 = sbr.rel (0) target = $region17
    $region16: #{cifar_decoder_forward.4} parent=1 // pred_region
      %39 = dma.done [#allocation3], 2048
    $region17: #{cifar_decoder_forward.4} parent=1 // pred_fallthru
      _
    // Predicated region
    $region18: #{cifar_decoder_forward.4} parent=1 // pred_check
      _
    $region19: #{cifar_decoder_forward.4} parent=1 // pred_check_branch
      %41 = sbr.rel (0) target = $region21
    $region20: #{cifar_decoder_forward.4} parent=1 // pred_region
      %43 = dma.done [#allocation5], 256
    $region21: #{cifar_decoder_forward.4} parent=1 // pred_fallthru
      _
    %v45 = vld [vmem:[%s0] sm:$0x1]
    %v46 = vld [vmem:[#allocation2] sm:$0xff]
    %v47 = vld [vmem:[#allocation2 + $0x8] sm:$0xff]
    %v48 = vld [vmem:[#allocation2 + $0x10] sm:$0xff]
    %v49 = vld [vmem:[#allocation2 + $0x18] sm:$0xff]
    %v50 = vld [vmem:[#allocation2 + $0x20] sm:$0xff]
    %v51 = vld [vmem:[#allocation2 + $0x28] sm:$0xff]
    %v52 = vld [vmem:[#allocation2 + $0x30] sm:$0xff]
    %v53 = vld [vmem:[#allocation2 + $0x38] sm:$0xff]
    %v54 = vld [vmem:[#allocation2 + $0x40] sm:$0xff]
    %v55 = vld [vmem:[#allocation2 + $0x48] sm:$0xff]
    %v56 = vld [vmem:[#allocation2 + $0x50] sm:$0xff]
    %v57 = vld [vmem:[#allocation2 + $0x58] sm:$0xff]
    %v58 = vld [vmem:[#allocation2 + $0x60] sm:$0xff]
    %v59 = vld [vmem:[#allocation2 + $0x68] sm:$0xff]
    %v60 = vld [vmem:[#allocation2 + $0x70] sm:$0xff]
    %v61 = vld [vmem:[#allocation2 + $0x78] sm:$0xff]
    %v62 = vld [vmem:[#allocation4] sm:$0xff]
    %v63 = vld [vmem:[#allocation4 + $0x8] sm:$0xff]
    %v66 = vperm.slane %v62, 0
    %v67 = vperm.slane %v62, 1
    %v68 = vperm.slane %v62, 2
    %v69 = vperm.slane %v62, 3
    %v70 = vperm.slane %v62, 4
    %v71 = vperm.slane %v62, 5
    %v72 = vperm.slane %v62, 6
    %v73 = vperm.slane %v62, 7
    %v74 = vperm.slane %v63, 0
    %v75 = vperm.slane %v63, 1
    %v76 = vperm.slane %v63, 2
    %v77 = vperm.slane %v63, 3
    %v78 = vperm.slane %v63, 4
    %v79 = vperm.slane %v63, 5
    %v80 = vperm.slane %v63, 6
    %v81 = vperm.slane %v63, 7
    %v114 = vunpack.c.l.b16 %v46
    %v115 = vunpack.c.h.b16 %v46
    %v116 = vunpack.c.l.b16 %v47
    %v117 = vunpack.c.h.b16 %v47
    %v118 = vunpack.c.l.b16 %v48
    %v119 = vunpack.c.h.b16 %v48
    %v120 = vunpack.c.l.b16 %v49
    %v121 = vunpack.c.h.b16 %v49
    %v122 = vunpack.c.l.b16 %v50
    %v123 = vunpack.c.h.b16 %v50
    %v124 = vunpack.c.l.b16 %v51
    %v125 = vunpack.c.h.b16 %v51
    %v126 = vunpack.c.l.b16 %v52
    %v127 = vunpack.c.h.b16 %v52
    %v128 = vunpack.c.l.b16 %v53
    %v129 = vunpack.c.h.b16 %v53
    %v130 = vunpack.c.l.b16 %v54
    %v131 = vunpack.c.h.b16 %v54
    %v132 = vunpack.c.l.b16 %v55
    %v133 = vunpack.c.h.b16 %v55
    %v134 = vunpack.c.l.b16 %v56
    %v135 = vunpack.c.h.b16 %v56
    %v136 = vunpack.c.l.b16 %v57
    %v137 = vunpack.c.h.b16 %v57
    %v138 = vunpack.c.l.b16 %v58
    %v139 = vunpack.c.h.b16 %v58
    %v140 = vunpack.c.l.b16 %v59
    %v141 = vunpack.c.h.b16 %v59
    %v142 = vunpack.c.l.b16 %v60
    %v143 = vunpack.c.h.b16 %v60
    %v144 = vunpack.c.l.b16 %v61
    %v145 = vunpack.c.h.b16 %v61
    %v146 = vpack.c.b16 %v130, %v114
    %v147 = vpack.c.b16 %v131, %v115
    %v148 = vpack.c.b16 %v132, %v116
    %v149 = vpack.c.b16 %v133, %v117
    %v150 = vpack.c.b16 %v134, %v118
    %v151 = vpack.c.b16 %v135, %v119
    %v152 = vpack.c.b16 %v136, %v120
    %v153 = vpack.c.b16 %v137, %v121
    %v154 = vpack.c.b16 %v138, %v122
    %v155 = vpack.c.b16 %v139, %v123
    %v156 = vpack.c.b16 %v140, %v124
    %v157 = vpack.c.b16 %v141, %v125
    %v158 = vpack.c.b16 %v142, %v126
    %v159 = vpack.c.b16 %v143, %v127
    %v160 = vpack.c.b16 %v144, %v128
    %v161 = vpack.c.b16 %v145, %v129
    %vm178 = vcmask 130048
    %v180 = vsel %vm178, %v45, 0
    %182 = vmatpush.bf16.msra.mxu0 0
    %183 = vmatpush.bf16.msra.mxu0 0
    %184 = vmatpush.bf16.msra.mxu0 0
    %185 = vmatpush.bf16.msra.mxu0 0
    %186 = vmatpush.bf16.msra.mxu0 0
    %187 = vmatpush.bf16.msra.mxu0 0
    %188 = vmatpush.bf16.msra.mxu0 0
    %189 = vmatpush.bf16.msra.mxu0 %v146
    %190 = vmatmul.bf16.gmra.mxu0 %v180
    %v191 = vpop.f32.mrf.mxu0
    %v192 = vadd.f32 %v66, %v191
    %v193 = vpop.f32.mrf.mxu0
    %194 = vdwg.mxu0
    %195 = vmatpush.bf16.msra.mxu0 0
    %196 = vmatpush.bf16.msra.mxu0 0
    %197 = vmatpush.bf16.msra.mxu0 0
    %198 = vmatpush.bf16.msra.mxu0 0
    %199 = vmatpush.bf16.msra.mxu0 0
    %200 = vmatpush.bf16.msra.mxu0 0
    %201 = vmatpush.bf16.msra.mxu0 0
    %202 = vmatpush.bf16.msra.mxu0 %v147
    %203 = vmatmul.bf16.gmra.mxu0 %v180
    %v204 = vpop.f32.mrf.mxu0
    %v205 = vadd.f32 %v67, %v204
    %v206 = vpop.f32.mrf.mxu0
    %207 = vdwg.mxu0
    %208 = vmatpush.bf16.msra.mxu0 0
    %209 = vmatpush.bf16.msra.mxu0 0
    %210 = vmatpush.bf16.msra.mxu0 0
    %211 = vmatpush.bf16.msra.mxu0 0
    %212 = vmatpush.bf16.msra.mxu0 0
    %213 = vmatpush.bf16.msra.mxu0 0
    %214 = vmatpush.bf16.msra.mxu0 0
    %215 = vmatpush.bf16.msra.mxu0 %v148
    %216 = vmatmul.bf16.gmra.mxu0 %v180
    %v217 = vpop.f32.mrf.mxu0
    %v218 = vadd.f32 %v68, %v217
    %v219 = vpop.f32.mrf.mxu0
    %220 = vdwg.mxu0
    %221 = vmatpush.bf16.msra.mxu0 0
    %222 = vmatpush.bf16.msra.mxu0 0
    %223 = vmatpush.bf16.msra.mxu0 0
    %224 = vmatpush.bf16.msra.mxu0 0
    %225 = vmatpush.bf16.msra.mxu0 0
    %226 = vmatpush.bf16.msra.mxu0 0
    %227 = vmatpush.bf16.msra.mxu0 0
    %228 = vmatpush.bf16.msra.mxu0 %v149
    %229 = vmatmul.bf16.gmra.mxu0 %v180
    %v230 = vpop.f32.mrf.mxu0
    %v231 = vadd.f32 %v69, %v230
    %v232 = vpop.f32.mrf.mxu0
    %233 = vdwg.mxu0
    %234 = vmatpush.bf16.msra.mxu0 0
    %235 = vmatpush.bf16.msra.mxu0 0
    %236 = vmatpush.bf16.msra.mxu0 0
    %237 = vmatpush.bf16.msra.mxu0 0
    %238 = vmatpush.bf16.msra.mxu0 0
    %239 = vmatpush.bf16.msra.mxu0 0
    %240 = vmatpush.bf16.msra.mxu0 0
    %241 = vmatpush.bf16.msra.mxu0 %v150
    %242 = vmatmul.bf16.gmra.mxu0 %v180
    %v243 = vpop.f32.mrf.mxu0
    %v244 = vadd.f32 %v70, %v243
    %v245 = vpop.f32.mrf.mxu0
    %246 = vdwg.mxu0
    %247 = vmatpush.bf16.msra.mxu0 0
    %248 = vmatpush.bf16.msra.mxu0 0
    %249 = vmatpush.bf16.msra.mxu0 0
    %250 = vmatpush.bf16.msra.mxu0 0
    %251 = vmatpush.bf16.msra.mxu0 0
    %252 = vmatpush.bf16.msra.mxu0 0
    %253 = vmatpush.bf16.msra.mxu0 0
    %254 = vmatpush.bf16.msra.mxu0 %v151
    %255 = vmatmul.bf16.gmra.mxu0 %v180
    %v256 = vpop.f32.mrf.mxu0
    %v257 = vadd.f32 %v71, %v256
    %v258 = vpop.f32.mrf.mxu0
    %259 = vdwg.mxu0
    %260 = vmatpush.bf16.msra.mxu0 0
    %261 = vmatpush.bf16.msra.mxu0 0
    %262 = vmatpush.bf16.msra.mxu0 0
    %263 = vmatpush.bf16.msra.mxu0 0
    %264 = vmatpush.bf16.msra.mxu0 0
    %265 = vmatpush.bf16.msra.mxu0 0
    %266 = vmatpush.bf16.msra.mxu0 0
    %267 = vmatpush.bf16.msra.mxu0 %v152
    %268 = vmatmul.bf16.gmra.mxu0 %v180
    %v269 = vpop.f32.mrf.mxu0
    %v270 = vadd.f32 %v72, %v269
    %v271 = vpop.f32.mrf.mxu0
    %272 = vdwg.mxu0
    %273 = vmatpush.bf16.msra.mxu0 0
    %274 = vmatpush.bf16.msra.mxu0 0
    %275 = vmatpush.bf16.msra.mxu0 0
    %276 = vmatpush.bf16.msra.mxu0 0
    %277 = vmatpush.bf16.msra.mxu0 0
    %278 = vmatpush.bf16.msra.mxu0 0
    %279 = vmatpush.bf16.msra.mxu0 0
    %280 = vmatpush.bf16.msra.mxu0 %v153
    %281 = vmatmul.bf16.gmra.mxu0 %v180
    %v282 = vpop.f32.mrf.mxu0
    %v283 = vadd.f32 %v73, %v282
    %v284 = vpop.f32.mrf.mxu0
    %285 = vdwg.mxu0
    %286 = vmatpush.bf16.msra.mxu0 0
    %287 = vmatpush.bf16.msra.mxu0 0
    %288 = vmatpush.bf16.msra.mxu0 0
    %289 = vmatpush.bf16.msra.mxu0 0
    %290 = vmatpush.bf16.msra.mxu0 0
    %291 = vmatpush.bf16.msra.mxu0 0
    %292 = vmatpush.bf16.msra.mxu0 0
    %293 = vmatpush.bf16.msra.mxu0 %v154
    %294 = vmatmul.bf16.gmra.mxu0 %v180
    %v295 = vpop.f32.mrf.mxu0
    %v296 = vadd.f32 %v74, %v295
    %v297 = vpop.f32.mrf.mxu0
    %298 = vdwg.mxu0
    %299 = vmatpush.bf16.msra.mxu0 0
    %300 = vmatpush.bf16.msra.mxu0 0
    %301 = vmatpush.bf16.msra.mxu0 0
    %302 = vmatpush.bf16.msra.mxu0 0
    %303 = vmatpush.bf16.msra.mxu0 0
    %304 = vmatpush.bf16.msra.mxu0 0
    %305 = vmatpush.bf16.msra.mxu0 0
    %306 = vmatpush.bf16.msra.mxu0 %v155
    %307 = vmatmul.bf16.gmra.mxu0 %v180
    %v308 = vpop.f32.mrf.mxu0
    %v309 = vadd.f32 %v75, %v308
    %v310 = vpop.f32.mrf.mxu0
    %311 = vdwg.mxu0
    %312 = vmatpush.bf16.msra.mxu0 0
    %313 = vmatpush.bf16.msra.mxu0 0
    %314 = vmatpush.bf16.msra.mxu0 0
    %315 = vmatpush.bf16.msra.mxu0 0
    %316 = vmatpush.bf16.msra.mxu0 0
    %317 = vmatpush.bf16.msra.mxu0 0
    %318 = vmatpush.bf16.msra.mxu0 0
    %319 = vmatpush.bf16.msra.mxu0 %v156
    %320 = vmatmul.bf16.gmra.mxu0 %v180
    %v321 = vpop.f32.mrf.mxu0
    %v322 = vadd.f32 %v76, %v321
    %v323 = vpop.f32.mrf.mxu0
    %324 = vdwg.mxu0
    %325 = vmatpush.bf16.msra.mxu0 0
    %326 = vmatpush.bf16.msra.mxu0 0
    %327 = vmatpush.bf16.msra.mxu0 0
    %328 = vmatpush.bf16.msra.mxu0 0
    %329 = vmatpush.bf16.msra.mxu0 0
    %330 = vmatpush.bf16.msra.mxu0 0
    %331 = vmatpush.bf16.msra.mxu0 0
    %332 = vmatpush.bf16.msra.mxu0 %v157
    %333 = vmatmul.bf16.gmra.mxu0 %v180
    %v334 = vpop.f32.mrf.mxu0
    %v335 = vadd.f32 %v77, %v334
    %v336 = vpop.f32.mrf.mxu0
    %337 = vdwg.mxu0
    %338 = vmatpush.bf16.msra.mxu0 0
    %339 = vmatpush.bf16.msra.mxu0 0
    %340 = vmatpush.bf16.msra.mxu0 0
    %341 = vmatpush.bf16.msra.mxu0 0
    %342 = vmatpush.bf16.msra.mxu0 0
    %343 = vmatpush.bf16.msra.mxu0 0
    %344 = vmatpush.bf16.msra.mxu0 0
    %345 = vmatpush.bf16.msra.mxu0 %v158
    %346 = vmatmul.bf16.gmra.mxu0 %v180
    %v347 = vpop.f32.mrf.mxu0
    %v348 = vadd.f32 %v78, %v347
    %v349 = vpop.f32.mrf.mxu0
    %350 = vdwg.mxu0
    %351 = vmatpush.bf16.msra.mxu0 0
    %352 = vmatpush.bf16.msra.mxu0 0
    %353 = vmatpush.bf16.msra.mxu0 0
    %354 = vmatpush.bf16.msra.mxu0 0
    %355 = vmatpush.bf16.msra.mxu0 0
    %356 = vmatpush.bf16.msra.mxu0 0
    %357 = vmatpush.bf16.msra.mxu0 0
    %358 = vmatpush.bf16.msra.mxu0 %v159
    %359 = vmatmul.bf16.gmra.mxu0 %v180
    %v360 = vpop.f32.mrf.mxu0
    %v361 = vadd.f32 %v79, %v360
    %v362 = vpop.f32.mrf.mxu0
    %363 = vdwg.mxu0
    %364 = vmatpush.bf16.msra.mxu0 0
    %365 = vmatpush.bf16.msra.mxu0 0
    %366 = vmatpush.bf16.msra.mxu0 0
    %367 = vmatpush.bf16.msra.mxu0 0
    %368 = vmatpush.bf16.msra.mxu0 0
    %369 = vmatpush.bf16.msra.mxu0 0
    %370 = vmatpush.bf16.msra.mxu0 0
    %371 = vmatpush.bf16.msra.mxu0 %v160
    %372 = vmatmul.bf16.gmra.mxu0 %v180
    %v373 = vpop.f32.mrf.mxu0
    %v374 = vadd.f32 %v80, %v373
    %v375 = vpop.f32.mrf.mxu0
    %376 = vdwg.mxu0
    %377 = vmatpush.bf16.msra.mxu0 0
    %378 = vmatpush.bf16.msra.mxu0 0
    %379 = vmatpush.bf16.msra.mxu0 0
    %380 = vmatpush.bf16.msra.mxu0 0
    %381 = vmatpush.bf16.msra.mxu0 0
    %382 = vmatpush.bf16.msra.mxu0 0
    %383 = vmatpush.bf16.msra.mxu0 0
    %384 = vmatpush.bf16.msra.mxu0 %v161
    %385 = vmatmul.bf16.gmra.mxu0 %v180
    %v386 = vpop.f32.mrf.mxu0
    %v387 = vadd.f32 %v81, %v386
    %v388 = vpop.f32.mrf.mxu0
    %389 = vdwg.mxu0
    %v390 = vmax.f32 %v192, 0.0
    %v391 = vmax.f32 %v205, 0.0
    %v392 = vmax.f32 %v218, 0.0
    %v393 = vmax.f32 %v231, 0.0
    %v394 = vmax.f32 %v244, 0.0
    %v395 = vmax.f32 %v257, 0.0
    %v396 = vmax.f32 %v270, 0.0
    %v397 = vmax.f32 %v283, 0.0
    %v398 = vmax.f32 %v296, 0.0
    %v399 = vmax.f32 %v309, 0.0
    %v400 = vmax.f32 %v322, 0.0
    %v401 = vmax.f32 %v335, 0.0
    %v402 = vmax.f32 %v348, 0.0
    %v403 = vmax.f32 %v361, 0.0
    %v404 = vmax.f32 %v374, 0.0
    %v405 = vmax.f32 %v387, 0.0
    %v406 = vpack.c.bf16 %v391, %v390
    %v407 = vpack.c.bf16 %v393, %v392
    %v408 = vpack.c.bf16 %v395, %v394
    %v409 = vpack.c.bf16 %v397, %v396
    %v410 = vpack.c.bf16 %v399, %v398
    %v411 = vpack.c.bf16 %v401, %v400
    %v412 = vpack.c.bf16 %v403, %v402
    %v413 = vpack.c.bf16 %v405, %v404
    %v422 = vrot.slane %v406, 3
    %v423 = vrot.slane %v407, 6
    %v424 = vrot.slane %v407, 1
    %v425 = vrot.slane %v408, 4
    %v426 = vrot.slane %v408, 7
    %v427 = vrot.slane %v409, 2
    %v428 = vrot.slane %v409, 5
    %v429 = vrot.slane %v410, 3
    %v430 = vrot.slane %v411, 6
    %v431 = vrot.slane %v411, 1
    %v432 = vrot.slane %v412, 4
    %v433 = vrot.slane %v412, 7
    %v434 = vrot.slane %v413, 2
    %v435 = vrot.slane %v413, 5
    %vm436 = vcmask 1040384
    %v439 = vsel %vm436, %v406, %v422
    %vm440 = vcmask 1042434
    %v443 = vsel %vm440, %v423, %v424
    %vm444 = vcmask 1041408
    %v445 = vsel %vm444, %v439, %v443
    %vm446 = vcmask 1044484
    %v449 = vsel %vm446, %v425, %v426
    %vm450 = vcmask 1046534
    %v453 = vsel %vm450, %v427, %v428
    %vm454 = vcmask 1045508
    %v455 = vsel %vm454, %v449, %v453
    %vm456 = vcmask 1043456
    %v457 = vsel %vm456, %v445, %v455
    %v460 = vsel %vm436, %v410, %v429
    %v463 = vsel %vm440, %v430, %v431
    %v464 = vsel %vm444, %v460, %v463
    %v467 = vsel %vm446, %v432, %v433
    %v470 = vsel %vm450, %v434, %v435
    %v471 = vsel %vm454, %v467, %v470
    %v472 = vsel %vm456, %v464, %v471
    %475 = vst [vmem:[%s3] sm:$0xff] %v457
    %476 = vst [vmem:[%s3 + $0x8] sm:$0xff] %v472
    // Predicated region
    $region22: #{cifar_decoder_forward.4} parent=1 // pred_check
      _
    $region23: #{cifar_decoder_forward.4} parent=1 // pred_check_branch
      %478 = sbr.rel (0) target = $region25
    $region24: #{cifar_decoder_forward.4} parent=1 // pred_region
      _
    $region25: #{cifar_decoder_forward.4} parent=1 // pred_fallthru
      _
    // Predicated region
    $region26: #{cifar_decoder_forward.4} parent=1 // pred_check
      _
    $region27: #{cifar_decoder_forward.4} parent=1 // pred_check_branch
      %480 = sbr.rel (0) target = $region29
    $region28: #{cifar_decoder_forward.4} parent=1 // pred_region
      _
    $region29: #{cifar_decoder_forward.4} parent=1 // pred_fallthru
      _
    %481 = vsyncpa [#allocation3], 1
    %482 = vsyncpa [#allocation5], 1

// kernel: cifar_decoder_forward.5
$region0: #{cifar_decoder_forward.5}
  #allocation0 [shape = 'u32[]', space=smem, size = 0x4, offset = 0x4, fixed_abs, tag = 'smem constant byte address 0x4 - core index']
  #allocation1 [shape = 'u32[72,128]{1,0:T(1,128)}', space=vmem, size = 0x9000, scoped, tag = 'internal scratch']
  %s0 = inlined_call_operand.vmem [shape: bf16[32,1152], index: 0, kind: input, shape index: {}]
  %s1 = inlined_call_operand.hbm [shape: bf16[1152,256], index: 1, kind: input, shape index: {}]
  %s2 = inlined_call_operand.hbm [shape: f32[1,256], index: 2, kind: input, shape index: {}]
  %s3 = inlined_call_operand.vmem [shape: bf16[32,256], index: 3, kind: output, shape index: {}]
  %s4 = sld [smem:[#allocation0]]
  $region30: #{cifar_decoder_forward.5} parent=0
    _
  %s6 = ssub.s32 1, %s4
  %s7 = scalar_select 0, %s6, %s4
  $region1: #{cifar_decoder_forward.5} parent=0
    #allocation2 [shape = 'u8[589824]{0}', space=vmem, size = 0x90000, scoped, tag = 'input window, operand 1, single buffered']
    #allocation3 [shape = 's32[1]{0}', space=sflag, size = 0x4, scoped, tag = 'scoped memory for cifar_decoder_forward.5']
    #allocation4 [shape = 'u8[1024]{0}', space=vmem, size = 0x400, scoped, tag = 'input window, operand 2, single buffered']
    #allocation5 [shape = 's32[1]{0}', space=sflag, size = 0x4, scoped, tag = 'scoped memory for cifar_decoder_forward.5']
    %8 = vsyncpa [#allocation3], 0
    %9 = vsyncpa [#allocation5], 0
    // Predicated region
    $region2: #{cifar_decoder_forward.5} parent=1 // pred_check
      _
    $region3: #{cifar_decoder_forward.5} parent=1 // pred_check_branch
      %11 = sbr.rel (0) target = $region5
    $region4: #{cifar_decoder_forward.5} parent=1 // pred_region
      _
    $region5: #{cifar_decoder_forward.5} parent=1 // pred_fallthru
      _
    // Predicated region
    $region6: #{cifar_decoder_forward.5} parent=1 // pred_check
      _
    $region7: #{cifar_decoder_forward.5} parent=1 // pred_check_branch
      %13 = sbr.rel (0) target = $region9
    $region8: #{cifar_decoder_forward.5} parent=1 // pred_region
      %15 = vsyncadd [#allocation3], 0
      %s16 = sshll.u32 %s1, 4
      %s17 = int_to_ptr.hbm [resolvable:$true] %s16
      %s18 = sshll.u32 [#allocation2], 4
      %s19 = int_to_ptr.vmem [resolvable:$true] %s18
      %24 = dma.hbm_to_vmem [thread:$0]  %s17, 18432, %s19, [#allocation3], 128, 128, 8
    $region9: #{cifar_decoder_forward.5} parent=1 // pred_fallthru
      _
    // Predicated region
    $region10: #{cifar_decoder_forward.5} parent=1 // pred_check
      _
    $region11: #{cifar_decoder_forward.5} parent=1 // pred_check_branch
      %26 = sbr.rel (0) target = $region13
    $region12: #{cifar_decoder_forward.5} parent=1 // pred_region
      %28 = vsyncadd [#allocation5], 0
      %s30 = sshll.u32 %s2, 4
      %s31 = int_to_ptr.hbm [resolvable:$true] %s30
      %s32 = sshll.u32 [#allocation4], 4
      %s33 = int_to_ptr.vmem [resolvable:$true] %s32
      %35 = dma.hbm_to_vmem [thread:$0]  %s31, 32, %s33, [#allocation5]
    $region13: #{cifar_decoder_forward.5} parent=1 // pred_fallthru
      _
    // Predicated region
    $region14: #{cifar_decoder_forward.5} parent=1 // pred_check
      _
    $region15: #{cifar_decoder_forward.5} parent=1 // pred_check_branch
      %37 = sbr.rel (0) target = $region17
    $region16: #{cifar_decoder_forward.5} parent=1 // pred_region
      %39 = dma.done [#allocation3], 18432
    $region17: #{cifar_decoder_forward.5} parent=1 // pred_fallthru
      _
    // Predicated region
    $region18: #{cifar_decoder_forward.5} parent=1 // pred_check
      _
    $region19: #{cifar_decoder_forward.5} parent=1 // pred_check_branch
      %41 = sbr.rel (0) target = $region21
    $region20: #{cifar_decoder_forward.5} parent=1 // pred_region
      %43 = dma.done [#allocation5], 32
    $region21: #{cifar_decoder_forward.5} parent=1 // pred_fallthru
      _
    %v44 = vld [vmem:[%s0] sm:$0xff]
    %v45 = vld [vmem:[%s0 + $0x8] sm:$0xff]
    %v46 = vld [vmem:[%s0 + $0x10] sm:$0xff]
    %v47 = vld [vmem:[%s0 + $0x18] sm:$0xff]
    %v48 = vld [vmem:[%s0 + $0x20] sm:$0xf]
    %v49 = vld [vmem:[%s0 + $0x24] sm:$0xff]
    %v50 = vld [vmem:[%s0 + $0x2c] sm:$0xff]
    %v51 = vld [vmem:[%s0 + $0x34] sm:$0xff]
    %v52 = vld [vmem:[%s0 + $0x3c] sm:$0xff]
    %v53 = vld [vmem:[%s0 + $0x44] sm:$0xf]
    %v54 = vld [vmem:[%s0 + $0x48] sm:$0xff]
    %v55 = vld [vmem:[%s0 + $0x50] sm:$0xff]
    %v56 = vld [vmem:[%s0 + $0x58] sm:$0xff]
    %v57 = vld [vmem:[%s0 + $0x60] sm:$0xff]
    %v58 = vld [vmem:[%s0 + $0x68] sm:$0xf]
    %v59 = vld [vmem:[%s0 + $0x6c] sm:$0xff]
    %v60 = vld [vmem:[%s0 + $0x74] sm:$0xff]
    %v61 = vld [vmem:[%s0 + $0x7c] sm:$0xff]
    %v62 = vld [vmem:[%s0 + $0x84] sm:$0xff]
    %v63 = vld [vmem:[%s0 + $0x8c] sm:$0xf]
    %v64 = vld [vmem:[#allocation2] sm:$0xff]
    %v65 = vld [vmem:[#allocation2 + $0x8] sm:$0xff]
    %v66 = vld [vmem:[#allocation2 + $0x10] sm:$0xff]
    %v67 = vld [vmem:[#allocation2 + $0x18] sm:$0xff]
    %v68 = vld [vmem:[#allocation2 + $0x20] sm:$0xff]
    %v69 = vld [vmem:[#allocation2 + $0x28] sm:$0xff]
    %v70 = vld [vmem:[#allocation2 + $0x30] sm:$0xff]
    %v71 = vld [vmem:[#allocation2 + $0x38] sm:$0xff]
    %v72 = vld [vmem:[#allocation2 + $0x40] sm:$0xff]
    %v73 = vld [vmem:[#allocation2 + $0x48] sm:$0xff]
    %v74 = vld [vmem:[#allocation2 + $0x50] sm:$0xff]
    %v75 = vld [vmem:[#allocation2 + $0x58] sm:$0xff]
    %v76 = vld [vmem:[#allocation2 + $0x60] sm:$0xff]
    %v77 = vld [vmem:[#allocation2 + $0x68] sm:$0xff]
    %v78 = vld [vmem:[#allocation2 + $0x70] sm:$0xff]
    %v79 = vld [vmem:[#allocation2 + $0x78] sm:$0xff]
    %v80 = vld [vmem:[#allocation2 + $0x80] sm:$0xff]
    %v81 = vld [vmem:[#allocation2 + $0x88] sm:$0xff]
    %v82 = vld [vmem:[#allocation2 + $0x90] sm:$0xff]
    %v83 = vld [vmem:[#allocation2 + $0x98] sm:$0xff]
    %v84 = vld [vmem:[#allocation2 + $0xa0] sm:$0xff]
    %v85 = vld [vmem:[#allocation2 + $0xa8] sm:$0xff]
    %v86 = vld [vmem:[#allocation2 + $0xb0] sm:$0xff]
    %v87 = vld [vmem:[#allocation2 + $0xb8] sm:$0xff]
    %v88 = vld [vmem:[#allocation2 + $0xc0] sm:$0xff]
    %v89 = vld [vmem:[#allocation2 + $0xc8] sm:$0xff]
    %v90 = vld [vmem:[#allocation2 + $0xd0] sm:$0xff]
    %v91 = vld [vmem:[#allocation2 + $0xd8] sm:$0xff]
    %v92 = vld [vmem:[#allocation2 + $0xe0] sm:$0xff]
    %v93 = vld [vmem:[#allocation2 + $0xe8] sm:$0xff]
    %v94 = vld [vmem:[#allocation2 + $0xf0] sm:$0xff]
    %v95 = vld [vmem:[#allocation2 + $0xf8] sm:$0xff]
    %v96 = vld [vmem:[#allocation2 + $0x100] sm:$0xff]
    %v97 = vld [vmem:[#allocation2 + $0x108] sm:$0xff]
    %v98 = vld [vmem:[#allocation2 + $0x110] sm:$0xff]
    %v99 = vld [vmem:[#allocation2 + $0x118] sm:$0xff]
    %v100 = vld [vmem:[#allocation2 + $0x120] sm:$0xff]
    %v101 = vld [vmem:[#allocation2 + $0x128] sm:$0xff]
    %v102 = vld [vmem:[#allocation2 + $0x130] sm:$0xff]
    %v103 = vld [vmem:[#allocation2 + $0x138] sm:$0xff]
    %v104 = vld [vmem:[#allocation2 + $0x140] sm:$0xff]
    %v105 = vld [vmem:[#allocation2 + $0x148] sm:$0xff]
    %v106 = vld [vmem:[#allocation2 + $0x150] sm:$0xff]
    %v107 = vld [vmem:[#allocation2 + $0x158] sm:$0xff]
    %v108 = vld [vmem:[#allocation2 + $0x160] sm:$0xff]
    %v109 = vld [vmem:[#allocation2 + $0x168] sm:$0xff]
    %v110 = vld [vmem:[#allocation2 + $0x170] sm:$0xff]
    %v111 = vld [vmem:[#allocation2 + $0x178] sm:$0xff]
    %v112 = vld [vmem:[#allocation2 + $0x180] sm:$0xff]
    %v113 = vld [vmem:[#allocation2 + $0x188] sm:$0xff]
    %v114 = vld [vmem:[#allocation2 + $0x190] sm:$0xff]
    %v115 = vld [vmem:[#allocation2 + $0x198] sm:$0xff]
    %v116 = vld [vmem:[#allocation2 + $0x1a0] sm:$0xff]
    %v117 = vld [vmem:[#allocation2 + $0x1a8] sm:$0xff]
    %v118 = vld [vmem:[#allocation2 + $0x1b0] sm:$0xff]
    %v119 = vld [vmem:[#allocation2 + $0x1b8] sm:$0xff]
    %v120 = vld [vmem:[#allocation2 + $0x1c0] sm:$0xff]
    %v121 = vld [vmem:[#allocation2 + $0x1c8] sm:$0xff]
    %v122 = vld [vmem:[#allocation2 + $0x1d0] sm:$0xff]
    %v123 = vld [vmem:[#allocation2 + $0x1d8] sm:$0xff]
    %v124 = vld [vmem:[#allocation2 + $0x1e0] sm:$0xff]
    %v125 = vld [vmem:[#allocation2 + $0x1e8] sm:$0xff]
    %v126 = vld [vmem:[#allocation2 + $0x1f0] sm:$0xff]
    %v127 = vld [vmem:[#allocation2 + $0x1f8] sm:$0xff]
    %v128 = vld [vmem:[#allocation2 + $0x200] sm:$0xff]
    %v129 = vld [vmem:[#allocation2 + $0x208] sm:$0xff]
    %v130 = vld [vmem:[#allocation2 + $0x210] sm:$0xff]
    %v131 = vld [vmem:[#allocation2 + $0x218] sm:$0xff]
    %v132 = vld [vmem:[#allocation2 + $0x220] sm:$0xff]
    %v133 = vld [vmem:[#allocation2 + $0x228] sm:$0xff]
    %v134 = vld [vmem:[#allocation2 + $0x230] sm:$0xff]
    %v135 = vld [vmem:[#allocation2 + $0x238] sm:$0xff]
    %v136 = vld [vmem:[#allocation2 + $0x240] sm:$0xff]
    %v137 = vld [vmem:[#allocation2 + $0x248] sm:$0xff]
    %v138 = vld [vmem:[#allocation2 + $0x250] sm:$0xff]
    %v139 = vld [vmem:[#allocation2 + $0x258] sm:$0xff]
    %v140 = vld [vmem:[#allocation2 + $0x260] sm:$0xff]
    %v141 = vld [vmem:[#allocation2 + $0x268] sm:$0xff]
    %v142 = vld [vmem:[#allocation2 + $0x270] sm:$0xff]
    %v143 = vld [vmem:[#allocation2 + $0x278] sm:$0xff]
    %v144 = vld [vmem:[#allocation2 + $0x280] sm:$0xff]
    %v145 = vld [vmem:[#allocation2 + $0x288] sm:$0xff]
    %v146 = vld [vmem:[#allocation2 + $0x290] sm:$0xff]
    %v147 = vld [vmem:[#allocation2 + $0x298] sm:$0xff]
    %v148 = vld [vmem:[#allocation2 + $0x2a0] sm:$0xff]
    %v149 = vld [vmem:[#allocation2 + $0x2a8] sm:$0xff]
    %v150 = vld [vmem:[#allocation2 + $0x2b0] sm:$0xff]
    %v151 = vld [vmem:[#allocation2 + $0x2b8] sm:$0xff]
    %v152 = vld [vmem:[#allocation2 + $0x2c0] sm:$0xff]
    %v153 = vld [vmem:[#allocation2 + $0x2c8] sm:$0xff]
    %v154 = vld [vmem:[#allocation2 + $0x2d0] sm:$0xff]
    %v155 = vld [vmem:[#allocation2 + $0x2d8] sm:$0xff]
    %v156 = vld [vmem:[#allocation2 + $0x2e0] sm:$0xff]
    %v157 = vld [vmem:[#allocation2 + $0x2e8] sm:$0xff]
    %v158 = vld [vmem:[#allocation2 + $0x2f0] sm:$0xff]
    %v159 = vld [vmem:[#allocation2 + $0x2f8] sm:$0xff]
    %v160 = vld [vmem:[#allocation2 + $0x300] sm:$0xff]
    %v161 = vld [vmem:[#allocation2 + $0x308] sm:$0xff]
    %v162 = vld [vmem:[#allocation2 + $0x310] sm:$0xff]
    %v163 = vld [vmem:[#allocation2 + $0x318] sm:$0xff]
    %v164 = vld [vmem:[#allocation2 + $0x320] sm:$0xff]
    %v165 = vld [vmem:[#allocation2 + $0x328] sm:$0xff]
    %v166 = vld [vmem:[#allocation2 + $0x330] sm:$0xff]
    %v167 = vld [vmem:[#allocation2 + $0x338] sm:$0xff]
    %v168 = vld [vmem:[#allocation2 + $0x340] sm:$0xff]
    %v169 = vld [vmem:[#allocation2 + $0x348] sm:$0xff]
    %v170 = vld [vmem:[#allocation2 + $0x350] sm:$0xff]
    %v171 = vld [vmem:[#allocation2 + $0x358] sm:$0xff]
    %v172 = vld [vmem:[#allocation2 + $0x360] sm:$0xff]
    %v173 = vld [vmem:[#allocation2 + $0x368] sm:$0xff]
    %v174 = vld [vmem:[#allocation2 + $0x370] sm:$0xff]
    %v175 = vld [vmem:[#allocation2 + $0x378] sm:$0xff]
    %v176 = vld [vmem:[#allocation2 + $0x380] sm:$0xff]
    %v177 = vld [vmem:[#allocation2 + $0x388] sm:$0xff]
    %v178 = vld [vmem:[#allocation2 + $0x390] sm:$0xff]
    %v179 = vld [vmem:[#allocation2 + $0x398] sm:$0xff]
    %v180 = vld [vmem:[#allocation2 + $0x3a0] sm:$0xff]
    %v181 = vld [vmem:[#allocation2 + $0x3a8] sm:$0xff]
    %v182 = vld [vmem:[#allocation2 + $0x3b0] sm:$0xff]
    %v183 = vld [vmem:[#allocation2 + $0x3b8] sm:$0xff]
    %v184 = vld [vmem:[#allocation2 + $0x3c0] sm:$0xff]
    %v185 = vld [vmem:[#allocation2 + $0x3c8] sm:$0xff]
    %v186 = vld [vmem:[#allocation2 + $0x3d0] sm:$0xff]
    %v187 = vld [vmem:[#allocation2 + $0x3d8] sm:$0xff]
    %v188 = vld [vmem:[#allocation2 + $0x3e0] sm:$0xff]
    %v189 = vld [vmem:[#allocation2 + $0x3e8] sm:$0xff]
    %v190 = vld [vmem:[#allocation2 + $0x3f0] sm:$0xff]
    %v191 = vld [vmem:[#allocation2 + $0x3f8] sm:$0xff]
    %v192 = vld [vmem:[#allocation2 + $0x400] sm:$0xff]
    %v193 = vld [vmem:[#allocation2 + $0x408] sm:$0xff]
    %v194 = vld [vmem:[#allocation2 + $0x410] sm:$0xff]
    %v195 = vld [vmem:[#allocation2 + $0x418] sm:$0xff]
    %v196 = vld [vmem:[#allocation2 + $0x420] sm:$0xff]
    %v197 = vld [vmem:[#allocation2 + $0x428] sm:$0xff]
    %v198 = vld [vmem:[#allocation2 + $0x430] sm:$0xff]
    %v199 = vld [vmem:[#allocation2 + $0x438] sm:$0xff]
    %v200 = vld [vmem:[#allocation2 + $0x440] sm:$0xff]
    %v201 = vld [vmem:[#allocation2 + $0x448] sm:$0xff]
    %v202 = vld [vmem:[#allocation2 + $0x450] sm:$0xff]
    %v203 = vld [vmem:[#allocation2 + $0x458] sm:$0xff]
    %v204 = vld [vmem:[#allocation2 + $0x460] sm:$0xff]
    %v205 = vld [vmem:[#allocation2 + $0x468] sm:$0xff]
    %v206 = vld [vmem:[#allocation2 + $0x470] sm:$0xff]
    %v207 = vld [vmem:[#allocation2 + $0x478] sm:$0xff]
    %v208 = vld [vmem:[#allocation4] sm:$0x3]
    %v210 = vperm.slane %v208, 0
    %v211 = vperm.slane %v208, 1
    %v234 = vunpack.c.l.b16 %v44
    %v235 = vunpack.c.h.b16 %v44
    %v236 = vunpack.c.l.b16 %v45
    %v237 = vunpack.c.h.b16 %v45
    %v238 = vunpack.c.l.b16 %v46
    %v239 = vunpack.c.h.b16 %v46
    %v240 = vunpack.c.l.b16 %v47
    %v241 = vunpack.c.h.b16 %v47
    %v242 = vunpack.c.l.b16 %v48
    %v243 = vunpack.c.l.b16 %v49
    %v244 = vunpack.c.h.b16 %v49
    %v245 = vunpack.c.l.b16 %v50
    %v246 = vunpack.c.h.b16 %v50
    %v247 = vunpack.c.l.b16 %v51
    %v248 = vunpack.c.h.b16 %v51
    %v249 = vunpack.c.l.b16 %v52
    %v250 = vunpack.c.h.b16 %v52
    %v251 = vunpack.c.l.b16 %v53
    %v252 = vunpack.c.l.b16 %v54
    %v253 = vunpack.c.h.b16 %v54
    %v254 = vunpack.c.l.b16 %v55
    %v255 = vunpack.c.h.b16 %v55
    %v256 = vunpack.c.l.b16 %v56
    %v257 = vunpack.c.h.b16 %v56
    %v258 = vunpack.c.l.b16 %v57
    %v259 = vunpack.c.h.b16 %v57
    %v260 = vunpack.c.l.b16 %v58
    %v261 = vunpack.c.l.b16 %v59
    %v262 = vunpack.c.h.b16 %v59
    %v263 = vunpack.c.l.b16 %v60
    %v264 = vunpack.c.h.b16 %v60
    %v265 = vunpack.c.l.b16 %v61
    %v266 = vunpack.c.h.b16 %v61
    %v267 = vunpack.c.l.b16 %v62
    %v268 = vunpack.c.h.b16 %v62
    %v269 = vunpack.c.l.b16 %v63
    %v270 = vpack.c.b16 %v243, %v234
    %v271 = vpack.c.b16 %v244, %v235
    %v272 = vpack.c.b16 %v245, %v236
    %v273 = vpack.c.b16 %v246, %v237
    %v274 = vpack.c.b16 %v247, %v238
    %v275 = vpack.c.b16 %v248, %v239
    %v276 = vpack.c.b16 %v249, %v240
    %v277 = vpack.c.b16 %v250, %v241
    %v278 = vpack.c.b16 %v251, %v242
    %v279 = vpack.c.b16 %v261, %v252
    %v280 = vpack.c.b16 %v262, %v253
    %v281 = vpack.c.b16 %v263, %v254
    %v282 = vpack.c.b16 %v264, %v255
    %v283 = vpack.c.b16 %v265, %v256
    %v284 = vpack.c.b16 %v266, %v257
    %v285 = vpack.c.b16 %v267, %v258
    %v286 = vpack.c.b16 %v268, %v259
    %v287 = vpack.c.b16 %v269, %v260
    %v450 = vunpack.c.l.b16 %v64
    %v451 = vunpack.c.h.b16 %v64
    %v452 = vunpack.c.l.b16 %v65
    %v453 = vunpack.c.h.b16 %v65
    %v454 = vunpack.c.l.b16 %v66
    %v455 = vunpack.c.h.b16 %v66
    %v456 = vunpack.c.l.b16 %v67
    %v457 = vunpack.c.h.b16 %v67
    %v458 = vunpack.c.l.b16 %v68
    %v459 = vunpack.c.h.b16 %v68
    %v460 = vunpack.c.l.b16 %v69
    %v461 = vunpack.c.h.b16 %v69
    %v462 = vunpack.c.l.b16 %v70
    %v463 = vunpack.c.h.b16 %v70
    %v464 = vunpack.c.l.b16 %v71
    %v465 = vunpack.c.h.b16 %v71
    %v466 = vunpack.c.l.b16 %v72
    %v467 = vunpack.c.h.b16 %v72
    %v468 = vunpack.c.l.b16 %v73
    %v469 = vunpack.c.h.b16 %v73
    %v470 = vunpack.c.l.b16 %v74
    %v471 = vunpack.c.h.b16 %v74
    %v472 = vunpack.c.l.b16 %v75
    %v473 = vunpack.c.h.b16 %v75
    %v474 = vunpack.c.l.b16 %v76
    %v475 = vunpack.c.h.b16 %v76
    %v476 = vunpack.c.l.b16 %v77
    %v477 = vunpack.c.h.b16 %v77
    %v478 = vunpack.c.l.b16 %v78
    %v479 = vunpack.c.h.b16 %v78
    %v480 = vunpack.c.l.b16 %v79
    %v481 = vunpack.c.h.b16 %v79
    %v482 = vunpack.c.l.b16 %v80
    %v483 = vunpack.c.h.b16 %v80
    %v484 = vunpack.c.l.b16 %v81
    %v485 = vunpack.c.h.b16 %v81
    %v486 = vunpack.c.l.b16 %v82
    %v487 = vunpack.c.h.b16 %v82
    %v488 = vunpack.c.l.b16 %v83
    %v489 = vunpack.c.h.b16 %v83
    %v490 = vunpack.c.l.b16 %v84
    %v491 = vunpack.c.h.b16 %v84
    %v492 = vunpack.c.l.b16 %v85
    %v493 = vunpack.c.h.b16 %v85
    %v494 = vunpack.c.l.b16 %v86
    %v495 = vunpack.c.h.b16 %v86
    %v496 = vunpack.c.l.b16 %v87
    %v497 = vunpack.c.h.b16 %v87
    %v498 = vunpack.c.l.b16 %v88
    %v499 = vunpack.c.h.b16 %v88
    %v500 = vunpack.c.l.b16 %v89
    %v501 = vunpack.c.h.b16 %v89
    %v502 = vunpack.c.l.b16 %v90
    %v503 = vunpack.c.h.b16 %v90
    %v504 = vunpack.c.l.b16 %v91
    %v505 = vunpack.c.h.b16 %v91
    %v506 = vunpack.c.l.b16 %v92
    %v507 = vunpack.c.h.b16 %v92
    %v508 = vunpack.c.l.b16 %v93
    %v509 = vunpack.c.h.b16 %v93
    %v510 = vunpack.c.l.b16 %v94
    %v511 = vunpack.c.h.b16 %v94
    %v512 = vunpack.c.l.b16 %v95
    %v513 = vunpack.c.h.b16 %v95
    %v514 = vunpack.c.l.b16 %v96
    %v515 = vunpack.c.h.b16 %v96
    %v516 = vunpack.c.l.b16 %v97
    %v517 = vunpack.c.h.b16 %v97
    %v518 = vunpack.c.l.b16 %v98
    %v519 = vunpack.c.h.b16 %v98
    %v520 = vunpack.c.l.b16 %v99
    %v521 = vunpack.c.h.b16 %v99
    %v522 = vunpack.c.l.b16 %v100
    %v523 = vunpack.c.h.b16 %v100
    %v524 = vunpack.c.l.b16 %v101
    %v525 = vunpack.c.h.b16 %v101
    %v526 = vunpack.c.l.b16 %v102
    %v527 = vunpack.c.h.b16 %v102
    %v528 = vunpack.c.l.b16 %v103
    %v529 = vunpack.c.h.b16 %v103
    %v530 = vunpack.c.l.b16 %v104
    %v531 = vunpack.c.h.b16 %v104
    %v532 = vunpack.c.l.b16 %v105
    %v533 = vunpack.c.h.b16 %v105
    %v534 = vunpack.c.l.b16 %v106
    %v535 = vunpack.c.h.b16 %v106
    %v536 = vunpack.c.l.b16 %v107
    %v537 = vunpack.c.h.b16 %v107
    %v538 = vunpack.c.l.b16 %v108
    %v539 = vunpack.c.h.b16 %v108
    %v540 = vunpack.c.l.b16 %v109
    %v541 = vunpack.c.h.b16 %v109
    %v542 = vunpack.c.l.b16 %v110
    %v543 = vunpack.c.h.b16 %v110
    %v544 = vunpack.c.l.b16 %v111
    %v545 = vunpack.c.h.b16 %v111
    %v546 = vunpack.c.l.b16 %v112
    %v547 = vunpack.c.h.b16 %v112
    %v548 = vunpack.c.l.b16 %v113
    %v549 = vunpack.c.h.b16 %v113
    %v550 = vunpack.c.l.b16 %v114
    %v551 = vunpack.c.h.b16 %v114
    %v552 = vunpack.c.l.b16 %v115
    %v553 = vunpack.c.h.b16 %v115
    %v554 = vunpack.c.l.b16 %v116
    %v555 = vunpack.c.h.b16 %v116
    %v556 = vunpack.c.l.b16 %v117
    %v557 = vunpack.c.h.b16 %v117
    %v558 = vunpack.c.l.b16 %v118
    %v559 = vunpack.c.h.b16 %v118
    %v560 = vunpack.c.l.b16 %v119
    %v561 = vunpack.c.h.b16 %v119
    %v562 = vunpack.c.l.b16 %v120
    %v563 = vunpack.c.h.b16 %v120
    %v564 = vunpack.c.l.b16 %v121
    %v565 = vunpack.c.h.b16 %v121
    %v566 = vunpack.c.l.b16 %v122
    %v567 = vunpack.c.h.b16 %v122
    %v568 = vunpack.c.l.b16 %v123
    %v569 = vunpack.c.h.b16 %v123
    %v570 = vunpack.c.l.b16 %v124
    %v571 = vunpack.c.h.b16 %v124
    %v572 = vunpack.c.l.b16 %v125
    %v573 = vunpack.c.h.b16 %v125
    %v574 = vunpack.c.l.b16 %v126
    %v575 = vunpack.c.h.b16 %v126
    %v576 = vunpack.c.l.b16 %v127
    %v577 = vunpack.c.h.b16 %v127
    %v578 = vunpack.c.l.b16 %v128
    %v579 = vunpack.c.h.b16 %v128
    %v580 = vunpack.c.l.b16 %v129
    %v581 = vunpack.c.h.b16 %v129
    %v582 = vunpack.c.l.b16 %v130
    %v583 = vunpack.c.h.b16 %v130
    %v584 = vunpack.c.l.b16 %v131
    %v585 = vunpack.c.h.b16 %v131
    %v586 = vunpack.c.l.b16 %v132
    %v587 = vunpack.c.h.b16 %v132
    %v588 = vunpack.c.l.b16 %v133
    %v589 = vunpack.c.h.b16 %v133
    %v590 = vunpack.c.l.b16 %v134
    %v591 = vunpack.c.h.b16 %v134
    %v592 = vunpack.c.l.b16 %v135
    %v593 = vunpack.c.h.b16 %v135
    %v594 = vunpack.c.l.b16 %v136
    %v595 = vunpack.c.h.b16 %v136
    %v596 = vunpack.c.l.b16 %v137
    %v597 = vunpack.c.h.b16 %v137
    %v598 = vunpack.c.l.b16 %v138
    %v599 = vunpack.c.h.b16 %v138
    %v600 = vunpack.c.l.b16 %v139
    %v601 = vunpack.c.h.b16 %v139
    %v602 = vunpack.c.l.b16 %v140
    %v603 = vunpack.c.h.b16 %v140
    %v604 = vunpack.c.l.b16 %v141
    %v605 = vunpack.c.h.b16 %v141
    %v606 = vunpack.c.l.b16 %v142
    %v607 = vunpack.c.h.b16 %v142
    %v608 = vunpack.c.l.b16 %v143
    %v609 = vunpack.c.h.b16 %v143
    %v610 = vunpack.c.l.b16 %v144
    %v611 = vunpack.c.h.b16 %v144
    %v612 = vunpack.c.l.b16 %v145
    %v613 = vunpack.c.h.b16 %v145
    %v614 = vunpack.c.l.b16 %v146
    %v615 = vunpack.c.h.b16 %v146
    %v616 = vunpack.c.l.b16 %v147
    %v617 = vunpack.c.h.b16 %v147
    %v618 = vunpack.c.l.b16 %v148
    %v619 = vunpack.c.h.b16 %v148
    %v620 = vunpack.c.l.b16 %v149
    %v621 = vunpack.c.h.b16 %v149
    %v622 = vunpack.c.l.b16 %v150
    %v623 = vunpack.c.h.b16 %v150
    %v624 = vunpack.c.l.b16 %v151
    %v625 = vunpack.c.h.b16 %v151
    %v626 = vunpack.c.l.b16 %v152
    %v627 = vunpack.c.h.b16 %v152
    %v628 = vunpack.c.l.b16 %v153
    %v629 = vunpack.c.h.b16 %v153
    %v630 = vunpack.c.l.b16 %v154
    %v631 = vunpack.c.h.b16 %v154
    %v632 = vunpack.c.l.b16 %v155
    %v633 = vunpack.c.h.b16 %v155
    %v634 = vunpack.c.l.b16 %v156
    %v635 = vunpack.c.h.b16 %v156
    %v636 = vunpack.c.l.b16 %v157
    %v637 = vunpack.c.h.b16 %v157
    %v638 = vunpack.c.l.b16 %v158
    %v639 = vunpack.c.h.b16 %v158
    %v640 = vunpack.c.l.b16 %v159
    %v641 = vunpack.c.h.b16 %v159
    %v642 = vunpack.c.l.b16 %v160
    %v643 = vunpack.c.h.b16 %v160
    %v644 = vunpack.c.l.b16 %v161
    %v645 = vunpack.c.h.b16 %v161
    %v646 = vunpack.c.l.b16 %v162
    %v647 = vunpack.c.h.b16 %v162
    %v648 = vunpack.c.l.b16 %v163
    %v649 = vunpack.c.h.b16 %v163
    %v650 = vunpack.c.l.b16 %v164
    %v651 = vunpack.c.h.b16 %v164
    %v652 = vunpack.c.l.b16 %v165
    %v653 = vunpack.c.h.b16 %v165
    %v654 = vunpack.c.l.b16 %v166
    %v655 = vunpack.c.h.b16 %v166
    %v656 = vunpack.c.l.b16 %v167
    %v657 = vunpack.c.h.b16 %v167
    %v658 = vunpack.c.l.b16 %v168
    %v659 = vunpack.c.h.b16 %v168
    %v660 = vunpack.c.l.b16 %v169
    %v661 = vunpack.c.h.b16 %v169
    %v662 = vunpack.c.l.b16 %v170
    %v663 = vunpack.c.h.b16 %v170
    %v664 = vunpack.c.l.b16 %v171
    %v665 = vunpack.c.h.b16 %v171
    %v666 = vunpack.c.l.b16 %v172
    %v667 = vunpack.c.h.b16 %v172
    %v668 = vunpack.c.l.b16 %v173
    %v669 = vunpack.c.h.b16 %v173
    %v670 = vunpack.c.l.b16 %v174
    %v671 = vunpack.c.h.b16 %v174
    %v672 = vunpack.c.l.b16 %v175
    %v673 = vunpack.c.h.b16 %v175
    %v674 = vunpack.c.l.b16 %v176
    %v675 = vunpack.c.h.b16 %v176
    %v676 = vunpack.c.l.b16 %v177
    %v677 = vunpack.c.h.b16 %v177
    %v678 = vunpack.c.l.b16 %v178
    %v679 = vunpack.c.h.b16 %v178
    %v680 = vunpack.c.l.b16 %v179
    %v681 = vunpack.c.h.b16 %v179
    %v682 = vunpack.c.l.b16 %v180
    %v683 = vunpack.c.h.b16 %v180
    %v684 = vunpack.c.l.b16 %v181
    %v685 = vunpack.c.h.b16 %v181
    %v686 = vunpack.c.l.b16 %v182
    %v687 = vunpack.c.h.b16 %v182
    %v688 = vunpack.c.l.b16 %v183
    %v689 = vunpack.c.h.b16 %v183
    %v690 = vunpack.c.l.b16 %v184
    %v691 = vunpack.c.h.b16 %v184
    %v692 = vunpack.c.l.b16 %v185
    %v693 = vunpack.c.h.b16 %v185
    %v694 = vunpack.c.l.b16 %v186
    %v695 = vunpack.c.h.b16 %v186
    %v696 = vunpack.c.l.b16 %v187
    %v697 = vunpack.c.h.b16 %v187
    %v698 = vunpack.c.l.b16 %v188
    %v699 = vunpack.c.h.b16 %v188
    %v700 = vunpack.c.l.b16 %v189
    %v701 = vunpack.c.h.b16 %v189
    %v702 = vunpack.c.l.b16 %v190
    %v703 = vunpack.c.h.b16 %v190
    %v704 = vunpack.c.l.b16 %v191
    %v705 = vunpack.c.h.b16 %v191
    %v706 = vunpack.c.l.b16 %v192
    %v707 = vunpack.c.h.b16 %v192
    %v708 = vunpack.c.l.b16 %v193
    %v709 = vunpack.c.h.b16 %v193
    %v710 = vunpack.c.l.b16 %v194
    %v711 = vunpack.c.h.b16 %v194
    %v712 = vunpack.c.l.b16 %v195
    %v713 = vunpack.c.h.b16 %v195
    %v714 = vunpack.c.l.b16 %v196
    %v715 = vunpack.c.h.b16 %v196
    %v716 = vunpack.c.l.b16 %v197
    %v717 = vunpack.c.h.b16 %v197
    %v718 = vunpack.c.l.b16 %v198
    %v719 = vunpack.c.h.b16 %v198
    %v720 = vunpack.c.l.b16 %v199
    %v721 = vunpack.c.h.b16 %v199
    %v722 = vunpack.c.l.b16 %v200
    %v723 = vunpack.c.h.b16 %v200
    %v724 = vunpack.c.l.b16 %v201
    %v725 = vunpack.c.h.b16 %v201
    %v726 = vunpack.c.l.b16 %v202
    %v727 = vunpack.c.h.b16 %v202
    %v728 = vunpack.c.l.b16 %v203
    %v729 = vunpack.c.h.b16 %v203
    %v730 = vunpack.c.l.b16 %v204
    %v731 = vunpack.c.h.b16 %v204
    %v732 = vunpack.c.l.b16 %v205
    %v733 = vunpack.c.h.b16 %v205
    %v734 = vunpack.c.l.b16 %v206
    %v735 = vunpack.c.h.b16 %v206
    %v736 = vunpack.c.l.b16 %v207
    %v737 = vunpack.c.h.b16 %v207
    %v738 = vpack.c.b16 %v452, %v450
    %v739 = vpack.c.b16 %v453, %v451
    %v740 = vpack.c.b16 %v456, %v454
    %v741 = vpack.c.b16 %v457, %v455
    %v742 = vpack.c.b16 %v460, %v458
    %v743 = vpack.c.b16 %v461, %v459
    %v744 = vpack.c.b16 %v464, %v462
    %v745 = vpack.c.b16 %v465, %v463
    %v746 = vpack.c.b16 %v468, %v466
    %v747 = vpack.c.b16 %v469, %v467
    %v748 = vpack.c.b16 %v472, %v470
    %v749 = vpack.c.b16 %v473, %v471
    %v750 = vpack.c.b16 %v476, %v474
    %v751 = vpack.c.b16 %v477, %v475
    %v752 = vpack.c.b16 %v480, %v478
    %v753 = vpack.c.b16 %v481, %v479
    %v754 = vpack.c.b16 %v484, %v482
    %v755 = vpack.c.b16 %v485, %v483
    %v756 = vpack.c.b16 %v488, %v486
    %v757 = vpack.c.b16 %v489, %v487
    %v758 = vpack.c.b16 %v492, %v490
    %v759 = vpack.c.b16 %v493, %v491
    %v760 = vpack.c.b16 %v496, %v494
    %v761 = vpack.c.b16 %v497, %v495
    %v762 = vpack.c.b16 %v500, %v498
    %v763 = vpack.c.b16 %v501, %v499
    %v764 = vpack.c.b16 %v504, %v502
    %v765 = vpack.c.b16 %v505, %v503
    %v766 = vpack.c.b16 %v508, %v506
    %v767 = vpack.c.b16 %v509, %v507
    %v768 = vpack.c.b16 %v512, %v510
    %v769 = vpack.c.b16 %v513, %v511
    %v770 = vpack.c.b16 %v516, %v514
    %v771 = vpack.c.b16 %v517, %v515
    %v772 = vpack.c.b16 %v520, %v518
    %v773 = vpack.c.b16 %v521, %v519
    %v774 = vpack.c.b16 %v524, %v522
    %v775 = vpack.c.b16 %v525, %v523
    %v776 = vpack.c.b16 %v528, %v526
    %v777 = vpack.c.b16 %v529, %v527
    %v778 = vpack.c.b16 %v532, %v530
    %v779 = vpack.c.b16 %v533, %v531
    %v780 = vpack.c.b16 %v536, %v534
    %v781 = vpack.c.b16 %v537, %v535
    %v782 = vpack.c.b16 %v540, %v538
    %v783 = vpack.c.b16 %v541, %v539
    %v784 = vpack.c.b16 %v544, %v542
    %v785 = vpack.c.b16 %v545, %v543
    %v786 = vpack.c.b16 %v548, %v546
    %v787 = vpack.c.b16 %v549, %v547
    %v788 = vpack.c.b16 %v552, %v550
    %v789 = vpack.c.b16 %v553, %v551
    %v790 = vpack.c.b16 %v556, %v554
    %v791 = vpack.c.b16 %v557, %v555
    %v792 = vpack.c.b16 %v560, %v558
    %v793 = vpack.c.b16 %v561, %v559
    %v794 = vpack.c.b16 %v564, %v562
    %v795 = vpack.c.b16 %v565, %v563
    %v796 = vpack.c.b16 %v568, %v566
    %v797 = vpack.c.b16 %v569, %v567
    %v798 = vpack.c.b16 %v572, %v570
    %v799 = vpack.c.b16 %v573, %v571
    %v800 = vpack.c.b16 %v576, %v574
    %v801 = vpack.c.b16 %v577, %v575
    %v802 = vpack.c.b16 %v580, %v578
    %v803 = vpack.c.b16 %v581, %v579
    %v804 = vpack.c.b16 %v584, %v582
    %v805 = vpack.c.b16 %v585, %v583
    %v806 = vpack.c.b16 %v588, %v586
    %v807 = vpack.c.b16 %v589, %v587
    %v808 = vpack.c.b16 %v592, %v590
    %v809 = vpack.c.b16 %v593, %v591
    %v810 = vpack.c.b16 %v596, %v594
    %v811 = vpack.c.b16 %v597, %v595
    %v812 = vpack.c.b16 %v600, %v598
    %v813 = vpack.c.b16 %v601, %v599
    %v814 = vpack.c.b16 %v604, %v602
    %v815 = vpack.c.b16 %v605, %v603
    %v816 = vpack.c.b16 %v608, %v606
    %v817 = vpack.c.b16 %v609, %v607
    %v818 = vpack.c.b16 %v612, %v610
    %v819 = vpack.c.b16 %v613, %v611
    %v820 = vpack.c.b16 %v616, %v614
    %v821 = vpack.c.b16 %v617, %v615
    %v822 = vpack.c.b16 %v620, %v618
    %v823 = vpack.c.b16 %v621, %v619
    %v824 = vpack.c.b16 %v624, %v622
    %v825 = vpack.c.b16 %v625, %v623
    %v826 = vpack.c.b16 %v628, %v626
    %v827 = vpack.c.b16 %v629, %v627
    %v828 = vpack.c.b16 %v632, %v630
    %v829 = vpack.c.b16 %v633, %v631
    %v830 = vpack.c.b16 %v636, %v634
    %v831 = vpack.c.b16 %v637, %v635
    %v832 = vpack.c.b16 %v640, %v638
    %v833 = vpack.c.b16 %v641, %v639
    %v834 = vpack.c.b16 %v644, %v642
    %v835 = vpack.c.b16 %v645, %v643
    %v836 = vpack.c.b16 %v648, %v646
    %v837 = vpack.c.b16 %v649, %v647
    %v838 = vpack.c.b16 %v652, %v650
    %v839 = vpack.c.b16 %v653, %v651
    %v840 = vpack.c.b16 %v656, %v654
    %v841 = vpack.c.b16 %v657, %v655
    %v842 = vpack.c.b16 %v660, %v658
    %v843 = vpack.c.b16 %v661, %v659
    %v844 = vpack.c.b16 %v664, %v662
    %v845 = vpack.c.b16 %v665, %v663
    %v846 = vpack.c.b16 %v668, %v666
    %v847 = vpack.c.b16 %v669, %v667
    %v848 = vpack.c.b16 %v672, %v670
    %v849 = vpack.c.b16 %v673, %v671
    %v850 = vpack.c.b16 %v676, %v674
    %v851 = vpack.c.b16 %v677, %v675
    %v852 = vpack.c.b16 %v680, %v678
    %v853 = vpack.c.b16 %v681, %v679
    %v854 = vpack.c.b16 %v684, %v682
    %v855 = vpack.c.b16 %v685, %v683
    %v856 = vpack.c.b16 %v688, %v686
    %v857 = vpack.c.b16 %v689, %v687
    %v858 = vpack.c.b16 %v692, %v690
    %v859 = vpack.c.b16 %v693, %v691
    %v860 = vpack.c.b16 %v696, %v694
    %v861 = vpack.c.b16 %v697, %v695
    %v862 = vpack.c.b16 %v700, %v698
    %v863 = vpack.c.b16 %v701, %v699
    %v864 = vpack.c.b16 %v704, %v702
    %v865 = vpack.c.b16 %v705, %v703
    %v866 = vpack.c.b16 %v708, %v706
    %v867 = vpack.c.b16 %v709, %v707
    %v868 = vpack.c.b16 %v712, %v710
    %v869 = vpack.c.b16 %v713, %v711
    %v870 = vpack.c.b16 %v716, %v714
    %v871 = vpack.c.b16 %v717, %v715
    %v872 = vpack.c.b16 %v720, %v718
    %v873 = vpack.c.b16 %v721, %v719
    %v874 = vpack.c.b16 %v724, %v722
    %v875 = vpack.c.b16 %v725, %v723
    %v876 = vpack.c.b16 %v728, %v726
    %v877 = vpack.c.b16 %v729, %v727
    %v878 = vpack.c.b16 %v732, %v730
    %v879 = vpack.c.b16 %v733, %v731
    %v880 = vpack.c.b16 %v736, %v734
    %v881 = vpack.c.b16 %v737, %v735
    %1026 = vmatpush.bf16.msra.mxu0 %v752
    %1027 = vmatpush.bf16.msra.mxu0 %v750
    %1028 = vmatpush.bf16.msra.mxu0 %v748
    %1029 = vmatpush.bf16.msra.mxu0 %v746
    %1030 = vmatpush.bf16.msra.mxu0 %v744
    %1031 = vmatpush.bf16.msra.mxu0 %v742
    %1032 = vmatpush.bf16.msra.mxu0 %v740
    %1033 = vmatpush.bf16.msra.mxu0 %v738
    %1034 = vmatmul.bf16.gmra.mxu0 %v270
    %v1035 = vpop.f32.mrf.mxu0
    %v1036 = vadd.f32 %v210, %v1035
    %v1037 = vpop.f32.mrf.mxu0
    %v1038 = vadd.f32 %v210, %v1037
    %1039 = vmatmul.bf16.gmra.mxu0 %v279
    %v1040 = vpop.f32.mrf.mxu0
    %v1041 = vadd.f32 %v210, %v1040
    %v1042 = vpop.f32.mrf.mxu0
    %v1043 = vadd.f32 %v210, %v1042
    %1044 = vdwg.mxu0
    %1045 = vmatpush.bf16.msra.mxu0 %v768
    %1046 = vmatpush.bf16.msra.mxu0 %v766
    %1047 = vmatpush.bf16.msra.mxu0 %v764
    %1048 = vmatpush.bf16.msra.mxu0 %v762
    %1049 = vmatpush.bf16.msra.mxu0 %v760
    %1050 = vmatpush.bf16.msra.mxu0 %v758
    %1051 = vmatpush.bf16.msra.mxu0 %v756
    %1052 = vmatpush.bf16.msra.mxu0 %v754
    %1053 = vmatmul.bf16.gmra.mxu0 %v271
    %v1054 = vpop.f32.mrf.mxu0
    %v1055 = vadd.f32 %v1036, %v1054
    %v1056 = vpop.f32.mrf.mxu0
    %v1057 = vadd.f32 %v1038, %v1056
    %1058 = vmatmul.bf16.gmra.mxu0 %v280
    %v1059 = vpop.f32.mrf.mxu0
    %v1060 = vadd.f32 %v1041, %v1059
    %v1061 = vpop.f32.mrf.mxu0
    %v1062 = vadd.f32 %v1043, %v1061
    %1063 = vdwg.mxu0
    %1064 = vmatpush.bf16.msra.mxu0 %v784
    %1065 = vmatpush.bf16.msra.mxu0 %v782
    %1066 = vmatpush.bf16.msra.mxu0 %v780
    %1067 = vmatpush.bf16.msra.mxu0 %v778
    %1068 = vmatpush.bf16.msra.mxu0 %v776
    %1069 = vmatpush.bf16.msra.mxu0 %v774
    %1070 = vmatpush.bf16.msra.mxu0 %v772
    %1071 = vmatpush.bf16.msra.mxu0 %v770
    %1072 = vmatmul.bf16.gmra.mxu0 %v272
    %v1073 = vpop.f32.mrf.mxu0
    %v1074 = vadd.f32 %v1055, %v1073
    %v1075 = vpop.f32.mrf.mxu0
    %v1076 = vadd.f32 %v1057, %v1075
    %1077 = vmatmul.bf16.gmra.mxu0 %v281
    %v1078 = vpop.f32.mrf.mxu0
    %v1079 = vadd.f32 %v1060, %v1078
    %v1080 = vpop.f32.mrf.mxu0
    %v1081 = vadd.f32 %v1062, %v1080
    %1082 = vdwg.mxu0
    %1083 = vmatpush.bf16.msra.mxu0 %v800
    %1084 = vmatpush.bf16.msra.mxu0 %v798
    %1085 = vmatpush.bf16.msra.mxu0 %v796
    %1086 = vmatpush.bf16.msra.mxu0 %v794
    %1087 = vmatpush.bf16.msra.mxu0 %v792
    %1088 = vmatpush.bf16.msra.mxu0 %v790
    %1089 = vmatpush.bf16.msra.mxu0 %v788
    %1090 = vmatpush.bf16.msra.mxu0 %v786
    %1091 = vmatmul.bf16.gmra.mxu0 %v273
    %v1092 = vpop.f32.mrf.mxu0
    %v1093 = vadd.f32 %v1074, %v1092
    %v1094 = vpop.f32.mrf.mxu0
    %v1095 = vadd.f32 %v1076, %v1094
    %1096 = vmatmul.bf16.gmra.mxu0 %v282
    %v1097 = vpop.f32.mrf.mxu0
    %v1098 = vadd.f32 %v1079, %v1097
    %v1099 = vpop.f32.mrf.mxu0
    %v1100 = vadd.f32 %v1081, %v1099
    %1101 = vdwg.mxu0
    %1102 = vmatpush.bf16.msra.mxu0 %v816
    %1103 = vmatpush.bf16.msra.mxu0 %v814
    %1104 = vmatpush.bf16.msra.mxu0 %v812
    %1105 = vmatpush.bf16.msra.mxu0 %v810
    %1106 = vmatpush.bf16.msra.mxu0 %v808
    %1107 = vmatpush.bf16.msra.mxu0 %v806
    %1108 = vmatpush.bf16.msra.mxu0 %v804
    %1109 = vmatpush.bf16.msra.mxu0 %v802
    %1110 = vmatmul.bf16.gmra.mxu0 %v274
    %v1111 = vpop.f32.mrf.mxu0
    %v1112 = vadd.f32 %v1093, %v1111
    %v1113 = vpop.f32.mrf.mxu0
    %v1114 = vadd.f32 %v1095, %v1113
    %1115 = vmatmul.bf16.gmra.mxu0 %v283
    %v1116 = vpop.f32.mrf.mxu0
    %v1117 = vadd.f32 %v1098, %v1116
    %v1118 = vpop.f32.mrf.mxu0
    %v1119 = vadd.f32 %v1100, %v1118
    %1120 = vdwg.mxu0
    %1121 = vmatpush.bf16.msra.mxu0 %v832
    %1122 = vmatpush.bf16.msra.mxu0 %v830
    %1123 = vmatpush.bf16.msra.mxu0 %v828
    %1124 = vmatpush.bf16.msra.mxu0 %v826
    %1125 = vmatpush.bf16.msra.mxu0 %v824
    %1126 = vmatpush.bf16.msra.mxu0 %v822
    %1127 = vmatpush.bf16.msra.mxu0 %v820
    %1128 = vmatpush.bf16.msra.mxu0 %v818
    %1129 = vmatmul.bf16.gmra.mxu0 %v275
    %v1130 = vpop.f32.mrf.mxu0
    %v1131 = vadd.f32 %v1112, %v1130
    %v1132 = vpop.f32.mrf.mxu0
    %v1133 = vadd.f32 %v1114, %v1132
    %1134 = vmatmul.bf16.gmra.mxu0 %v284
    %v1135 = vpop.f32.mrf.mxu0
    %v1136 = vadd.f32 %v1117, %v1135
    %v1137 = vpop.f32.mrf.mxu0
    %v1138 = vadd.f32 %v1119, %v1137
    %1139 = vdwg.mxu0
    %1140 = vmatpush.bf16.msra.mxu0 %v848
    %1141 = vmatpush.bf16.msra.mxu0 %v846
    %1142 = vmatpush.bf16.msra.mxu0 %v844
    %1143 = vmatpush.bf16.msra.mxu0 %v842
    %1144 = vmatpush.bf16.msra.mxu0 %v840
    %1145 = vmatpush.bf16.msra.mxu0 %v838
    %1146 = vmatpush.bf16.msra.mxu0 %v836
    %1147 = vmatpush.bf16.msra.mxu0 %v834
    %1148 = vmatmul.bf16.gmra.mxu0 %v276
    %v1149 = vpop.f32.mrf.mxu0
    %v1150 = vadd.f32 %v1131, %v1149
    %v1151 = vpop.f32.mrf.mxu0
    %v1152 = vadd.f32 %v1133, %v1151
    %1153 = vmatmul.bf16.gmra.mxu0 %v285
    %v1154 = vpop.f32.mrf.mxu0
    %v1155 = vadd.f32 %v1136, %v1154
    %v1156 = vpop.f32.mrf.mxu0
    %v1157 = vadd.f32 %v1138, %v1156
    %1158 = vdwg.mxu0
    %1159 = vmatpush.bf16.msra.mxu0 %v864
    %1160 = vmatpush.bf16.msra.mxu0 %v862
    %1161 = vmatpush.bf16.msra.mxu0 %v860
    %1162 = vmatpush.bf16.msra.mxu0 %v858
    %1163 = vmatpush.bf16.msra.mxu0 %v856
    %1164 = vmatpush.bf16.msra.mxu0 %v854
    %1165 = vmatpush.bf16.msra.mxu0 %v852
    %1166 = vmatpush.bf16.msra.mxu0 %v850
    %1167 = vmatmul.bf16.gmra.mxu0 %v277
    %v1168 = vpop.f32.mrf.mxu0
    %v1169 = vadd.f32 %v1150, %v1168
    %v1170 = vpop.f32.mrf.mxu0
    %v1171 = vadd.f32 %v1152, %v1170
    %1172 = vmatmul.bf16.gmra.mxu0 %v286
    %v1173 = vpop.f32.mrf.mxu0
    %v1174 = vadd.f32 %v1155, %v1173
    %v1175 = vpop.f32.mrf.mxu0
    %v1176 = vadd.f32 %v1157, %v1175
    %1177 = vdwg.mxu0
    %1178 = vmatpush.bf16.msra.mxu0 %v880
    %1179 = vmatpush.bf16.msra.mxu0 %v878
    %1180 = vmatpush.bf16.msra.mxu0 %v876
    %1181 = vmatpush.bf16.msra.mxu0 %v874
    %1182 = vmatpush.bf16.msra.mxu0 %v872
    %1183 = vmatpush.bf16.msra.mxu0 %v870
    %1184 = vmatpush.bf16.msra.mxu0 %v868
    %1185 = vmatpush.bf16.msra.mxu0 %v866
    %1186 = vmatmul.bf16.gmra.mxu0 %v278
    %v1187 = vpop.f32.mrf.mxu0
    %v1188 = vadd.f32 %v1169, %v1187
    %v1189 = vpop.f32.mrf.mxu0
    %v1190 = vadd.f32 %v1171, %v1189
    %1191 = vmatmul.bf16.gmra.mxu0 %v287
    %v1192 = vpop.f32.mrf.mxu0
    %v1193 = vadd.f32 %v1174, %v1192
    %v1194 = vpop.f32.mrf.mxu0
    %v1195 = vadd.f32 %v1176, %v1194
    %1196 = vdwg.mxu0
    %1197 = vmatpush.bf16.msra.mxu0 %v753
    %1198 = vmatpush.bf16.msra.mxu0 %v751
    %1199 = vmatpush.bf16.msra.mxu0 %v749
    %1200 = vmatpush.bf16.msra.mxu0 %v747
    %1201 = vmatpush.bf16.msra.mxu0 %v745
    %1202 = vmatpush.bf16.msra.mxu0 %v743
    %1203 = vmatpush.bf16.msra.mxu0 %v741
    %1204 = vmatpush.bf16.msra.mxu0 %v739
    %1205 = vmatmul.bf16.gmra.mxu0 %v270
    %v1206 = vpop.f32.mrf.mxu0
    %v1207 = vadd.f32 %v211, %v1206
    %v1208 = vpop.f32.mrf.mxu0
    %v1209 = vadd.f32 %v211, %v1208
    %1210 = vmatmul.bf16.gmra.mxu0 %v279
    %v1211 = vpop.f32.mrf.mxu0
    %v1212 = vadd.f32 %v211, %v1211
    %v1213 = vpop.f32.mrf.mxu0
    %v1214 = vadd.f32 %v211, %v1213
    %1215 = vdwg.mxu0
    %1216 = vmatpush.bf16.msra.mxu0 %v769
    %1217 = vmatpush.bf16.msra.mxu0 %v767
    %1218 = vmatpush.bf16.msra.mxu0 %v765
    %1219 = vmatpush.bf16.msra.mxu0 %v763
    %1220 = vmatpush.bf16.msra.mxu0 %v761
    %1221 = vmatpush.bf16.msra.mxu0 %v759
    %1222 = vmatpush.bf16.msra.mxu0 %v757
    %1223 = vmatpush.bf16.msra.mxu0 %v755
    %1224 = vmatmul.bf16.gmra.mxu0 %v271
    %v1225 = vpop.f32.mrf.mxu0
    %v1226 = vadd.f32 %v1207, %v1225
    %v1227 = vpop.f32.mrf.mxu0
    %v1228 = vadd.f32 %v1209, %v1227
    %1229 = vmatmul.bf16.gmra.mxu0 %v280
    %v1230 = vpop.f32.mrf.mxu0
    %v1231 = vadd.f32 %v1212, %v1230
    %v1232 = vpop.f32.mrf.mxu0
    %v1233 = vadd.f32 %v1214, %v1232
    %1234 = vdwg.mxu0
    %1235 = vmatpush.bf16.msra.mxu0 %v785
    %1236 = vmatpush.bf16.msra.mxu0 %v783
    %1237 = vmatpush.bf16.msra.mxu0 %v781
    %1238 = vmatpush.bf16.msra.mxu0 %v779
    %1239 = vmatpush.bf16.msra.mxu0 %v777
    %1240 = vmatpush.bf16.msra.mxu0 %v775
    %1241 = vmatpush.bf16.msra.mxu0 %v773
    %1242 = vmatpush.bf16.msra.mxu0 %v771
    %1243 = vmatmul.bf16.gmra.mxu0 %v272
    %v1244 = vpop.f32.mrf.mxu0
    %v1245 = vadd.f32 %v1226, %v1244
    %v1246 = vpop.f32.mrf.mxu0
    %v1247 = vadd.f32 %v1228, %v1246
    %1248 = vmatmul.bf16.gmra.mxu0 %v281
    %v1249 = vpop.f32.mrf.mxu0
    %v1250 = vadd.f32 %v1231, %v1249
    %v1251 = vpop.f32.mrf.mxu0
    %v1252 = vadd.f32 %v1233, %v1251
    %1253 = vdwg.mxu0
    %1254 = vmatpush.bf16.msra.mxu0 %v801
    %1255 = vmatpush.bf16.msra.mxu0 %v799
    %1256 = vmatpush.bf16.msra.mxu0 %v797
    %1257 = vmatpush.bf16.msra.mxu0 %v795
    %1258 = vmatpush.bf16.msra.mxu0 %v793
    %1259 = vmatpush.bf16.msra.mxu0 %v791
    %1260 = vmatpush.bf16.msra.mxu0 %v789
    %1261 = vmatpush.bf16.msra.mxu0 %v787
    %1262 = vmatmul.bf16.gmra.mxu0 %v273
    %v1263 = vpop.f32.mrf.mxu0
    %v1264 = vadd.f32 %v1245, %v1263
    %v1265 = vpop.f32.mrf.mxu0
    %v1266 = vadd.f32 %v1247, %v1265
    %1267 = vmatmul.bf16.gmra.mxu0 %v282
    %v1268 = vpop.f32.mrf.mxu0
    %v1269 = vadd.f32 %v1250, %v1268
    %v1270 = vpop.f32.mrf.mxu0
    %v1271 = vadd.f32 %v1252, %v1270
    %1272 = vdwg.mxu0
    %1273 = vmatpush.bf16.msra.mxu0 %v817
    %1274 = vmatpush.bf16.msra.mxu0 %v815
    %1275 = vmatpush.bf16.msra.mxu0 %v813
    %1276 = vmatpush.bf16.msra.mxu0 %v811
    %1277 = vmatpush.bf16.msra.mxu0 %v809
    %1278 = vmatpush.bf16.msra.mxu0 %v807
    %1279 = vmatpush.bf16.msra.mxu0 %v805
    %1280 = vmatpush.bf16.msra.mxu0 %v803
    %1281 = vmatmul.bf16.gmra.mxu0 %v274
    %v1282 = vpop.f32.mrf.mxu0
    %v1283 = vadd.f32 %v1264, %v1282
    %v1284 = vpop.f32.mrf.mxu0
    %v1285 = vadd.f32 %v1266, %v1284
    %1286 = vmatmul.bf16.gmra.mxu0 %v283
    %v1287 = vpop.f32.mrf.mxu0
    %v1288 = vadd.f32 %v1269, %v1287
    %v1289 = vpop.f32.mrf.mxu0
    %v1290 = vadd.f32 %v1271, %v1289
    %1291 = vdwg.mxu0
    %1292 = vmatpush.bf16.msra.mxu0 %v833
    %1293 = vmatpush.bf16.msra.mxu0 %v831
    %1294 = vmatpush.bf16.msra.mxu0 %v829
    %1295 = vmatpush.bf16.msra.mxu0 %v827
    %1296 = vmatpush.bf16.msra.mxu0 %v825
    %1297 = vmatpush.bf16.msra.mxu0 %v823
    %1298 = vmatpush.bf16.msra.mxu0 %v821
    %1299 = vmatpush.bf16.msra.mxu0 %v819
    %1300 = vmatmul.bf16.gmra.mxu0 %v275
    %v1301 = vpop.f32.mrf.mxu0
    %v1302 = vadd.f32 %v1283, %v1301
    %v1303 = vpop.f32.mrf.mxu0
    %v1304 = vadd.f32 %v1285, %v1303
    %1305 = vmatmul.bf16.gmra.mxu0 %v284
    %v1306 = vpop.f32.mrf.mxu0
    %v1307 = vadd.f32 %v1288, %v1306
    %v1308 = vpop.f32.mrf.mxu0
    %v1309 = vadd.f32 %v1290, %v1308
    %1310 = vdwg.mxu0
    %1311 = vmatpush.bf16.msra.mxu0 %v849
    %1312 = vmatpush.bf16.msra.mxu0 %v847
    %1313 = vmatpush.bf16.msra.mxu0 %v845
    %1314 = vmatpush.bf16.msra.mxu0 %v843
    %1315 = vmatpush.bf16.msra.mxu0 %v841
    %1316 = vmatpush.bf16.msra.mxu0 %v839
    %1317 = vmatpush.bf16.msra.mxu0 %v837
    %1318 = vmatpush.bf16.msra.mxu0 %v835
    %1319 = vmatmul.bf16.gmra.mxu0 %v276
    %v1320 = vpop.f32.mrf.mxu0
    %v1321 = vadd.f32 %v1302, %v1320
    %v1322 = vpop.f32.mrf.mxu0
    %v1323 = vadd.f32 %v1304, %v1322
    %1324 = vmatmul.bf16.gmra.mxu0 %v285
    %v1325 = vpop.f32.mrf.mxu0
    %v1326 = vadd.f32 %v1307, %v1325
    %v1327 = vpop.f32.mrf.mxu0
    %v1328 = vadd.f32 %v1309, %v1327
    %1329 = vdwg.mxu0
    %1330 = vmatpush.bf16.msra.mxu0 %v865
    %1331 = vmatpush.bf16.msra.mxu0 %v863
    %1332 = vmatpush.bf16.msra.mxu0 %v861
    %1333 = vmatpush.bf16.msra.mxu0 %v859
    %1334 = vmatpush.bf16.msra.mxu0 %v857
    %1335 = vmatpush.bf16.msra.mxu0 %v855
    %1336 = vmatpush.bf16.msra.mxu0 %v853
    %1337 = vmatpush.bf16.msra.mxu0 %v851
    %1338 = vmatmul.bf16.gmra.mxu0 %v277
    %v1339 = vpop.f32.mrf.mxu0
    %v1340 = vadd.f32 %v1321, %v1339
    %v1341 = vpop.f32.mrf.mxu0
    %v1342 = vadd.f32 %v1323, %v1341
    %1343 = vmatmul.bf16.gmra.mxu0 %v286
    %v1344 = vpop.f32.mrf.mxu0
    %v1345 = vadd.f32 %v1326, %v1344
    %v1346 = vpop.f32.mrf.mxu0
    %v1347 = vadd.f32 %v1328, %v1346
    %1348 = vdwg.mxu0
    %1349 = vmatpush.bf16.msra.mxu0 %v881
    %1350 = vmatpush.bf16.msra.mxu0 %v879
    %1351 = vmatpush.bf16.msra.mxu0 %v877
    %1352 = vmatpush.bf16.msra.mxu0 %v875
    %1353 = vmatpush.bf16.msra.mxu0 %v873
    %1354 = vmatpush.bf16.msra.mxu0 %v871
    %1355 = vmatpush.bf16.msra.mxu0 %v869
    %1356 = vmatpush.bf16.msra.mxu0 %v867
    %1357 = vmatmul.bf16.gmra.mxu0 %v278
    %v1358 = vpop.f32.mrf.mxu0
    %v1359 = vadd.f32 %v1340, %v1358
    %v1360 = vpop.f32.mrf.mxu0
    %v1361 = vadd.f32 %v1342, %v1360
    %1362 = vmatmul.bf16.gmra.mxu0 %v287
    %v1363 = vpop.f32.mrf.mxu0
    %v1364 = vadd.f32 %v1345, %v1363
    %v1365 = vpop.f32.mrf.mxu0
    %v1366 = vadd.f32 %v1347, %v1365
    %1367 = vdwg.mxu0
    %v1368 = vmax.f32 %v1188, 0.0
    %v1369 = vmax.f32 %v1359, 0.0
    %v1370 = vmax.f32 %v1190, 0.0
    %v1371 = vmax.f32 %v1361, 0.0
    %v1372 = vmax.f32 %v1193, 0.0
    %v1373 = vmax.f32 %v1364, 0.0
    %v1374 = vmax.f32 %v1195, 0.0
    %v1375 = vmax.f32 %v1366, 0.0
    %v1376 = vpack.c.bf16 %v1369, %v1368
    %v1377 = vpack.c.bf16 %v1371, %v1370
    %v1378 = vpack.c.bf16 %v1373, %v1372
    %v1379 = vpack.c.bf16 %v1375, %v1374
    %1380 = vst [vmem:[%s3] sm:$0xff] %v1376
    %1381 = vst [vmem:[%s3 + $0x8] sm:$0xff] %v1377
    %1382 = vst [vmem:[%s3 + $0x10] sm:$0xff] %v1378
    %1383 = vst [vmem:[%s3 + $0x18] sm:$0xff] %v1379
    // Predicated region
    $region22: #{cifar_decoder_forward.5} parent=1 // pred_check
      _
    $region23: #{cifar_decoder_forward.5} parent=1 // pred_check_branch
      %1385 = sbr.rel (0) target = $region25
    $region24: #{cifar_decoder_forward.5} parent=1 // pred_region
      _
    $region25: #{cifar_decoder_forward.5} parent=1 // pred_fallthru
      _
    // Predicated region
    $region26: #{cifar_decoder_forward.5} parent=1 // pred_check
      _
    $region27: #{cifar_decoder_forward.5} parent=1 // pred_check_branch
      %1387 = sbr.rel (0) target = $region29
    $region28: #{cifar_decoder_forward.5} parent=1 // pred_region
      _
    $region29: #{cifar_decoder_forward.5} parent=1 // pred_fallthru
      _
    %1388 = vsyncpa [#allocation3], 1
    %1389 = vsyncpa [#allocation5], 1

// kernel: cifar_decoder_forward.6
$region0: #{cifar_decoder_forward.6}
  #allocation0 [shape = 'u32[]', space=smem, size = 0x4, offset = 0x4, fixed_abs, tag = 'smem constant byte address 0x4 - core index']
  #allocation1 [shape = 'u32[72,128]{1,0:T(1,128)}', space=vmem, size = 0x9000, scoped, tag = 'internal scratch']
  %s0 = inlined_call_operand.vmem [shape: bf16[128,576], index: 0, kind: input, shape index: {}]
  %s1 = inlined_call_operand.hbm [shape: bf16[576,128], index: 1, kind: input, shape index: {}]
  %s2 = inlined_call_operand.hbm [shape: f32[1,128], index: 2, kind: input, shape index: {}]
  %s3 = inlined_call_operand.vmem [shape: bf16[128,128], index: 3, kind: output, shape index: {}]
  %s4 = sld [smem:[#allocation0]]
  $region30: #{cifar_decoder_forward.6} parent=0
    _
  %s6 = ssub.s32 1, %s4
  %s7 = scalar_select 0, %s6, %s4
  $region1: #{cifar_decoder_forward.6} parent=0
    #allocation2 [shape = 'u8[147456]{0}', space=vmem, size = 0x24000, scoped, tag = 'input window, operand 1, single buffered']
    #allocation3 [shape = 's32[1]{0}', space=sflag, size = 0x4, scoped, tag = 'scoped memory for cifar_decoder_forward.6']
    #allocation4 [shape = 'u8[512]{0}', space=vmem, size = 0x400, scoped, tag = 'input window, operand 2, single buffered']
    #allocation5 [shape = 's32[1]{0}', space=sflag, size = 0x4, scoped, tag = 'scoped memory for cifar_decoder_forward.6']
    %8 = vsyncpa [#allocation3], 0
    %9 = vsyncpa [#allocation5], 0
    // Predicated region
    $region2: #{cifar_decoder_forward.6} parent=1 // pred_check
      _
    $region3: #{cifar_decoder_forward.6} parent=1 // pred_check_branch
      %11 = sbr.rel (0) target = $region5
    $region4: #{cifar_decoder_forward.6} parent=1 // pred_region
      _
    $region5: #{cifar_decoder_forward.6} parent=1 // pred_fallthru
      _
    // Predicated region
    $region6: #{cifar_decoder_forward.6} parent=1 // pred_check
      _
    $region7: #{cifar_decoder_forward.6} parent=1 // pred_check_branch
      %13 = sbr.rel (0) target = $region9
    $region8: #{cifar_decoder_forward.6} parent=1 // pred_region
      %15 = vsyncadd [#allocation3], 0
      %s16 = sshll.u32 %s1, 4
      %s17 = int_to_ptr.hbm [resolvable:$true] %s16
      %s18 = sshll.u32 [#allocation2], 4
      %s19 = int_to_ptr.vmem [resolvable:$true] %s18
      %24 = dma.hbm_to_vmem [thread:$0]  %s17, 4608, %s19, [#allocation3], 64, 64, 4
    $region9: #{cifar_decoder_forward.6} parent=1 // pred_fallthru
      _
    // Predicated region
    $region10: #{cifar_decoder_forward.6} parent=1 // pred_check
      _
    $region11: #{cifar_decoder_forward.6} parent=1 // pred_check_branch
      %26 = sbr.rel (0) target = $region13
    $region12: #{cifar_decoder_forward.6} parent=1 // pred_region
      %28 = vsyncadd [#allocation5], 0
      %s30 = sshll.u32 %s2, 4
      %s31 = int_to_ptr.hbm [resolvable:$true] %s30
      %s32 = sshll.u32 [#allocation4], 4
      %s33 = int_to_ptr.vmem [resolvable:$true] %s32
      %35 = dma.hbm_to_vmem [thread:$0]  %s31, 16, %s33, [#allocation5]
    $region13: #{cifar_decoder_forward.6} parent=1 // pred_fallthru
      _
    // Predicated region
    $region14: #{cifar_decoder_forward.6} parent=1 // pred_check
      _
    $region15: #{cifar_decoder_forward.6} parent=1 // pred_check_branch
      %37 = sbr.rel (0) target = $region17
    $region16: #{cifar_decoder_forward.6} parent=1 // pred_region
      %39 = dma.done [#allocation3], 4608
    $region17: #{cifar_decoder_forward.6} parent=1 // pred_fallthru
      _
    // Predicated region
    $region18: #{cifar_decoder_forward.6} parent=1 // pred_check
      _
    $region19: #{cifar_decoder_forward.6} parent=1 // pred_check_branch
      %41 = sbr.rel (0) target = $region21
    $region20: #{cifar_decoder_forward.6} parent=1 // pred_region
      %43 = dma.done [#allocation5], 16
    $region21: #{cifar_decoder_forward.6} parent=1 // pred_fallthru
      _
    %v45 = vld [vmem:[%s0] sm:$0xff]
    %v46 = vld [vmem:[%s0 + $0x8] sm:$0xff]
    %v47 = vld [vmem:[%s0 + $0x10] sm:$0xf]
    %v48 = vld [vmem:[%s0 + $0x14] sm:$0xff]
    %v49 = vld [vmem:[%s0 + $0x1c] sm:$0xff]
    %v50 = vld [vmem:[%s0 + $0x24] sm:$0xf]
    %v51 = vld [vmem:[%s0 + $0x28] sm:$0xff]
    %v52 = vld [vmem:[%s0 + $0x30] sm:$0xff]
    %v53 = vld [vmem:[%s0 + $0x38] sm:$0xf]
    %v54 = vld [vmem:[%s0 + $0x3c] sm:$0xff]
    %v55 = vld [vmem:[%s0 + $0x44] sm:$0xff]
    %v56 = vld [vmem:[%s0 + $0x4c] sm:$0xf]
    %v57 = vld [vmem:[%s0 + $0x50] sm:$0xff]
    %v58 = vld [vmem:[%s0 + $0x58] sm:$0xff]
    %v59 = vld [vmem:[%s0 + $0x60] sm:$0xf]
    %v60 = vld [vmem:[%s0 + $0x64] sm:$0xff]
    %v61 = vld [vmem:[%s0 + $0x6c] sm:$0xff]
    %v62 = vld [vmem:[%s0 + $0x74] sm:$0xf]
    %v63 = vld [vmem:[%s0 + $0x78] sm:$0xff]
    %v64 = vld [vmem:[%s0 + $0x80] sm:$0xff]
    %v65 = vld [vmem:[%s0 + $0x88] sm:$0xf]
    %v66 = vld [vmem:[%s0 + $0x8c] sm:$0xff]
    %v67 = vld [vmem:[%s0 + $0x94] sm:$0xff]
    %v68 = vld [vmem:[%s0 + $0x9c] sm:$0xf]
    %v69 = vld [vmem:[%s0 + $0xa0] sm:$0xff]
    %v70 = vld [vmem:[%s0 + $0xa8] sm:$0xff]
    %v71 = vld [vmem:[%s0 + $0xb0] sm:$0xf]
    %v72 = vld [vmem:[%s0 + $0xb4] sm:$0xff]
    %v73 = vld [vmem:[%s0 + $0xbc] sm:$0xff]
    %v74 = vld [vmem:[%s0 + $0xc4] sm:$0xf]
    %v75 = vld [vmem:[%s0 + $0xc8] sm:$0xff]
    %v76 = vld [vmem:[%s0 + $0xd0] sm:$0xff]
    %v77 = vld [vmem:[%s0 + $0xd8] sm:$0xf]
    %v78 = vld [vmem:[%s0 + $0xdc] sm:$0xff]
    %v79 = vld [vmem:[%s0 + $0xe4] sm:$0xff]
    %v80 = vld [vmem:[%s0 + $0xec] sm:$0xf]
    %v81 = vld [vmem:[%s0 + $0xf0] sm:$0xff]
    %v82 = vld [vmem:[%s0 + $0xf8] sm:$0xff]
    %v83 = vld [vmem:[%s0 + $0x100] sm:$0xf]
    %v84 = vld [vmem:[%s0 + $0x104] sm:$0xff]
    %v85 = vld [vmem:[%s0 + $0x10c] sm:$0xff]
    %v86 = vld [vmem:[%s0 + $0x114] sm:$0xf]
    %v87 = vld [vmem:[%s0 + $0x118] sm:$0xff]
    %v88 = vld [vmem:[%s0 + $0x120] sm:$0xff]
    %v89 = vld [vmem:[%s0 + $0x128] sm:$0xf]
    %v90 = vld [vmem:[%s0 + $0x12c] sm:$0xff]
    %v91 = vld [vmem:[%s0 + $0x134] sm:$0xff]
    %v92 = vld [vmem:[%s0 + $0x13c] sm:$0xf]
    %v93 = vld [vmem:[#allocation2] sm:$0xf]
    %v94 = vld [vmem:[#allocation2 + $0x4] sm:$0xf]
    %v95 = vld [vmem:[#allocation2 + $0x8] sm:$0xf]
    %v96 = vld [vmem:[#allocation2 + $0xc] sm:$0xf]
    %v97 = vld [vmem:[#allocation2 + $0x10] sm:$0xf]
    %v98 = vld [vmem:[#allocation2 + $0x14] sm:$0xf]
    %v99 = vld [vmem:[#allocation2 + $0x18] sm:$0xf]
    %v100 = vld [vmem:[#allocation2 + $0x1c] sm:$0xf]
    %v101 = vld [vmem:[#allocation2 + $0x20] sm:$0xf]
    %v102 = vld [vmem:[#allocation2 + $0x24] sm:$0xf]
    %v103 = vld [vmem:[#allocation2 + $0x28] sm:$0xf]
    %v104 = vld [vmem:[#allocation2 + $0x2c] sm:$0xf]
    %v105 = vld [vmem:[#allocation2 + $0x30] sm:$0xf]
    %v106 = vld [vmem:[#allocation2 + $0x34] sm:$0xf]
    %v107 = vld [vmem:[#allocation2 + $0x38] sm:$0xf]
    %v108 = vld [vmem:[#allocation2 + $0x3c] sm:$0xf]
    %v109 = vld [vmem:[#allocation2 + $0x40] sm:$0xf]
    %v110 = vld [vmem:[#allocation2 + $0x44] sm:$0xf]
    %v111 = vld [vmem:[#allocation2 + $0x48] sm:$0xf]
    %v112 = vld [vmem:[#allocation2 + $0x4c] sm:$0xf]
    %v113 = vld [vmem:[#allocation2 + $0x50] sm:$0xf]
    %v114 = vld [vmem:[#allocation2 + $0x54] sm:$0xf]
    %v115 = vld [vmem:[#allocation2 + $0x58] sm:$0xf]
    %v116 = vld [vmem:[#allocation2 + $0x5c] sm:$0xf]
    %v117 = vld [vmem:[#allocation2 + $0x60] sm:$0xf]
    %v118 = vld [vmem:[#allocation2 + $0x64] sm:$0xf]
    %v119 = vld [vmem:[#allocation2 + $0x68] sm:$0xf]
    %v120 = vld [vmem:[#allocation2 + $0x6c] sm:$0xf]
    %v121 = vld [vmem:[#allocation2 + $0x70] sm:$0xf]
    %v122 = vld [vmem:[#allocation2 + $0x74] sm:$0xf]
    %v123 = vld [vmem:[#allocation2 + $0x78] sm:$0xf]
    %v124 = vld [vmem:[#allocation2 + $0x7c] sm:$0xf]
    %v125 = vld [vmem:[#allocation2 + $0x80] sm:$0xf]
    %v126 = vld [vmem:[#allocation2 + $0x84] sm:$0xf]
    %v127 = vld [vmem:[#allocation2 + $0x88] sm:$0xf]
    %v128 = vld [vmem:[#allocation2 + $0x8c] sm:$0xf]
    %v129 = vld [vmem:[#allocation2 + $0x90] sm:$0xf]
    %v130 = vld [vmem:[#allocation2 + $0x94] sm:$0xf]
    %v131 = vld [vmem:[#allocation2 + $0x98] sm:$0xf]
    %v132 = vld [vmem:[#allocation2 + $0x9c] sm:$0xf]
    %v133 = vld [vmem:[#allocation2 + $0xa0] sm:$0xf]
    %v134 = vld [vmem:[#allocation2 + $0xa4] sm:$0xf]
    %v135 = vld [vmem:[#allocation2 + $0xa8] sm:$0xf]
    %v136 = vld [vmem:[#allocation2 + $0xac] sm:$0xf]
    %v137 = vld [vmem:[#allocation2 + $0xb0] sm:$0xf]
    %v138 = vld [vmem:[#allocation2 + $0xb4] sm:$0xf]
    %v139 = vld [vmem:[#allocation2 + $0xb8] sm:$0xf]
    %v140 = vld [vmem:[#allocation2 + $0xbc] sm:$0xf]
    %v141 = vld [vmem:[#allocation2 + $0xc0] sm:$0xf]
    %v142 = vld [vmem:[#allocation2 + $0xc4] sm:$0xf]
    %v143 = vld [vmem:[#allocation2 + $0xc8] sm:$0xf]
    %v144 = vld [vmem:[#allocation2 + $0xcc] sm:$0xf]
    %v145 = vld [vmem:[#allocation2 + $0xd0] sm:$0xf]
    %v146 = vld [vmem:[#allocation2 + $0xd4] sm:$0xf]
    %v147 = vld [vmem:[#allocation2 + $0xd8] sm:$0xf]
    %v148 = vld [vmem:[#allocation2 + $0xdc] sm:$0xf]
    %v149 = vld [vmem:[#allocation2 + $0xe0] sm:$0xf]
    %v150 = vld [vmem:[#allocation2 + $0xe4] sm:$0xf]
    %v151 = vld [vmem:[#allocation2 + $0xe8] sm:$0xf]
    %v152 = vld [vmem:[#allocation2 + $0xec] sm:$0xf]
    %v153 = vld [vmem:[#allocation2 + $0xf0] sm:$0xf]
    %v154 = vld [vmem:[#allocation2 + $0xf4] sm:$0xf]
    %v155 = vld [vmem:[#allocation2 + $0xf8] sm:$0xf]
    %v156 = vld [vmem:[#allocation2 + $0xfc] sm:$0xf]
    %v157 = vld [vmem:[#allocation2 + $0x100] sm:$0xf]
    %v158 = vld [vmem:[#allocation2 + $0x104] sm:$0xf]
    %v159 = vld [vmem:[#allocation2 + $0x108] sm:$0xf]
    %v160 = vld [vmem:[#allocation2 + $0x10c] sm:$0xf]
    %v161 = vld [vmem:[#allocation2 + $0x110] sm:$0xf]
    %v162 = vld [vmem:[#allocation2 + $0x114] sm:$0xf]
    %v163 = vld [vmem:[#allocation2 + $0x118] sm:$0xf]
    %v164 = vld [vmem:[#allocation2 + $0x11c] sm:$0xf]
    %v165 = vld [vmem:[#allocation4] sm:$0x1]
    %v167 = vperm.slane %v165, 0
    %v217 = vunpack.c.l.b16 %v45
    %v218 = vunpack.c.h.b16 %v45
    %v219 = vunpack.c.l.b16 %v46
    %v220 = vunpack.c.h.b16 %v46
    %v221 = vunpack.c.l.b16 %v47
    %v222 = vunpack.c.l.b16 %v48
    %v223 = vunpack.c.h.b16 %v48
    %v224 = vunpack.c.l.b16 %v49
    %v225 = vunpack.c.h.b16 %v49
    %v226 = vunpack.c.l.b16 %v50
    %v227 = vunpack.c.l.b16 %v51
    %v228 = vunpack.c.h.b16 %v51
    %v229 = vunpack.c.l.b16 %v52
    %v230 = vunpack.c.h.b16 %v52
    %v231 = vunpack.c.l.b16 %v53
    %v232 = vunpack.c.l.b16 %v54
    %v233 = vunpack.c.h.b16 %v54
    %v234 = vunpack.c.l.b16 %v55
    %v235 = vunpack.c.h.b16 %v55
    %v236 = vunpack.c.l.b16 %v56
    %v237 = vunpack.c.l.b16 %v57
    %v238 = vunpack.c.h.b16 %v57
    %v239 = vunpack.c.l.b16 %v58
    %v240 = vunpack.c.h.b16 %v58
    %v241 = vunpack.c.l.b16 %v59
    %v242 = vunpack.c.l.b16 %v60
    %v243 = vunpack.c.h.b16 %v60
    %v244 = vunpack.c.l.b16 %v61
    %v245 = vunpack.c.h.b16 %v61
    %v246 = vunpack.c.l.b16 %v62
    %v247 = vunpack.c.l.b16 %v63
    %v248 = vunpack.c.h.b16 %v63
    %v249 = vunpack.c.l.b16 %v64
    %v250 = vunpack.c.h.b16 %v64
    %v251 = vunpack.c.l.b16 %v65
    %v252 = vunpack.c.l.b16 %v66
    %v253 = vunpack.c.h.b16 %v66
    %v254 = vunpack.c.l.b16 %v67
    %v255 = vunpack.c.h.b16 %v67
    %v256 = vunpack.c.l.b16 %v68
    %v257 = vunpack.c.l.b16 %v69
    %v258 = vunpack.c.h.b16 %v69
    %v259 = vunpack.c.l.b16 %v70
    %v260 = vunpack.c.h.b16 %v70
    %v261 = vunpack.c.l.b16 %v71
    %v262 = vunpack.c.l.b16 %v72
    %v263 = vunpack.c.h.b16 %v72
    %v264 = vunpack.c.l.b16 %v73
    %v265 = vunpack.c.h.b16 %v73
    %v266 = vunpack.c.l.b16 %v74
    %v267 = vunpack.c.l.b16 %v75
    %v268 = vunpack.c.h.b16 %v75
    %v269 = vunpack.c.l.b16 %v76
    %v270 = vunpack.c.h.b16 %v76
    %v271 = vunpack.c.l.b16 %v77
    %v272 = vunpack.c.l.b16 %v78
    %v273 = vunpack.c.h.b16 %v78
    %v274 = vunpack.c.l.b16 %v79
    %v275 = vunpack.c.h.b16 %v79
    %v276 = vunpack.c.l.b16 %v80
    %v277 = vunpack.c.l.b16 %v81
    %v278 = vunpack.c.h.b16 %v81
    %v279 = vunpack.c.l.b16 %v82
    %v280 = vunpack.c.h.b16 %v82
    %v281 = vunpack.c.l.b16 %v83
    %v282 = vunpack.c.l.b16 %v84
    %v283 = vunpack.c.h.b16 %v84
    %v284 = vunpack.c.l.b16 %v85
    %v285 = vunpack.c.h.b16 %v85
    %v286 = vunpack.c.l.b16 %v86
    %v287 = vunpack.c.l.b16 %v87
    %v288 = vunpack.c.h.b16 %v87
    %v289 = vunpack.c.l.b16 %v88
    %v290 = vunpack.c.h.b16 %v88
    %v291 = vunpack.c.l.b16 %v89
    %v292 = vunpack.c.l.b16 %v90
    %v293 = vunpack.c.h.b16 %v90
    %v294 = vunpack.c.l.b16 %v91
    %v295 = vunpack.c.h.b16 %v91
    %v296 = vunpack.c.l.b16 %v92
    %v297 = vpack.c.b16 %v222, %v217
    %v298 = vpack.c.b16 %v223, %v218
    %v299 = vpack.c.b16 %v224, %v219
    %v300 = vpack.c.b16 %v225, %v220
    %v301 = vpack.c.b16 %v226, %v221
    %v302 = vpack.c.b16 %v232, %v227
    %v303 = vpack.c.b16 %v233, %v228
    %v304 = vpack.c.b16 %v234, %v229
    %v305 = vpack.c.b16 %v235, %v230
    %v306 = vpack.c.b16 %v236, %v231
    %v307 = vpack.c.b16 %v242, %v237
    %v308 = vpack.c.b16 %v243, %v238
    %v309 = vpack.c.b16 %v244, %v239
    %v310 = vpack.c.b16 %v245, %v240
    %v311 = vpack.c.b16 %v246, %v241
    %v312 = vpack.c.b16 %v252, %v247
    %v313 = vpack.c.b16 %v253, %v248
    %v314 = vpack.c.b16 %v254, %v249
    %v315 = vpack.c.b16 %v255, %v250
    %v316 = vpack.c.b16 %v256, %v251
    %v317 = vpack.c.b16 %v262, %v257
    %v318 = vpack.c.b16 %v263, %v258
    %v319 = vpack.c.b16 %v264, %v259
    %v320 = vpack.c.b16 %v265, %v260
    %v321 = vpack.c.b16 %v266, %v261
    %v322 = vpack.c.b16 %v272, %v267
    %v323 = vpack.c.b16 %v273, %v268
    %v324 = vpack.c.b16 %v274, %v269
    %v325 = vpack.c.b16 %v275, %v270
    %v326 = vpack.c.b16 %v276, %v271
    %v327 = vpack.c.b16 %v282, %v277
    %v328 = vpack.c.b16 %v283, %v278
    %v329 = vpack.c.b16 %v284, %v279
    %v330 = vpack.c.b16 %v285, %v280
    %v331 = vpack.c.b16 %v286, %v281
    %v332 = vpack.c.b16 %v292, %v287
    %v333 = vpack.c.b16 %v293, %v288
    %v334 = vpack.c.b16 %v294, %v289
    %v335 = vpack.c.b16 %v295, %v290
    %v336 = vpack.c.b16 %v296, %v291
    %v441 = vunpack.c.l.b16 %v93
    %v442 = vunpack.c.l.b16 %v94
    %v443 = vunpack.c.l.b16 %v95
    %v444 = vunpack.c.l.b16 %v96
    %v445 = vunpack.c.l.b16 %v97
    %v446 = vunpack.c.l.b16 %v98
    %v447 = vunpack.c.l.b16 %v99
    %v448 = vunpack.c.l.b16 %v100
    %v449 = vunpack.c.l.b16 %v101
    %v450 = vunpack.c.l.b16 %v102
    %v451 = vunpack.c.l.b16 %v103
    %v452 = vunpack.c.l.b16 %v104
    %v453 = vunpack.c.l.b16 %v105
    %v454 = vunpack.c.l.b16 %v106
    %v455 = vunpack.c.l.b16 %v107
    %v456 = vunpack.c.l.b16 %v108
    %v457 = vunpack.c.l.b16 %v109
    %v458 = vunpack.c.l.b16 %v110
    %v459 = vunpack.c.l.b16 %v111
    %v460 = vunpack.c.l.b16 %v112
    %v461 = vunpack.c.l.b16 %v113
    %v462 = vunpack.c.l.b16 %v114
    %v463 = vunpack.c.l.b16 %v115
    %v464 = vunpack.c.l.b16 %v116
    %v465 = vunpack.c.l.b16 %v117
    %v466 = vunpack.c.l.b16 %v118
    %v467 = vunpack.c.l.b16 %v119
    %v468 = vunpack.c.l.b16 %v120
    %v469 = vunpack.c.l.b16 %v121
    %v470 = vunpack.c.l.b16 %v122
    %v471 = vunpack.c.l.b16 %v123
    %v472 = vunpack.c.l.b16 %v124
    %v473 = vunpack.c.l.b16 %v125
    %v474 = vunpack.c.l.b16 %v126
    %v475 = vunpack.c.l.b16 %v127
    %v476 = vunpack.c.l.b16 %v128
    %v477 = vunpack.c.l.b16 %v129
    %v478 = vunpack.c.l.b16 %v130
    %v479 = vunpack.c.l.b16 %v131
    %v480 = vunpack.c.l.b16 %v132
    %v481 = vunpack.c.l.b16 %v133
    %v482 = vunpack.c.l.b16 %v134
    %v483 = vunpack.c.l.b16 %v135
    %v484 = vunpack.c.l.b16 %v136
    %v485 = vunpack.c.l.b16 %v137
    %v486 = vunpack.c.l.b16 %v138
    %v487 = vunpack.c.l.b16 %v139
    %v488 = vunpack.c.l.b16 %v140
    %v489 = vunpack.c.l.b16 %v141
    %v490 = vunpack.c.l.b16 %v142
    %v491 = vunpack.c.l.b16 %v143
    %v492 = vunpack.c.l.b16 %v144
    %v493 = vunpack.c.l.b16 %v145
    %v494 = vunpack.c.l.b16 %v146
    %v495 = vunpack.c.l.b16 %v147
    %v496 = vunpack.c.l.b16 %v148
    %v497 = vunpack.c.l.b16 %v149
    %v498 = vunpack.c.l.b16 %v150
    %v499 = vunpack.c.l.b16 %v151
    %v500 = vunpack.c.l.b16 %v152
    %v501 = vunpack.c.l.b16 %v153
    %v502 = vunpack.c.l.b16 %v154
    %v503 = vunpack.c.l.b16 %v155
    %v504 = vunpack.c.l.b16 %v156
    %v505 = vunpack.c.l.b16 %v157
    %v506 = vunpack.c.l.b16 %v158
    %v507 = vunpack.c.l.b16 %v159
    %v508 = vunpack.c.l.b16 %v160
    %v509 = vunpack.c.l.b16 %v161
    %v510 = vunpack.c.l.b16 %v162
    %v511 = vunpack.c.l.b16 %v163
    %v512 = vunpack.c.l.b16 %v164
    %v513 = vpack.c.b16 %v442, %v441
    %v514 = vpack.c.b16 %v444, %v443
    %v515 = vpack.c.b16 %v446, %v445
    %v516 = vpack.c.b16 %v448, %v447
    %v517 = vpack.c.b16 %v450, %v449
    %v518 = vpack.c.b16 %v452, %v451
    %v519 = vpack.c.b16 %v454, %v453
    %v520 = vpack.c.b16 %v456, %v455
    %v521 = vpack.c.b16 %v458, %v457
    %v522 = vpack.c.b16 %v460, %v459
    %v523 = vpack.c.b16 %v462, %v461
    %v524 = vpack.c.b16 %v464, %v463
    %v525 = vpack.c.b16 %v466, %v465
    %v526 = vpack.c.b16 %v468, %v467
    %v527 = vpack.c.b16 %v470, %v469
    %v528 = vpack.c.b16 %v472, %v471
    %v529 = vpack.c.b16 %v474, %v473
    %v530 = vpack.c.b16 %v476, %v475
    %v531 = vpack.c.b16 %v478, %v477
    %v532 = vpack.c.b16 %v480, %v479
    %v533 = vpack.c.b16 %v482, %v481
    %v534 = vpack.c.b16 %v484, %v483
    %v535 = vpack.c.b16 %v486, %v485
    %v536 = vpack.c.b16 %v488, %v487
    %v537 = vpack.c.b16 %v490, %v489
    %v538 = vpack.c.b16 %v492, %v491
    %v539 = vpack.c.b16 %v494, %v493
    %v540 = vpack.c.b16 %v496, %v495
    %v541 = vpack.c.b16 %v498, %v497
    %v542 = vpack.c.b16 %v500, %v499
    %v543 = vpack.c.b16 %v502, %v501
    %v544 = vpack.c.b16 %v504, %v503
    %v545 = vpack.c.b16 %v506, %v505
    %v546 = vpack.c.b16 %v508, %v507
    %v547 = vpack.c.b16 %v510, %v509
    %v548 = vpack.c.b16 %v512, %v511
    %vm585 = vcmask 523264
    %v587 = vsel %vm585, %v301, 0
    %v590 = vsel %vm585, %v306, 0
    %v593 = vsel %vm585, %v311, 0
    %v596 = vsel %vm585, %v316, 0
    %v599 = vsel %vm585, %v321, 0
    %v602 = vsel %vm585, %v326, 0
    %v605 = vsel %vm585, %v331, 0
    %v608 = vsel %vm585, %v336, 0
    %610 = vmatpush.bf16.msra.mxu0 %v520
    %611 = vmatpush.bf16.msra.mxu0 %v519
    %612 = vmatpush.bf16.msra.mxu0 %v518
    %613 = vmatpush.bf16.msra.mxu0 %v517
    %614 = vmatpush.bf16.msra.mxu0 %v516
    %615 = vmatpush.bf16.msra.mxu0 %v515
    %616 = vmatpush.bf16.msra.mxu0 %v514
    %617 = vmatpush.bf16.msra.mxu0 %v513
    %618 = vmatmul.bf16.gmra.mxu0 %v297
    %v619 = vpop.f32.mrf.mxu0
    %v620 = vadd.f32 %v167, %v619
    %v621 = vpop.f32.mrf.mxu0
    %v622 = vadd.f32 %v167, %v621
    %623 = vmatmul.bf16.gmra.mxu0 %v302
    %v624 = vpop.f32.mrf.mxu0
    %v625 = vadd.f32 %v167, %v624
    %v626 = vpop.f32.mrf.mxu0
    %v627 = vadd.f32 %v167, %v626
    %628 = vmatmul.bf16.gmra.mxu0 %v307
    %v629 = vpop.f32.mrf.mxu0
    %v630 = vadd.f32 %v167, %v629
    %v631 = vpop.f32.mrf.mxu0
    %v632 = vadd.f32 %v167, %v631
    %633 = vmatmul.bf16.gmra.mxu0 %v312
    %v634 = vpop.f32.mrf.mxu0
    %v635 = vadd.f32 %v167, %v634
    %v636 = vpop.f32.mrf.mxu0
    %v637 = vadd.f32 %v167, %v636
    %638 = vmatmul.bf16.gmra.mxu0 %v317
    %v639 = vpop.f32.mrf.mxu0
    %v640 = vadd.f32 %v167, %v639
    %v641 = vpop.f32.mrf.mxu0
    %v642 = vadd.f32 %v167, %v641
    %643 = vmatmul.bf16.gmra.mxu0 %v322
    %v644 = vpop.f32.mrf.mxu0
    %v645 = vadd.f32 %v167, %v644
    %v646 = vpop.f32.mrf.mxu0
    %v647 = vadd.f32 %v167, %v646
    %648 = vmatmul.bf16.gmra.mxu0 %v327
    %v649 = vpop.f32.mrf.mxu0
    %v650 = vadd.f32 %v167, %v649
    %v651 = vpop.f32.mrf.mxu0
    %v652 = vadd.f32 %v167, %v651
    %653 = vmatmul.bf16.gmra.mxu0 %v332
    %v654 = vpop.f32.mrf.mxu0
    %v655 = vadd.f32 %v167, %v654
    %v656 = vpop.f32.mrf.mxu0
    %v657 = vadd.f32 %v167, %v656
    %658 = vdwg.mxu0
    %659 = vmatpush.bf16.msra.mxu0 %v528
    %660 = vmatpush.bf16.msra.mxu0 %v527
    %661 = vmatpush.bf16.msra.mxu0 %v526
    %662 = vmatpush.bf16.msra.mxu0 %v525
    %663 = vmatpush.bf16.msra.mxu0 %v524
    %664 = vmatpush.bf16.msra.mxu0 %v523
    %665 = vmatpush.bf16.msra.mxu0 %v522
    %666 = vmatpush.bf16.msra.mxu0 %v521
    %667 = vmatmul.bf16.gmra.mxu0 %v298
    %v668 = vpop.f32.mrf.mxu0
    %v669 = vadd.f32 %v620, %v668
    %v670 = vpop.f32.mrf.mxu0
    %v671 = vadd.f32 %v622, %v670
    %672 = vmatmul.bf16.gmra.mxu0 %v303
    %v673 = vpop.f32.mrf.mxu0
    %v674 = vadd.f32 %v625, %v673
    %v675 = vpop.f32.mrf.mxu0
    %v676 = vadd.f32 %v627, %v675
    %677 = vmatmul.bf16.gmra.mxu0 %v308
    %v678 = vpop.f32.mrf.mxu0
    %v679 = vadd.f32 %v630, %v678
    %v680 = vpop.f32.mrf.mxu0
    %v681 = vadd.f32 %v632, %v680
    %682 = vmatmul.bf16.gmra.mxu0 %v313
    %v683 = vpop.f32.mrf.mxu0
    %v684 = vadd.f32 %v635, %v683
    %v685 = vpop.f32.mrf.mxu0
    %v686 = vadd.f32 %v637, %v685
    %687 = vmatmul.bf16.gmra.mxu0 %v318
    %v688 = vpop.f32.mrf.mxu0
    %v689 = vadd.f32 %v640, %v688
    %v690 = vpop.f32.mrf.mxu0
    %v691 = vadd.f32 %v642, %v690
    %692 = vmatmul.bf16.gmra.mxu0 %v323
    %v693 = vpop.f32.mrf.mxu0
    %v694 = vadd.f32 %v645, %v693
    %v695 = vpop.f32.mrf.mxu0
    %v696 = vadd.f32 %v647, %v695
    %697 = vmatmul.bf16.gmra.mxu0 %v328
    %v698 = vpop.f32.mrf.mxu0
    %v699 = vadd.f32 %v650, %v698
    %v700 = vpop.f32.mrf.mxu0
    %v701 = vadd.f32 %v652, %v700
    %702 = vmatmul.bf16.gmra.mxu0 %v333
    %v703 = vpop.f32.mrf.mxu0
    %v704 = vadd.f32 %v655, %v703
    %v705 = vpop.f32.mrf.mxu0
    %v706 = vadd.f32 %v657, %v705
    %707 = vdwg.mxu0
    %708 = vmatpush.bf16.msra.mxu0 %v536
    %709 = vmatpush.bf16.msra.mxu0 %v535
    %710 = vmatpush.bf16.msra.mxu0 %v534
    %711 = vmatpush.bf16.msra.mxu0 %v533
    %712 = vmatpush.bf16.msra.mxu0 %v532
    %713 = vmatpush.bf16.msra.mxu0 %v531
    %714 = vmatpush.bf16.msra.mxu0 %v530
    %715 = vmatpush.bf16.msra.mxu0 %v529
    %716 = vmatmul.bf16.gmra.mxu0 %v299
    %v717 = vpop.f32.mrf.mxu0
    %v718 = vadd.f32 %v669, %v717
    %v719 = vpop.f32.mrf.mxu0
    %v720 = vadd.f32 %v671, %v719
    %721 = vmatmul.bf16.gmra.mxu0 %v304
    %v722 = vpop.f32.mrf.mxu0
    %v723 = vadd.f32 %v674, %v722
    %v724 = vpop.f32.mrf.mxu0
    %v725 = vadd.f32 %v676, %v724
    %726 = vmatmul.bf16.gmra.mxu0 %v309
    %v727 = vpop.f32.mrf.mxu0
    %v728 = vadd.f32 %v679, %v727
    %v729 = vpop.f32.mrf.mxu0
    %v730 = vadd.f32 %v681, %v729
    %731 = vmatmul.bf16.gmra.mxu0 %v314
    %v732 = vpop.f32.mrf.mxu0
    %v733 = vadd.f32 %v684, %v732
    %v734 = vpop.f32.mrf.mxu0
    %v735 = vadd.f32 %v686, %v734
    %736 = vmatmul.bf16.gmra.mxu0 %v319
    %v737 = vpop.f32.mrf.mxu0
    %v738 = vadd.f32 %v689, %v737
    %v739 = vpop.f32.mrf.mxu0
    %v740 = vadd.f32 %v691, %v739
    %741 = vmatmul.bf16.gmra.mxu0 %v324
    %v742 = vpop.f32.mrf.mxu0
    %v743 = vadd.f32 %v694, %v742
    %v744 = vpop.f32.mrf.mxu0
    %v745 = vadd.f32 %v696, %v744
    %746 = vmatmul.bf16.gmra.mxu0 %v329
    %v747 = vpop.f32.mrf.mxu0
    %v748 = vadd.f32 %v699, %v747
    %v749 = vpop.f32.mrf.mxu0
    %v750 = vadd.f32 %v701, %v749
    %751 = vmatmul.bf16.gmra.mxu0 %v334
    %v752 = vpop.f32.mrf.mxu0
    %v753 = vadd.f32 %v704, %v752
    %v754 = vpop.f32.mrf.mxu0
    %v755 = vadd.f32 %v706, %v754
    %756 = vdwg.mxu0
    %757 = vmatpush.bf16.msra.mxu0 %v544
    %758 = vmatpush.bf16.msra.mxu0 %v543
    %759 = vmatpush.bf16.msra.mxu0 %v542
    %760 = vmatpush.bf16.msra.mxu0 %v541
    %761 = vmatpush.bf16.msra.mxu0 %v540
    %762 = vmatpush.bf16.msra.mxu0 %v539
    %763 = vmatpush.bf16.msra.mxu0 %v538
    %764 = vmatpush.bf16.msra.mxu0 %v537
    %765 = vmatmul.bf16.gmra.mxu0 %v300
    %v766 = vpop.f32.mrf.mxu0
    %v767 = vadd.f32 %v718, %v766
    %v768 = vpop.f32.mrf.mxu0
    %v769 = vadd.f32 %v720, %v768
    %770 = vmatmul.bf16.gmra.mxu0 %v305
    %v771 = vpop.f32.mrf.mxu0
    %v772 = vadd.f32 %v723, %v771
    %v773 = vpop.f32.mrf.mxu0
    %v774 = vadd.f32 %v725, %v773
    %775 = vmatmul.bf16.gmra.mxu0 %v310
    %v776 = vpop.f32.mrf.mxu0
    %v777 = vadd.f32 %v728, %v776
    %v778 = vpop.f32.mrf.mxu0
    %v779 = vadd.f32 %v730, %v778
    %780 = vmatmul.bf16.gmra.mxu0 %v315
    %v781 = vpop.f32.mrf.mxu0
    %v782 = vadd.f32 %v733, %v781
    %v783 = vpop.f32.mrf.mxu0
    %v784 = vadd.f32 %v735, %v783
    %785 = vmatmul.bf16.gmra.mxu0 %v320
    %v786 = vpop.f32.mrf.mxu0
    %v787 = vadd.f32 %v738, %v786
    %v788 = vpop.f32.mrf.mxu0
    %v789 = vadd.f32 %v740, %v788
    %790 = vmatmul.bf16.gmra.mxu0 %v325
    %v791 = vpop.f32.mrf.mxu0
    %v792 = vadd.f32 %v743, %v791
    %v793 = vpop.f32.mrf.mxu0
    %v794 = vadd.f32 %v745, %v793
    %795 = vmatmul.bf16.gmra.mxu0 %v330
    %v796 = vpop.f32.mrf.mxu0
    %v797 = vadd.f32 %v748, %v796
    %v798 = vpop.f32.mrf.mxu0
    %v799 = vadd.f32 %v750, %v798
    %800 = vmatmul.bf16.gmra.mxu0 %v335
    %v801 = vpop.f32.mrf.mxu0
    %v802 = vadd.f32 %v753, %v801
    %v803 = vpop.f32.mrf.mxu0
    %v804 = vadd.f32 %v755, %v803
    %805 = vdwg.mxu0
    %806 = vmatpush.bf16.msra.mxu0 0
    %807 = vmatpush.bf16.msra.mxu0 0
    %808 = vmatpush.bf16.msra.mxu0 0
    %809 = vmatpush.bf16.msra.mxu0 0
    %810 = vmatpush.bf16.msra.mxu0 %v548
    %811 = vmatpush.bf16.msra.mxu0 %v547
    %812 = vmatpush.bf16.msra.mxu0 %v546
    %813 = vmatpush.bf16.msra.mxu0 %v545
    %814 = vmatmul.bf16.gmra.mxu0 %v587
    %v815 = vpop.f32.mrf.mxu0
    %v816 = vadd.f32 %v767, %v815
    %v817 = vpop.f32.mrf.mxu0
    %v818 = vadd.f32 %v769, %v817
    %819 = vmatmul.bf16.gmra.mxu0 %v590
    %v820 = vpop.f32.mrf.mxu0
    %v821 = vadd.f32 %v772, %v820
    %v822 = vpop.f32.mrf.mxu0
    %v823 = vadd.f32 %v774, %v822
    %824 = vmatmul.bf16.gmra.mxu0 %v593
    %v825 = vpop.f32.mrf.mxu0
    %v826 = vadd.f32 %v777, %v825
    %v827 = vpop.f32.mrf.mxu0
    %v828 = vadd.f32 %v779, %v827
    %829 = vmatmul.bf16.gmra.mxu0 %v596
    %v830 = vpop.f32.mrf.mxu0
    %v831 = vadd.f32 %v782, %v830
    %v832 = vpop.f32.mrf.mxu0
    %v833 = vadd.f32 %v784, %v832
    %834 = vmatmul.bf16.gmra.mxu0 %v599
    %v835 = vpop.f32.mrf.mxu0
    %v836 = vadd.f32 %v787, %v835
    %v837 = vpop.f32.mrf.mxu0
    %v838 = vadd.f32 %v789, %v837
    %839 = vmatmul.bf16.gmra.mxu0 %v602
    %v840 = vpop.f32.mrf.mxu0
    %v841 = vadd.f32 %v792, %v840
    %v842 = vpop.f32.mrf.mxu0
    %v843 = vadd.f32 %v794, %v842
    %844 = vmatmul.bf16.gmra.mxu0 %v605
    %v845 = vpop.f32.mrf.mxu0
    %v846 = vadd.f32 %v797, %v845
    %v847 = vpop.f32.mrf.mxu0
    %v848 = vadd.f32 %v799, %v847
    %849 = vmatmul.bf16.gmra.mxu0 %v608
    %v850 = vpop.f32.mrf.mxu0
    %v851 = vadd.f32 %v802, %v850
    %v852 = vpop.f32.mrf.mxu0
    %v853 = vadd.f32 %v804, %v852
    %854 = vdwg.mxu0
    %v855 = vmax.f32 %v816, 0.0
    %v856 = vmax.f32 %v818, 0.0
    %v857 = vmax.f32 %v821, 0.0
    %v858 = vmax.f32 %v823, 0.0
    %v859 = vmax.f32 %v826, 0.0
    %v860 = vmax.f32 %v828, 0.0
    %v861 = vmax.f32 %v831, 0.0
    %v862 = vmax.f32 %v833, 0.0
    %v863 = vmax.f32 %v836, 0.0
    %v864 = vmax.f32 %v838, 0.0
    %v865 = vmax.f32 %v841, 0.0
    %v866 = vmax.f32 %v843, 0.0
    %v867 = vmax.f32 %v846, 0.0
    %v868 = vmax.f32 %v848, 0.0
    %v869 = vmax.f32 %v851, 0.0
    %v870 = vmax.f32 %v853, 0.0
    %v871 = vpack.c.bf16 %v855, %v855
    %v872 = vpack.c.bf16 %v856, %v856
    %v873 = vpack.c.bf16 %v857, %v857
    %v874 = vpack.c.bf16 %v858, %v858
    %v875 = vpack.c.bf16 %v859, %v859
    %v876 = vpack.c.bf16 %v860, %v860
    %v877 = vpack.c.bf16 %v861, %v861
    %v878 = vpack.c.bf16 %v862, %v862
    %v879 = vpack.c.bf16 %v863, %v863
    %v880 = vpack.c.bf16 %v864, %v864
    %v881 = vpack.c.bf16 %v865, %v865
    %v882 = vpack.c.bf16 %v866, %v866
    %v883 = vpack.c.bf16 %v867, %v867
    %v884 = vpack.c.bf16 %v868, %v868
    %v885 = vpack.c.bf16 %v869, %v869
    %v886 = vpack.c.bf16 %v870, %v870
    %887 = vst [vmem:[%s3] sm:$0xf] %v871
    %888 = vst [vmem:[%s3 + $0x4] sm:$0xf] %v872
    %889 = vst [vmem:[%s3 + $0x8] sm:$0xf] %v873
    %890 = vst [vmem:[%s3 + $0xc] sm:$0xf] %v874
    %891 = vst [vmem:[%s3 + $0x10] sm:$0xf] %v875
    %892 = vst [vmem:[%s3 + $0x14] sm:$0xf] %v876
    %893 = vst [vmem:[%s3 + $0x18] sm:$0xf] %v877
    %894 = vst [vmem:[%s3 + $0x1c] sm:$0xf] %v878
    %895 = vst [vmem:[%s3 + $0x20] sm:$0xf] %v879
    %896 = vst [vmem:[%s3 + $0x24] sm:$0xf] %v880
    %897 = vst [vmem:[%s3 + $0x28] sm:$0xf] %v881
    %898 = vst [vmem:[%s3 + $0x2c] sm:$0xf] %v882
    %899 = vst [vmem:[%s3 + $0x30] sm:$0xf] %v883
    %900 = vst [vmem:[%s3 + $0x34] sm:$0xf] %v884
    %901 = vst [vmem:[%s3 + $0x38] sm:$0xf] %v885
    %902 = vst [vmem:[%s3 + $0x3c] sm:$0xf] %v886
    // Predicated region
    $region22: #{cifar_decoder_forward.6} parent=1 // pred_check
      _
    $region23: #{cifar_decoder_forward.6} parent=1 // pred_check_branch
      %904 = sbr.rel (0) target = $region25
    $region24: #{cifar_decoder_forward.6} parent=1 // pred_region
      _
    $region25: #{cifar_decoder_forward.6} parent=1 // pred_fallthru
      _
    // Predicated region
    $region26: #{cifar_decoder_forward.6} parent=1 // pred_check
      _
    $region27: #{cifar_decoder_forward.6} parent=1 // pred_check_branch
      %906 = sbr.rel (0) target = $region29
    $region28: #{cifar_decoder_forward.6} parent=1 // pred_region
      _
    $region29: #{cifar_decoder_forward.6} parent=1 // pred_fallthru
      _
    %907 = vsyncpa [#allocation3], 1
    %908 = vsyncpa [#allocation5], 1

// kernel: cifar_decoder_forward.7
$region0: #{cifar_decoder_forward.7}
  #allocation0 [shape = 'u32[]', space=smem, size = 0x4, offset = 0x4, fixed_abs, tag = 'smem constant byte address 0x4 - core index']
  #allocation1 [shape = 'u32[72,128]{1,0:T(1,128)}', space=vmem, size = 0x9000, scoped, tag = 'internal scratch']
  %s0 = inlined_call_operand.vmem [shape: bf16[512,288], index: 0, kind: input, shape index: {}]
  %s1 = inlined_call_operand.vmem [shape: bf16[288,12], index: 1, kind: input, shape index: {}]
  %s2 = inlined_call_operand.vmem [shape: f32[1,12], index: 2, kind: input, shape index: {}]
  %s3 = inlined_call_operand.vmem [shape: f32[512,12], index: 3, kind: output, shape index: {}]
  %s4 = sld [smem:[#allocation0]]
  $region22: #{cifar_decoder_forward.7} parent=0
    _
  %s6 = ssub.s32 1, %s4
  %s7 = scalar_select 0, %s6, %s4
  // Predicated region
  $region2: #{cifar_decoder_forward.7} parent=0 // pred_check
    _
  $region3: #{cifar_decoder_forward.7} parent=0 // pred_check_branch
    %9 = sbr.rel (0) target = $region5
  $region4: #{cifar_decoder_forward.7} parent=0 // pred_region
    _
  $region5: #{cifar_decoder_forward.7} parent=0 // pred_fallthru
    _
  // Predicated region
  $region6: #{cifar_decoder_forward.7} parent=0 // pred_check
    _
  $region7: #{cifar_decoder_forward.7} parent=0 // pred_check_branch
    %11 = sbr.rel (0) target = $region9
  $region8: #{cifar_decoder_forward.7} parent=0 // pred_region
    _
  $region9: #{cifar_decoder_forward.7} parent=0 // pred_fallthru
    _
  // Predicated region
  $region10: #{cifar_decoder_forward.7} parent=0 // pred_check
    _
  $region11: #{cifar_decoder_forward.7} parent=0 // pred_check_branch
    %13 = sbr.rel (0) target = $region13
  $region12: #{cifar_decoder_forward.7} parent=0 // pred_region
    _
  $region13: #{cifar_decoder_forward.7} parent=0 // pred_fallthru
    _
  %v15 = vld [vmem:[%s0] sm:$0xff]
  %v16 = vld [vmem:[%s0 + $0x8] sm:$0xf]
  %v17 = vld [vmem:[%s0 + $0xc] sm:$0xff]
  %v18 = vld [vmem:[%s0 + $0x14] sm:$0xf]
  %v19 = vld [vmem:[%s0 + $0x18] sm:$0xff]
  %v20 = vld [vmem:[%s0 + $0x20] sm:$0xf]
  %v21 = vld [vmem:[%s0 + $0x24] sm:$0xff]
  %v22 = vld [vmem:[%s0 + $0x2c] sm:$0xf]
  %v23 = vld [vmem:[%s0 + $0x30] sm:$0xff]
  %v24 = vld [vmem:[%s0 + $0x38] sm:$0xf]
  %v25 = vld [vmem:[%s0 + $0x3c] sm:$0xff]
  %v26 = vld [vmem:[%s0 + $0x44] sm:$0xf]
  %v27 = vld [vmem:[%s0 + $0x48] sm:$0xff]
  %v28 = vld [vmem:[%s0 + $0x50] sm:$0xf]
  %v29 = vld [vmem:[%s0 + $0x54] sm:$0xff]
  %v30 = vld [vmem:[%s0 + $0x5c] sm:$0xf]
  %v31 = vld [vmem:[%s0 + $0x60] sm:$0xff]
  %v32 = vld [vmem:[%s0 + $0x68] sm:$0xf]
  %v33 = vld [vmem:[%s0 + $0x6c] sm:$0xff]
  %v34 = vld [vmem:[%s0 + $0x74] sm:$0xf]
  %v35 = vld [vmem:[%s0 + $0x78] sm:$0xff]
  %v36 = vld [vmem:[%s0 + $0x80] sm:$0xf]
  %v37 = vld [vmem:[%s0 + $0x84] sm:$0xff]
  %v38 = vld [vmem:[%s0 + $0x8c] sm:$0xf]
  %v39 = vld [vmem:[%s0 + $0x90] sm:$0xff]
  %v40 = vld [vmem:[%s0 + $0x98] sm:$0xf]
  %v41 = vld [vmem:[%s0 + $0x9c] sm:$0xff]
  %v42 = vld [vmem:[%s0 + $0xa4] sm:$0xf]
  %v43 = vld [vmem:[%s0 + $0xa8] sm:$0xff]
  %v44 = vld [vmem:[%s0 + $0xb0] sm:$0xf]
  %v45 = vld [vmem:[%s0 + $0xb4] sm:$0xff]
  %v46 = vld [vmem:[%s0 + $0xbc] sm:$0xf]
  %v47 = vld [vmem:[%s0 + $0xc0] sm:$0xff]
  %v48 = vld [vmem:[%s0 + $0xc8] sm:$0xf]
  %v49 = vld [vmem:[%s0 + $0xcc] sm:$0xff]
  %v50 = vld [vmem:[%s0 + $0xd4] sm:$0xf]
  %v51 = vld [vmem:[%s0 + $0xd8] sm:$0xff]
  %v52 = vld [vmem:[%s0 + $0xe0] sm:$0xf]
  %v53 = vld [vmem:[%s0 + $0xe4] sm:$0xff]
  %v54 = vld [vmem:[%s0 + $0xec] sm:$0xf]
  %v55 = vld [vmem:[%s0 + $0xf0] sm:$0xff]
  %v56 = vld [vmem:[%s0 + $0xf8] sm:$0xf]
  %v57 = vld [vmem:[%s0 + $0xfc] sm:$0xff]
  %v58 = vld [vmem:[%s0 + $0x104] sm:$0xf]
  %v59 = vld [vmem:[%s0 + $0x108] sm:$0xff]
  %v60 = vld [vmem:[%s0 + $0x110] sm:$0xf]
  %v61 = vld [vmem:[%s0 + $0x114] sm:$0xff]
  %v62 = vld [vmem:[%s0 + $0x11c] sm:$0xf]
  %v63 = vld [vmem:[%s0 + $0x120] sm:$0xff]
  %v64 = vld [vmem:[%s0 + $0x128] sm:$0xf]
  %v65 = vld [vmem:[%s0 + $0x12c] sm:$0xff]
  %v66 = vld [vmem:[%s0 + $0x134] sm:$0xf]
  %v67 = vld [vmem:[%s0 + $0x138] sm:$0xff]
  %v68 = vld [vmem:[%s0 + $0x140] sm:$0xf]
  %v69 = vld [vmem:[%s0 + $0x144] sm:$0xff]
  %v70 = vld [vmem:[%s0 + $0x14c] sm:$0xf]
  %v71 = vld [vmem:[%s0 + $0x150] sm:$0xff]
  %v72 = vld [vmem:[%s0 + $0x158] sm:$0xf]
  %v73 = vld [vmem:[%s0 + $0x15c] sm:$0xff]
  %v74 = vld [vmem:[%s0 + $0x164] sm:$0xf]
  %v75 = vld [vmem:[%s0 + $0x168] sm:$0xff]
  %v76 = vld [vmem:[%s0 + $0x170] sm:$0xf]
  %v77 = vld [vmem:[%s0 + $0x174] sm:$0xff]
  %v78 = vld [vmem:[%s0 + $0x17c] sm:$0xf]
  %v79 = vld [vmem:[%s0 + $0x180] sm:$0xff]
  %v80 = vld [vmem:[%s0 + $0x188] sm:$0xf]
  %v81 = vld [vmem:[%s0 + $0x18c] sm:$0xff]
  %v82 = vld [vmem:[%s0 + $0x194] sm:$0xf]
  %v83 = vld [vmem:[%s0 + $0x198] sm:$0xff]
  %v84 = vld [vmem:[%s0 + $0x1a0] sm:$0xf]
  %v85 = vld [vmem:[%s0 + $0x1a4] sm:$0xff]
  %v86 = vld [vmem:[%s0 + $0x1ac] sm:$0xf]
  %v87 = vld [vmem:[%s0 + $0x1b0] sm:$0xff]
  %v88 = vld [vmem:[%s0 + $0x1b8] sm:$0xf]
  %v89 = vld [vmem:[%s0 + $0x1bc] sm:$0xff]
  %v90 = vld [vmem:[%s0 + $0x1c4] sm:$0xf]
  %v91 = vld [vmem:[%s0 + $0x1c8] sm:$0xff]
  %v92 = vld [vmem:[%s0 + $0x1d0] sm:$0xf]
  %v93 = vld [vmem:[%s0 + $0x1d4] sm:$0xff]
  %v94 = vld [vmem:[%s0 + $0x1dc] sm:$0xf]
  %v95 = vld [vmem:[%s0 + $0x1e0] sm:$0xff]
  %v96 = vld [vmem:[%s0 + $0x1e8] sm:$0xf]
  %v97 = vld [vmem:[%s0 + $0x1ec] sm:$0xff]
  %v98 = vld [vmem:[%s0 + $0x1f4] sm:$0xf]
  %v99 = vld [vmem:[%s0 + $0x1f8] sm:$0xff]
  %v100 = vld [vmem:[%s0 + $0x200] sm:$0xf]
  %v101 = vld [vmem:[%s0 + $0x204] sm:$0xff]
  %v102 = vld [vmem:[%s0 + $0x20c] sm:$0xf]
  %v103 = vld [vmem:[%s0 + $0x210] sm:$0xff]
  %v104 = vld [vmem:[%s0 + $0x218] sm:$0xf]
  %v105 = vld [vmem:[%s0 + $0x21c] sm:$0xff]
  %v106 = vld [vmem:[%s0 + $0x224] sm:$0xf]
  %v107 = vld [vmem:[%s0 + $0x228] sm:$0xff]
  %v108 = vld [vmem:[%s0 + $0x230] sm:$0xf]
  %v109 = vld [vmem:[%s0 + $0x234] sm:$0xff]
  %v110 = vld [vmem:[%s0 + $0x23c] sm:$0xf]
  %v111 = vld [vmem:[%s0 + $0x240] sm:$0xff]
  %v112 = vld [vmem:[%s0 + $0x248] sm:$0xf]
  %v113 = vld [vmem:[%s0 + $0x24c] sm:$0xff]
  %v114 = vld [vmem:[%s0 + $0x254] sm:$0xf]
  %v115 = vld [vmem:[%s0 + $0x258] sm:$0xff]
  %v116 = vld [vmem:[%s0 + $0x260] sm:$0xf]
  %v117 = vld [vmem:[%s0 + $0x264] sm:$0xff]
  %v118 = vld [vmem:[%s0 + $0x26c] sm:$0xf]
  %v119 = vld [vmem:[%s0 + $0x270] sm:$0xff]
  %v120 = vld [vmem:[%s0 + $0x278] sm:$0xf]
  %v121 = vld [vmem:[%s0 + $0x27c] sm:$0xff]
  %v122 = vld [vmem:[%s0 + $0x284] sm:$0xf]
  %v123 = vld [vmem:[%s0 + $0x288] sm:$0xff]
  %v124 = vld [vmem:[%s0 + $0x290] sm:$0xf]
  %v125 = vld [vmem:[%s0 + $0x294] sm:$0xff]
  %v126 = vld [vmem:[%s0 + $0x29c] sm:$0xf]
  %v127 = vld [vmem:[%s0 + $0x2a0] sm:$0xff]
  %v128 = vld [vmem:[%s0 + $0x2a8] sm:$0xf]
  %v129 = vld [vmem:[%s0 + $0x2ac] sm:$0xff]
  %v130 = vld [vmem:[%s0 + $0x2b4] sm:$0xf]
  %v131 = vld [vmem:[%s0 + $0x2b8] sm:$0xff]
  %v132 = vld [vmem:[%s0 + $0x2c0] sm:$0xf]
  %v133 = vld [vmem:[%s0 + $0x2c4] sm:$0xff]
  %v134 = vld [vmem:[%s0 + $0x2cc] sm:$0xf]
  %v135 = vld [vmem:[%s0 + $0x2d0] sm:$0xff]
  %v136 = vld [vmem:[%s0 + $0x2d8] sm:$0xf]
  %v137 = vld [vmem:[%s0 + $0x2dc] sm:$0xff]
  %v138 = vld [vmem:[%s0 + $0x2e4] sm:$0xf]
  %v139 = vld [vmem:[%s0 + $0x2e8] sm:$0xff]
  %v140 = vld [vmem:[%s0 + $0x2f0] sm:$0xf]
  %v141 = vld [vmem:[%s0 + $0x2f4] sm:$0xff]
  %v142 = vld [vmem:[%s0 + $0x2fc] sm:$0xf]
  %v143 = vld [vmem:[%s1] sm:$0xf]
  %v144 = vld [vmem:[%s1 + $0x4] sm:$0xf]
  %v145 = vld [vmem:[%s1 + $0x8] sm:$0xf]
  %v146 = vld [vmem:[%s1 + $0xc] sm:$0xf]
  %v147 = vld [vmem:[%s1 + $0x10] sm:$0xf]
  %v148 = vld [vmem:[%s1 + $0x14] sm:$0xf]
  %v149 = vld [vmem:[%s1 + $0x18] sm:$0xf]
  %v150 = vld [vmem:[%s1 + $0x1c] sm:$0xf]
  %v151 = vld [vmem:[%s1 + $0x20] sm:$0xf]
  %v152 = vld [vmem:[%s1 + $0x24] sm:$0xf]
  %v153 = vld [vmem:[%s1 + $0x28] sm:$0xf]
  %v154 = vld [vmem:[%s1 + $0x2c] sm:$0xf]
  %v155 = vld [vmem:[%s1 + $0x30] sm:$0xf]
  %v156 = vld [vmem:[%s1 + $0x34] sm:$0xf]
  %v157 = vld [vmem:[%s1 + $0x38] sm:$0xf]
  %v158 = vld [vmem:[%s1 + $0x3c] sm:$0xf]
  %v159 = vld [vmem:[%s1 + $0x40] sm:$0xf]
  %v160 = vld [vmem:[%s1 + $0x44] sm:$0xf]
  %v161 = vld [vmem:[%s1 + $0x48] sm:$0xf]
  %v162 = vld [vmem:[%s1 + $0x4c] sm:$0xf]
  %v163 = vld [vmem:[%s1 + $0x50] sm:$0xf]
  %v164 = vld [vmem:[%s1 + $0x54] sm:$0xf]
  %v165 = vld [vmem:[%s1 + $0x58] sm:$0xf]
  %v166 = vld [vmem:[%s1 + $0x5c] sm:$0xf]
  %v167 = vld [vmem:[%s1 + $0x60] sm:$0xf]
  %v168 = vld [vmem:[%s1 + $0x64] sm:$0xf]
  %v169 = vld [vmem:[%s1 + $0x68] sm:$0xf]
  %v170 = vld [vmem:[%s1 + $0x6c] sm:$0xf]
  %v171 = vld [vmem:[%s1 + $0x70] sm:$0xf]
  %v172 = vld [vmem:[%s1 + $0x74] sm:$0xf]
  %v173 = vld [vmem:[%s1 + $0x78] sm:$0xf]
  %v174 = vld [vmem:[%s1 + $0x7c] sm:$0xf]
  %v175 = vld [vmem:[%s1 + $0x80] sm:$0xf]
  %v176 = vld [vmem:[%s1 + $0x84] sm:$0xf]
  %v177 = vld [vmem:[%s1 + $0x88] sm:$0xf]
  %v178 = vld [vmem:[%s1 + $0x8c] sm:$0xf]
  %v179 = vld [vmem:[%s2] sm:$0x1]
  %v181 = vperm.slane %v179, 0
  %v311 = vunpack.c.l.b16 %v15
  %v312 = vunpack.c.h.b16 %v15
  %v313 = vunpack.c.l.b16 %v16
  %v314 = vunpack.c.l.b16 %v17
  %v315 = vunpack.c.h.b16 %v17
  %v316 = vunpack.c.l.b16 %v18
  %v317 = vunpack.c.l.b16 %v19
  %v318 = vunpack.c.h.b16 %v19
  %v319 = vunpack.c.l.b16 %v20
  %v320 = vunpack.c.l.b16 %v21
  %v321 = vunpack.c.h.b16 %v21
  %v322 = vunpack.c.l.b16 %v22
  %v323 = vunpack.c.l.b16 %v23
  %v324 = vunpack.c.h.b16 %v23
  %v325 = vunpack.c.l.b16 %v24
  %v326 = vunpack.c.l.b16 %v25
  %v327 = vunpack.c.h.b16 %v25
  %v328 = vunpack.c.l.b16 %v26
  %v329 = vunpack.c.l.b16 %v27
  %v330 = vunpack.c.h.b16 %v27
  %v331 = vunpack.c.l.b16 %v28
  %v332 = vunpack.c.l.b16 %v29
  %v333 = vunpack.c.h.b16 %v29
  %v334 = vunpack.c.l.b16 %v30
  %v335 = vunpack.c.l.b16 %v31
  %v336 = vunpack.c.h.b16 %v31
  %v337 = vunpack.c.l.b16 %v32
  %v338 = vunpack.c.l.b16 %v33
  %v339 = vunpack.c.h.b16 %v33
  %v340 = vunpack.c.l.b16 %v34
  %v341 = vunpack.c.l.b16 %v35
  %v342 = vunpack.c.h.b16 %v35
  %v343 = vunpack.c.l.b16 %v36
  %v344 = vunpack.c.l.b16 %v37
  %v345 = vunpack.c.h.b16 %v37
  %v346 = vunpack.c.l.b16 %v38
  %v347 = vunpack.c.l.b16 %v39
  %v348 = vunpack.c.h.b16 %v39
  %v349 = vunpack.c.l.b16 %v40
  %v350 = vunpack.c.l.b16 %v41
  %v351 = vunpack.c.h.b16 %v41
  %v352 = vunpack.c.l.b16 %v42
  %v353 = vunpack.c.l.b16 %v43
  %v354 = vunpack.c.h.b16 %v43
  %v355 = vunpack.c.l.b16 %v44
  %v356 = vunpack.c.l.b16 %v45
  %v357 = vunpack.c.h.b16 %v45
  %v358 = vunpack.c.l.b16 %v46
  %v359 = vunpack.c.l.b16 %v47
  %v360 = vunpack.c.h.b16 %v47
  %v361 = vunpack.c.l.b16 %v48
  %v362 = vunpack.c.l.b16 %v49
  %v363 = vunpack.c.h.b16 %v49
  %v364 = vunpack.c.l.b16 %v50
  %v365 = vunpack.c.l.b16 %v51
  %v366 = vunpack.c.h.b16 %v51
  %v367 = vunpack.c.l.b16 %v52
  %v368 = vunpack.c.l.b16 %v53
  %v369 = vunpack.c.h.b16 %v53
  %v370 = vunpack.c.l.b16 %v54
  %v371 = vunpack.c.l.b16 %v55
  %v372 = vunpack.c.h.b16 %v55
  %v373 = vunpack.c.l.b16 %v56
  %v374 = vunpack.c.l.b16 %v57
  %v375 = vunpack.c.h.b16 %v57
  %v376 = vunpack.c.l.b16 %v58
  %v377 = vunpack.c.l.b16 %v59
  %v378 = vunpack.c.h.b16 %v59
  %v379 = vunpack.c.l.b16 %v60
  %v380 = vunpack.c.l.b16 %v61
  %v381 = vunpack.c.h.b16 %v61
  %v382 = vunpack.c.l.b16 %v62
  %v383 = vunpack.c.l.b16 %v63
  %v384 = vunpack.c.h.b16 %v63
  %v385 = vunpack.c.l.b16 %v64
  %v386 = vunpack.c.l.b16 %v65
  %v387 = vunpack.c.h.b16 %v65
  %v388 = vunpack.c.l.b16 %v66
  %v389 = vunpack.c.l.b16 %v67
  %v390 = vunpack.c.h.b16 %v67
  %v391 = vunpack.c.l.b16 %v68
  %v392 = vunpack.c.l.b16 %v69
  %v393 = vunpack.c.h.b16 %v69
  %v394 = vunpack.c.l.b16 %v70
  %v395 = vunpack.c.l.b16 %v71
  %v396 = vunpack.c.h.b16 %v71
  %v397 = vunpack.c.l.b16 %v72
  %v398 = vunpack.c.l.b16 %v73
  %v399 = vunpack.c.h.b16 %v73
  %v400 = vunpack.c.l.b16 %v74
  %v401 = vunpack.c.l.b16 %v75
  %v402 = vunpack.c.h.b16 %v75
  %v403 = vunpack.c.l.b16 %v76
  %v404 = vunpack.c.l.b16 %v77
  %v405 = vunpack.c.h.b16 %v77
  %v406 = vunpack.c.l.b16 %v78
  %v407 = vunpack.c.l.b16 %v79
  %v408 = vunpack.c.h.b16 %v79
  %v409 = vunpack.c.l.b16 %v80
  %v410 = vunpack.c.l.b16 %v81
  %v411 = vunpack.c.h.b16 %v81
  %v412 = vunpack.c.l.b16 %v82
  %v413 = vunpack.c.l.b16 %v83
  %v414 = vunpack.c.h.b16 %v83
  %v415 = vunpack.c.l.b16 %v84
  %v416 = vunpack.c.l.b16 %v85
  %v417 = vunpack.c.h.b16 %v85
  %v418 = vunpack.c.l.b16 %v86
  %v419 = vunpack.c.l.b16 %v87
  %v420 = vunpack.c.h.b16 %v87
  %v421 = vunpack.c.l.b16 %v88
  %v422 = vunpack.c.l.b16 %v89
  %v423 = vunpack.c.h.b16 %v89
  %v424 = vunpack.c.l.b16 %v90
  %v425 = vunpack.c.l.b16 %v91
  %v426 = vunpack.c.h.b16 %v91
  %v427 = vunpack.c.l.b16 %v92
  %v428 = vunpack.c.l.b16 %v93
  %v429 = vunpack.c.h.b16 %v93
  %v430 = vunpack.c.l.b16 %v94
  %v431 = vunpack.c.l.b16 %v95
  %v432 = vunpack.c.h.b16 %v95
  %v433 = vunpack.c.l.b16 %v96
  %v434 = vunpack.c.l.b16 %v97
  %v435 = vunpack.c.h.b16 %v97
  %v436 = vunpack.c.l.b16 %v98
  %v437 = vunpack.c.l.b16 %v99
  %v438 = vunpack.c.h.b16 %v99
  %v439 = vunpack.c.l.b16 %v100
  %v440 = vunpack.c.l.b16 %v101
  %v441 = vunpack.c.h.b16 %v101
  %v442 = vunpack.c.l.b16 %v102
  %v443 = vunpack.c.l.b16 %v103
  %v444 = vunpack.c.h.b16 %v103
  %v445 = vunpack.c.l.b16 %v104
  %v446 = vunpack.c.l.b16 %v105
  %v447 = vunpack.c.h.b16 %v105
  %v448 = vunpack.c.l.b16 %v106
  %v449 = vunpack.c.l.b16 %v107
  %v450 = vunpack.c.h.b16 %v107
  %v451 = vunpack.c.l.b16 %v108
  %v452 = vunpack.c.l.b16 %v109
  %v453 = vunpack.c.h.b16 %v109
  %v454 = vunpack.c.l.b16 %v110
  %v455 = vunpack.c.l.b16 %v111
  %v456 = vunpack.c.h.b16 %v111
  %v457 = vunpack.c.l.b16 %v112
  %v458 = vunpack.c.l.b16 %v113
  %v459 = vunpack.c.h.b16 %v113
  %v460 = vunpack.c.l.b16 %v114
  %v461 = vunpack.c.l.b16 %v115
  %v462 = vunpack.c.h.b16 %v115
  %v463 = vunpack.c.l.b16 %v116
  %v464 = vunpack.c.l.b16 %v117
  %v465 = vunpack.c.h.b16 %v117
  %v466 = vunpack.c.l.b16 %v118
  %v467 = vunpack.c.l.b16 %v119
  %v468 = vunpack.c.h.b16 %v119
  %v469 = vunpack.c.l.b16 %v120
  %v470 = vunpack.c.l.b16 %v121
  %v471 = vunpack.c.h.b16 %v121
  %v472 = vunpack.c.l.b16 %v122
  %v473 = vunpack.c.l.b16 %v123
  %v474 = vunpack.c.h.b16 %v123
  %v475 = vunpack.c.l.b16 %v124
  %v476 = vunpack.c.l.b16 %v125
  %v477 = vunpack.c.h.b16 %v125
  %v478 = vunpack.c.l.b16 %v126
  %v479 = vunpack.c.l.b16 %v127
  %v480 = vunpack.c.h.b16 %v127
  %v481 = vunpack.c.l.b16 %v128
  %v482 = vunpack.c.l.b16 %v129
  %v483 = vunpack.c.h.b16 %v129
  %v484 = vunpack.c.l.b16 %v130
  %v485 = vunpack.c.l.b16 %v131
  %v486 = vunpack.c.h.b16 %v131
  %v487 = vunpack.c.l.b16 %v132
  %v488 = vunpack.c.l.b16 %v133
  %v489 = vunpack.c.h.b16 %v133
  %v490 = vunpack.c.l.b16 %v134
  %v491 = vunpack.c.l.b16 %v135
  %v492 = vunpack.c.h.b16 %v135
  %v493 = vunpack.c.l.b16 %v136
  %v494 = vunpack.c.l.b16 %v137
  %v495 = vunpack.c.h.b16 %v137
  %v496 = vunpack.c.l.b16 %v138
  %v497 = vunpack.c.l.b16 %v139
  %v498 = vunpack.c.h.b16 %v139
  %v499 = vunpack.c.l.b16 %v140
  %v500 = vunpack.c.l.b16 %v141
  %v501 = vunpack.c.h.b16 %v141
  %v502 = vunpack.c.l.b16 %v142
  %v503 = vpack.c.b16 %v314, %v311
  %v504 = vpack.c.b16 %v315, %v312
  %v505 = vpack.c.b16 %v316, %v313
  %v506 = vpack.c.b16 %v320, %v317
  %v507 = vpack.c.b16 %v321, %v318
  %v508 = vpack.c.b16 %v322, %v319
  %v509 = vpack.c.b16 %v326, %v323
  %v510 = vpack.c.b16 %v327, %v324
  %v511 = vpack.c.b16 %v328, %v325
  %v512 = vpack.c.b16 %v332, %v329
  %v513 = vpack.c.b16 %v333, %v330
  %v514 = vpack.c.b16 %v334, %v331
  %v515 = vpack.c.b16 %v338, %v335
  %v516 = vpack.c.b16 %v339, %v336
  %v517 = vpack.c.b16 %v340, %v337
  %v518 = vpack.c.b16 %v344, %v341
  %v519 = vpack.c.b16 %v345, %v342
  %v520 = vpack.c.b16 %v346, %v343
  %v521 = vpack.c.b16 %v350, %v347
  %v522 = vpack.c.b16 %v351, %v348
  %v523 = vpack.c.b16 %v352, %v349
  %v524 = vpack.c.b16 %v356, %v353
  %v525 = vpack.c.b16 %v357, %v354
  %v526 = vpack.c.b16 %v358, %v355
  %v527 = vpack.c.b16 %v362, %v359
  %v528 = vpack.c.b16 %v363, %v360
  %v529 = vpack.c.b16 %v364, %v361
  %v530 = vpack.c.b16 %v368, %v365
  %v531 = vpack.c.b16 %v369, %v366
  %v532 = vpack.c.b16 %v370, %v367
  %v533 = vpack.c.b16 %v374, %v371
  %v534 = vpack.c.b16 %v375, %v372
  %v535 = vpack.c.b16 %v376, %v373
  %v536 = vpack.c.b16 %v380, %v377
  %v537 = vpack.c.b16 %v381, %v378
  %v538 = vpack.c.b16 %v382, %v379
  %v539 = vpack.c.b16 %v386, %v383
  %v540 = vpack.c.b16 %v387, %v384
  %v541 = vpack.c.b16 %v388, %v385
  %v542 = vpack.c.b16 %v392, %v389
  %v543 = vpack.c.b16 %v393, %v390
  %v544 = vpack.c.b16 %v394, %v391
  %v545 = vpack.c.b16 %v398, %v395
  %v546 = vpack.c.b16 %v399, %v396
  %v547 = vpack.c.b16 %v400, %v397
  %v548 = vpack.c.b16 %v404, %v401
  %v549 = vpack.c.b16 %v405, %v402
  %v550 = vpack.c.b16 %v406, %v403
  %v551 = vpack.c.b16 %v410, %v407
  %v552 = vpack.c.b16 %v411, %v408
  %v553 = vpack.c.b16 %v412, %v409
  %v554 = vpack.c.b16 %v416, %v413
  %v555 = vpack.c.b16 %v417, %v414
  %v556 = vpack.c.b16 %v418, %v415
  %v557 = vpack.c.b16 %v422, %v419
  %v558 = vpack.c.b16 %v423, %v420
  %v559 = vpack.c.b16 %v424, %v421
  %v560 = vpack.c.b16 %v428, %v425
  %v561 = vpack.c.b16 %v429, %v426
  %v562 = vpack.c.b16 %v430, %v427
  %v563 = vpack.c.b16 %v434, %v431
  %v564 = vpack.c.b16 %v435, %v432
  %v565 = vpack.c.b16 %v436, %v433
  %v566 = vpack.c.b16 %v440, %v437
  %v567 = vpack.c.b16 %v441, %v438
  %v568 = vpack.c.b16 %v442, %v439
  %v569 = vpack.c.b16 %v446, %v443
  %v570 = vpack.c.b16 %v447, %v444
  %v571 = vpack.c.b16 %v448, %v445
  %v572 = vpack.c.b16 %v452, %v449
  %v573 = vpack.c.b16 %v453, %v450
  %v574 = vpack.c.b16 %v454, %v451
  %v575 = vpack.c.b16 %v458, %v455
  %v576 = vpack.c.b16 %v459, %v456
  %v577 = vpack.c.b16 %v460, %v457
  %v578 = vpack.c.b16 %v464, %v461
  %v579 = vpack.c.b16 %v465, %v462
  %v580 = vpack.c.b16 %v466, %v463
  %v581 = vpack.c.b16 %v470, %v467
  %v582 = vpack.c.b16 %v471, %v468
  %v583 = vpack.c.b16 %v472, %v469
  %v584 = vpack.c.b16 %v476, %v473
  %v585 = vpack.c.b16 %v477, %v474
  %v586 = vpack.c.b16 %v478, %v475
  %v587 = vpack.c.b16 %v482, %v479
  %v588 = vpack.c.b16 %v483, %v480
  %v589 = vpack.c.b16 %v484, %v481
  %v590 = vpack.c.b16 %v488, %v485
  %v591 = vpack.c.b16 %v489, %v486
  %v592 = vpack.c.b16 %v490, %v487
  %v593 = vpack.c.b16 %v494, %v491
  %v594 = vpack.c.b16 %v495, %v492
  %v595 = vpack.c.b16 %v496, %v493
  %v596 = vpack.c.b16 %v500, %v497
  %v597 = vpack.c.b16 %v501, %v498
  %v598 = vpack.c.b16 %v502, %v499
  %v699 = vunpack.c.l.b16 %v143
  %v700 = vunpack.c.l.b16 %v144
  %v701 = vunpack.c.l.b16 %v145
  %v702 = vunpack.c.l.b16 %v146
  %v703 = vunpack.c.l.b16 %v147
  %v704 = vunpack.c.l.b16 %v148
  %v705 = vunpack.c.l.b16 %v149
  %v706 = vunpack.c.l.b16 %v150
  %v707 = vunpack.c.l.b16 %v151
  %v708 = vunpack.c.l.b16 %v152
  %v709 = vunpack.c.l.b16 %v153
  %v710 = vunpack.c.l.b16 %v154
  %v711 = vunpack.c.l.b16 %v155
  %v712 = vunpack.c.l.b16 %v156
  %v713 = vunpack.c.l.b16 %v157
  %v714 = vunpack.c.l.b16 %v158
  %v715 = vunpack.c.l.b16 %v159
  %v716 = vunpack.c.l.b16 %v160
  %v717 = vunpack.c.l.b16 %v161
  %v718 = vunpack.c.l.b16 %v162
  %v719 = vunpack.c.l.b16 %v163
  %v720 = vunpack.c.l.b16 %v164
  %v721 = vunpack.c.l.b16 %v165
  %v722 = vunpack.c.l.b16 %v166
  %v723 = vunpack.c.l.b16 %v167
  %v724 = vunpack.c.l.b16 %v168
  %v725 = vunpack.c.l.b16 %v169
  %v726 = vunpack.c.l.b16 %v170
  %v727 = vunpack.c.l.b16 %v171
  %v728 = vunpack.c.l.b16 %v172
  %v729 = vunpack.c.l.b16 %v173
  %v730 = vunpack.c.l.b16 %v174
  %v731 = vunpack.c.l.b16 %v175
  %v732 = vunpack.c.l.b16 %v176
  %v733 = vunpack.c.l.b16 %v177
  %v734 = vunpack.c.l.b16 %v178
  %v735 = vpack.c.b16 %v700, %v699
  %v736 = vpack.c.b16 %v702, %v701
  %v737 = vpack.c.b16 %v704, %v703
  %v738 = vpack.c.b16 %v706, %v705
  %v739 = vpack.c.b16 %v708, %v707
  %v740 = vpack.c.b16 %v710, %v709
  %v741 = vpack.c.b16 %v712, %v711
  %v742 = vpack.c.b16 %v714, %v713
  %v743 = vpack.c.b16 %v716, %v715
  %v744 = vpack.c.b16 %v718, %v717
  %v745 = vpack.c.b16 %v720, %v719
  %v746 = vpack.c.b16 %v722, %v721
  %v747 = vpack.c.b16 %v724, %v723
  %v748 = vpack.c.b16 %v726, %v725
  %v749 = vpack.c.b16 %v728, %v727
  %v750 = vpack.c.b16 %v730, %v729
  %v751 = vpack.c.b16 %v732, %v731
  %v752 = vpack.c.b16 %v734, %v733
  %vm771 = vcmask 261120
  %v773 = vsel %vm771, %v505, 0
  %v776 = vsel %vm771, %v508, 0
  %v779 = vsel %vm771, %v511, 0
  %v782 = vsel %vm771, %v514, 0
  %v785 = vsel %vm771, %v517, 0
  %v788 = vsel %vm771, %v520, 0
  %v791 = vsel %vm771, %v523, 0
  %v794 = vsel %vm771, %v526, 0
  %v797 = vsel %vm771, %v529, 0
  %v800 = vsel %vm771, %v532, 0
  %v803 = vsel %vm771, %v535, 0
  %v806 = vsel %vm771, %v538, 0
  %v809 = vsel %vm771, %v541, 0
  %v812 = vsel %vm771, %v544, 0
  %v815 = vsel %vm771, %v547, 0
  %v818 = vsel %vm771, %v550, 0
  %v821 = vsel %vm771, %v553, 0
  %v824 = vsel %vm771, %v556, 0
  %v827 = vsel %vm771, %v559, 0
  %v830 = vsel %vm771, %v562, 0
  %v833 = vsel %vm771, %v565, 0
  %v836 = vsel %vm771, %v568, 0
  %v839 = vsel %vm771, %v571, 0
  %v842 = vsel %vm771, %v574, 0
  %v845 = vsel %vm771, %v577, 0
  %v848 = vsel %vm771, %v580, 0
  %v851 = vsel %vm771, %v583, 0
  %v854 = vsel %vm771, %v586, 0
  %v857 = vsel %vm771, %v589, 0
  %v860 = vsel %vm771, %v592, 0
  %v863 = vsel %vm771, %v595, 0
  %v866 = vsel %vm771, %v598, 0
  %868 = vmatpush.bf16.msra.mxu0 %v742
  %869 = vmatpush.bf16.msra.mxu0 %v741
  %870 = vmatpush.bf16.msra.mxu0 %v740
  %871 = vmatpush.bf16.msra.mxu0 %v739
  %872 = vmatpush.bf16.msra.mxu0 %v738
  %873 = vmatpush.bf16.msra.mxu0 %v737
  %874 = vmatpush.bf16.msra.mxu0 %v736
  %875 = vmatpush.bf16.msra.mxu0 %v735
  %876 = vmatmul.bf16.gmra.mxu0 %v503
  %v877 = vpop.f32.mrf.mxu0
  %v878 = vadd.f32 %v181, %v877
  %v879 = vpop.f32.mrf.mxu0
  %v880 = vadd.f32 %v181, %v879
  %881 = vmatmul.bf16.gmra.mxu0 %v506
  %v882 = vpop.f32.mrf.mxu0
  %v883 = vadd.f32 %v181, %v882
  %v884 = vpop.f32.mrf.mxu0
  %v885 = vadd.f32 %v181, %v884
  %886 = vmatmul.bf16.gmra.mxu0 %v509
  %v887 = vpop.f32.mrf.mxu0
  %v888 = vadd.f32 %v181, %v887
  %v889 = vpop.f32.mrf.mxu0
  %v890 = vadd.f32 %v181, %v889
  %891 = vmatmul.bf16.gmra.mxu0 %v512
  %v892 = vpop.f32.mrf.mxu0
  %v893 = vadd.f32 %v181, %v892
  %v894 = vpop.f32.mrf.mxu0
  %v895 = vadd.f32 %v181, %v894
  %896 = vmatmul.bf16.gmra.mxu0 %v515
  %v897 = vpop.f32.mrf.mxu0
  %v898 = vadd.f32 %v181, %v897
  %v899 = vpop.f32.mrf.mxu0
  %v900 = vadd.f32 %v181, %v899
  %901 = vmatmul.bf16.gmra.mxu0 %v518
  %v902 = vpop.f32.mrf.mxu0
  %v903 = vadd.f32 %v181, %v902
  %v904 = vpop.f32.mrf.mxu0
  %v905 = vadd.f32 %v181, %v904
  %906 = vmatmul.bf16.gmra.mxu0 %v521
  %v907 = vpop.f32.mrf.mxu0
  %v908 = vadd.f32 %v181, %v907
  %v909 = vpop.f32.mrf.mxu0
  %v910 = vadd.f32 %v181, %v909
  %911 = vmatmul.bf16.gmra.mxu0 %v524
  %v912 = vpop.f32.mrf.mxu0
  %v913 = vadd.f32 %v181, %v912
  %v914 = vpop.f32.mrf.mxu0
  %v915 = vadd.f32 %v181, %v914
  %916 = vmatmul.bf16.gmra.mxu0 %v527
  %v917 = vpop.f32.mrf.mxu0
  %v918 = vadd.f32 %v181, %v917
  %v919 = vpop.f32.mrf.mxu0
  %v920 = vadd.f32 %v181, %v919
  %921 = vmatmul.bf16.gmra.mxu0 %v530
  %v922 = vpop.f32.mrf.mxu0
  %v923 = vadd.f32 %v181, %v922
  %v924 = vpop.f32.mrf.mxu0
  %v925 = vadd.f32 %v181, %v924
  %926 = vmatmul.bf16.gmra.mxu0 %v533
  %v927 = vpop.f32.mrf.mxu0
  %v928 = vadd.f32 %v181, %v927
  %v929 = vpop.f32.mrf.mxu0
  %v930 = vadd.f32 %v181, %v929
  %931 = vmatmul.bf16.gmra.mxu0 %v536
  %v932 = vpop.f32.mrf.mxu0
  %v933 = vadd.f32 %v181, %v932
  %v934 = vpop.f32.mrf.mxu0
  %v935 = vadd.f32 %v181, %v934
  %936 = vmatmul.bf16.gmra.mxu0 %v539
  %v937 = vpop.f32.mrf.mxu0
  %v938 = vadd.f32 %v181, %v937
  %v939 = vpop.f32.mrf.mxu0
  %v940 = vadd.f32 %v181, %v939
  %941 = vmatmul.bf16.gmra.mxu0 %v542
  %v942 = vpop.f32.mrf.mxu0
  %v943 = vadd.f32 %v181, %v942
  %v944 = vpop.f32.mrf.mxu0
  %v945 = vadd.f32 %v181, %v944
  %946 = vmatmul.bf16.gmra.mxu0 %v545
  %v947 = vpop.f32.mrf.mxu0
  %v948 = vadd.f32 %v181, %v947
  %v949 = vpop.f32.mrf.mxu0
  %v950 = vadd.f32 %v181, %v949
  %951 = vmatmul.bf16.gmra.mxu0 %v548
  %v952 = vpop.f32.mrf.mxu0
  %v953 = vadd.f32 %v181, %v952
  %v954 = vpop.f32.mrf.mxu0
  %v955 = vadd.f32 %v181, %v954
  %956 = vmatmul.bf16.gmra.mxu0 %v551
  %v957 = vpop.f32.mrf.mxu0
  %v958 = vadd.f32 %v181, %v957
  %v959 = vpop.f32.mrf.mxu0
  %v960 = vadd.f32 %v181, %v959
  %961 = vmatmul.bf16.gmra.mxu0 %v554
  %v962 = vpop.f32.mrf.mxu0
  %v963 = vadd.f32 %v181, %v962
  %v964 = vpop.f32.mrf.mxu0
  %v965 = vadd.f32 %v181, %v964
  %966 = vmatmul.bf16.gmra.mxu0 %v557
  %v967 = vpop.f32.mrf.mxu0
  %v968 = vadd.f32 %v181, %v967
  %v969 = vpop.f32.mrf.mxu0
  %v970 = vadd.f32 %v181, %v969
  %971 = vmatmul.bf16.gmra.mxu0 %v560
  %v972 = vpop.f32.mrf.mxu0
  %v973 = vadd.f32 %v181, %v972
  %v974 = vpop.f32.mrf.mxu0
  %v975 = vadd.f32 %v181, %v974
  %976 = vmatmul.bf16.gmra.mxu0 %v563
  %v977 = vpop.f32.mrf.mxu0
  %v978 = vadd.f32 %v181, %v977
  %v979 = vpop.f32.mrf.mxu0
  %v980 = vadd.f32 %v181, %v979
  %981 = vmatmul.bf16.gmra.mxu0 %v566
  %v982 = vpop.f32.mrf.mxu0
  %v983 = vadd.f32 %v181, %v982
  %v984 = vpop.f32.mrf.mxu0
  %v985 = vadd.f32 %v181, %v984
  %986 = vmatmul.bf16.gmra.mxu0 %v569
  %v987 = vpop.f32.mrf.mxu0
  %v988 = vadd.f32 %v181, %v987
  %v989 = vpop.f32.mrf.mxu0
  %v990 = vadd.f32 %v181, %v989
  %991 = vmatmul.bf16.gmra.mxu0 %v572
  %v992 = vpop.f32.mrf.mxu0
  %v993 = vadd.f32 %v181, %v992
  %v994 = vpop.f32.mrf.mxu0
  %v995 = vadd.f32 %v181, %v994
  %996 = vmatmul.bf16.gmra.mxu0 %v575
  %v997 = vpop.f32.mrf.mxu0
  %v998 = vadd.f32 %v181, %v997
  %v999 = vpop.f32.mrf.mxu0
  %v1000 = vadd.f32 %v181, %v999
  %1001 = vmatmul.bf16.gmra.mxu0 %v578
  %v1002 = vpop.f32.mrf.mxu0
  %v1003 = vadd.f32 %v181, %v1002
  %v1004 = vpop.f32.mrf.mxu0
  %v1005 = vadd.f32 %v181, %v1004
  %1006 = vmatmul.bf16.gmra.mxu0 %v581
  %v1007 = vpop.f32.mrf.mxu0
  %v1008 = vadd.f32 %v181, %v1007
  %v1009 = vpop.f32.mrf.mxu0
  %v1010 = vadd.f32 %v181, %v1009
  %1011 = vmatmul.bf16.gmra.mxu0 %v584
  %v1012 = vpop.f32.mrf.mxu0
  %v1013 = vadd.f32 %v181, %v1012
  %v1014 = vpop.f32.mrf.mxu0
  %v1015 = vadd.f32 %v181, %v1014
  %1016 = vmatmul.bf16.gmra.mxu0 %v587
  %v1017 = vpop.f32.mrf.mxu0
  %v1018 = vadd.f32 %v181, %v1017
  %v1019 = vpop.f32.mrf.mxu0
  %v1020 = vadd.f32 %v181, %v1019
  %1021 = vmatmul.bf16.gmra.mxu0 %v590
  %v1022 = vpop.f32.mrf.mxu0
  %v1023 = vadd.f32 %v181, %v1022
  %v1024 = vpop.f32.mrf.mxu0
  %v1025 = vadd.f32 %v181, %v1024
  %1026 = vmatmul.bf16.gmra.mxu0 %v593
  %v1027 = vpop.f32.mrf.mxu0
  %v1028 = vadd.f32 %v181, %v1027
  %v1029 = vpop.f32.mrf.mxu0
  %v1030 = vadd.f32 %v181, %v1029
  %1031 = vmatmul.bf16.gmra.mxu0 %v596
  %v1032 = vpop.f32.mrf.mxu0
  %v1033 = vadd.f32 %v181, %v1032
  %v1034 = vpop.f32.mrf.mxu0
  %v1035 = vadd.f32 %v181, %v1034
  %1036 = vdwg.mxu0
  %1037 = vmatpush.bf16.msra.mxu0 %v750
  %1038 = vmatpush.bf16.msra.mxu0 %v749
  %1039 = vmatpush.bf16.msra.mxu0 %v748
  %1040 = vmatpush.bf16.msra.mxu0 %v747
  %1041 = vmatpush.bf16.msra.mxu0 %v746
  %1042 = vmatpush.bf16.msra.mxu0 %v745
  %1043 = vmatpush.bf16.msra.mxu0 %v744
  %1044 = vmatpush.bf16.msra.mxu0 %v743
  %1045 = vmatmul.bf16.gmra.mxu0 %v504
  %v1046 = vpop.f32.mrf.mxu0
  %v1047 = vadd.f32 %v878, %v1046
  %v1048 = vpop.f32.mrf.mxu0
  %v1049 = vadd.f32 %v880, %v1048
  %1050 = vmatmul.bf16.gmra.mxu0 %v507
  %v1051 = vpop.f32.mrf.mxu0
  %v1052 = vadd.f32 %v883, %v1051
  %v1053 = vpop.f32.mrf.mxu0
  %v1054 = vadd.f32 %v885, %v1053
  %1055 = vmatmul.bf16.gmra.mxu0 %v510
  %v1056 = vpop.f32.mrf.mxu0
  %v1057 = vadd.f32 %v888, %v1056
  %v1058 = vpop.f32.mrf.mxu0
  %v1059 = vadd.f32 %v890, %v1058
  %1060 = vmatmul.bf16.gmra.mxu0 %v513
  %v1061 = vpop.f32.mrf.mxu0
  %v1062 = vadd.f32 %v893, %v1061
  %v1063 = vpop.f32.mrf.mxu0
  %v1064 = vadd.f32 %v895, %v1063
  %1065 = vmatmul.bf16.gmra.mxu0 %v516
  %v1066 = vpop.f32.mrf.mxu0
  %v1067 = vadd.f32 %v898, %v1066
  %v1068 = vpop.f32.mrf.mxu0
  %v1069 = vadd.f32 %v900, %v1068
  %1070 = vmatmul.bf16.gmra.mxu0 %v519
  %v1071 = vpop.f32.mrf.mxu0
  %v1072 = vadd.f32 %v903, %v1071
  %v1073 = vpop.f32.mrf.mxu0
  %v1074 = vadd.f32 %v905, %v1073
  %1075 = vmatmul.bf16.gmra.mxu0 %v522
  %v1076 = vpop.f32.mrf.mxu0
  %v1077 = vadd.f32 %v908, %v1076
  %v1078 = vpop.f32.mrf.mxu0
  %v1079 = vadd.f32 %v910, %v1078
  %1080 = vmatmul.bf16.gmra.mxu0 %v525
  %v1081 = vpop.f32.mrf.mxu0
  %v1082 = vadd.f32 %v913, %v1081
  %v1083 = vpop.f32.mrf.mxu0
  %v1084 = vadd.f32 %v915, %v1083
  %1085 = vmatmul.bf16.gmra.mxu0 %v528
  %v1086 = vpop.f32.mrf.mxu0
  %v1087 = vadd.f32 %v918, %v1086
  %v1088 = vpop.f32.mrf.mxu0
  %v1089 = vadd.f32 %v920, %v1088
  %1090 = vmatmul.bf16.gmra.mxu0 %v531
  %v1091 = vpop.f32.mrf.mxu0
  %v1092 = vadd.f32 %v923, %v1091
  %v1093 = vpop.f32.mrf.mxu0
  %v1094 = vadd.f32 %v925, %v1093
  %1095 = vmatmul.bf16.gmra.mxu0 %v534
  %v1096 = vpop.f32.mrf.mxu0
  %v1097 = vadd.f32 %v928, %v1096
  %v1098 = vpop.f32.mrf.mxu0
  %v1099 = vadd.f32 %v930, %v1098
  %1100 = vmatmul.bf16.gmra.mxu0 %v537
  %v1101 = vpop.f32.mrf.mxu0
  %v1102 = vadd.f32 %v933, %v1101
  %v1103 = vpop.f32.mrf.mxu0
  %v1104 = vadd.f32 %v935, %v1103
  %1105 = vmatmul.bf16.gmra.mxu0 %v540
  %v1106 = vpop.f32.mrf.mxu0
  %v1107 = vadd.f32 %v938, %v1106
  %v1108 = vpop.f32.mrf.mxu0
  %v1109 = vadd.f32 %v940, %v1108
  %1110 = vmatmul.bf16.gmra.mxu0 %v543
  %v1111 = vpop.f32.mrf.mxu0
  %v1112 = vadd.f32 %v943, %v1111
  %v1113 = vpop.f32.mrf.mxu0
  %v1114 = vadd.f32 %v945, %v1113
  %1115 = vmatmul.bf16.gmra.mxu0 %v546
  %v1116 = vpop.f32.mrf.mxu0
  %v1117 = vadd.f32 %v948, %v1116
  %v1118 = vpop.f32.mrf.mxu0
  %v1119 = vadd.f32 %v950, %v1118
  %1120 = vmatmul.bf16.gmra.mxu0 %v549
  %v1121 = vpop.f32.mrf.mxu0
  %v1122 = vadd.f32 %v953, %v1121
  %v1123 = vpop.f32.mrf.mxu0
  %v1124 = vadd.f32 %v955, %v1123
  %1125 = vmatmul.bf16.gmra.mxu0 %v552
  %v1126 = vpop.f32.mrf.mxu0
  %v1127 = vadd.f32 %v958, %v1126
  %v1128 = vpop.f32.mrf.mxu0
  %v1129 = vadd.f32 %v960, %v1128
  %1130 = vmatmul.bf16.gmra.mxu0 %v555
  %v1131 = vpop.f32.mrf.mxu0
  %v1132 = vadd.f32 %v963, %v1131
  %v1133 = vpop.f32.mrf.mxu0
  %v1134 = vadd.f32 %v965, %v1133
  %1135 = vmatmul.bf16.gmra.mxu0 %v558
  %v1136 = vpop.f32.mrf.mxu0
  %v1137 = vadd.f32 %v968, %v1136
  %v1138 = vpop.f32.mrf.mxu0
  %v1139 = vadd.f32 %v970, %v1138
  %1140 = vmatmul.bf16.gmra.mxu0 %v561
  %v1141 = vpop.f32.mrf.mxu0
  %v1142 = vadd.f32 %v973, %v1141
  %v1143 = vpop.f32.mrf.mxu0
  %v1144 = vadd.f32 %v975, %v1143
  %1145 = vmatmul.bf16.gmra.mxu0 %v564
  %v1146 = vpop.f32.mrf.mxu0
  %v1147 = vadd.f32 %v978, %v1146
  %v1148 = vpop.f32.mrf.mxu0
  %v1149 = vadd.f32 %v980, %v1148
  %1150 = vmatmul.bf16.gmra.mxu0 %v567
  %v1151 = vpop.f32.mrf.mxu0
  %v1152 = vadd.f32 %v983, %v1151
  %v1153 = vpop.f32.mrf.mxu0
  %v1154 = vadd.f32 %v985, %v1153
  %1155 = vmatmul.bf16.gmra.mxu0 %v570
  %v1156 = vpop.f32.mrf.mxu0
  %v1157 = vadd.f32 %v988, %v1156
  %v1158 = vpop.f32.mrf.mxu0
  %v1159 = vadd.f32 %v990, %v1158
  %1160 = vmatmul.bf16.gmra.mxu0 %v573
  %v1161 = vpop.f32.mrf.mxu0
  %v1162 = vadd.f32 %v993, %v1161
  %v1163 = vpop.f32.mrf.mxu0
  %v1164 = vadd.f32 %v995, %v1163
  %1165 = vmatmul.bf16.gmra.mxu0 %v576
  %v1166 = vpop.f32.mrf.mxu0
  %v1167 = vadd.f32 %v998, %v1166
  %v1168 = vpop.f32.mrf.mxu0
  %v1169 = vadd.f32 %v1000, %v1168
  %1170 = vmatmul.bf16.gmra.mxu0 %v579
  %v1171 = vpop.f32.mrf.mxu0
  %v1172 = vadd.f32 %v1003, %v1171
  %v1173 = vpop.f32.mrf.mxu0
  %v1174 = vadd.f32 %v1005, %v1173
  %1175 = vmatmul.bf16.gmra.mxu0 %v582
  %v1176 = vpop.f32.mrf.mxu0
  %v1177 = vadd.f32 %v1008, %v1176
  %v1178 = vpop.f32.mrf.mxu0
  %v1179 = vadd.f32 %v1010, %v1178
  %1180 = vmatmul.bf16.gmra.mxu0 %v585
  %v1181 = vpop.f32.mrf.mxu0
  %v1182 = vadd.f32 %v1013, %v1181
  %v1183 = vpop.f32.mrf.mxu0
  %v1184 = vadd.f32 %v1015, %v1183
  %1185 = vmatmul.bf16.gmra.mxu0 %v588
  %v1186 = vpop.f32.mrf.mxu0
  %v1187 = vadd.f32 %v1018, %v1186
  %v1188 = vpop.f32.mrf.mxu0
  %v1189 = vadd.f32 %v1020, %v1188
  %1190 = vmatmul.bf16.gmra.mxu0 %v591
  %v1191 = vpop.f32.mrf.mxu0
  %v1192 = vadd.f32 %v1023, %v1191
  %v1193 = vpop.f32.mrf.mxu0
  %v1194 = vadd.f32 %v1025, %v1193
  %1195 = vmatmul.bf16.gmra.mxu0 %v594
  %v1196 = vpop.f32.mrf.mxu0
  %v1197 = vadd.f32 %v1028, %v1196
  %v1198 = vpop.f32.mrf.mxu0
  %v1199 = vadd.f32 %v1030, %v1198
  %1200 = vmatmul.bf16.gmra.mxu0 %v597
  %v1201 = vpop.f32.mrf.mxu0
  %v1202 = vadd.f32 %v1033, %v1201
  %v1203 = vpop.f32.mrf.mxu0
  %v1204 = vadd.f32 %v1035, %v1203
  %1205 = vdwg.mxu0
  %1206 = vmatpush.bf16.msra.mxu0 0
  %1207 = vmatpush.bf16.msra.mxu0 0
  %1208 = vmatpush.bf16.msra.mxu0 0
  %1209 = vmatpush.bf16.msra.mxu0 0
  %1210 = vmatpush.bf16.msra.mxu0 0
  %1211 = vmatpush.bf16.msra.mxu0 0
  %1212 = vmatpush.bf16.msra.mxu0 %v752
  %1213 = vmatpush.bf16.msra.mxu0 %v751
  %1214 = vmatmul.bf16.gmra.mxu0 %v773
  %v1215 = vpop.f32.mrf.mxu0
  %v1216 = vadd.f32 %v1047, %v1215
  %v1217 = vpop.f32.mrf.mxu0
  %v1218 = vadd.f32 %v1049, %v1217
  %1219 = vmatmul.bf16.gmra.mxu0 %v776
  %v1220 = vpop.f32.mrf.mxu0
  %v1221 = vadd.f32 %v1052, %v1220
  %v1222 = vpop.f32.mrf.mxu0
  %v1223 = vadd.f32 %v1054, %v1222
  %1224 = vmatmul.bf16.gmra.mxu0 %v779
  %v1225 = vpop.f32.mrf.mxu0
  %v1226 = vadd.f32 %v1057, %v1225
  %v1227 = vpop.f32.mrf.mxu0
  %v1228 = vadd.f32 %v1059, %v1227
  %1229 = vmatmul.bf16.gmra.mxu0 %v782
  %v1230 = vpop.f32.mrf.mxu0
  %v1231 = vadd.f32 %v1062, %v1230
  %v1232 = vpop.f32.mrf.mxu0
  %v1233 = vadd.f32 %v1064, %v1232
  %1234 = vmatmul.bf16.gmra.mxu0 %v785
  %v1235 = vpop.f32.mrf.mxu0
  %v1236 = vadd.f32 %v1067, %v1235
  %v1237 = vpop.f32.mrf.mxu0
  %v1238 = vadd.f32 %v1069, %v1237
  %1239 = vmatmul.bf16.gmra.mxu0 %v788
  %v1240 = vpop.f32.mrf.mxu0
  %v1241 = vadd.f32 %v1072, %v1240
  %v1242 = vpop.f32.mrf.mxu0
  %v1243 = vadd.f32 %v1074, %v1242
  %1244 = vmatmul.bf16.gmra.mxu0 %v791
  %v1245 = vpop.f32.mrf.mxu0
  %v1246 = vadd.f32 %v1077, %v1245
  %v1247 = vpop.f32.mrf.mxu0
  %v1248 = vadd.f32 %v1079, %v1247
  %1249 = vmatmul.bf16.gmra.mxu0 %v794
  %v1250 = vpop.f32.mrf.mxu0
  %v1251 = vadd.f32 %v1082, %v1250
  %v1252 = vpop.f32.mrf.mxu0
  %v1253 = vadd.f32 %v1084, %v1252
  %1254 = vmatmul.bf16.gmra.mxu0 %v797
  %v1255 = vpop.f32.mrf.mxu0
  %v1256 = vadd.f32 %v1087, %v1255
  %v1257 = vpop.f32.mrf.mxu0
  %v1258 = vadd.f32 %v1089, %v1257
  %1259 = vmatmul.bf16.gmra.mxu0 %v800
  %v1260 = vpop.f32.mrf.mxu0
  %v1261 = vadd.f32 %v1092, %v1260
  %v1262 = vpop.f32.mrf.mxu0
  %v1263 = vadd.f32 %v1094, %v1262
  %1264 = vmatmul.bf16.gmra.mxu0 %v803
  %v1265 = vpop.f32.mrf.mxu0
  %v1266 = vadd.f32 %v1097, %v1265
  %v1267 = vpop.f32.mrf.mxu0
  %v1268 = vadd.f32 %v1099, %v1267
  %1269 = vmatmul.bf16.gmra.mxu0 %v806
  %v1270 = vpop.f32.mrf.mxu0
  %v1271 = vadd.f32 %v1102, %v1270
  %v1272 = vpop.f32.mrf.mxu0
  %v1273 = vadd.f32 %v1104, %v1272
  %1274 = vmatmul.bf16.gmra.mxu0 %v809
  %v1275 = vpop.f32.mrf.mxu0
  %v1276 = vadd.f32 %v1107, %v1275
  %v1277 = vpop.f32.mrf.mxu0
  %v1278 = vadd.f32 %v1109, %v1277
  %1279 = vmatmul.bf16.gmra.mxu0 %v812
  %v1280 = vpop.f32.mrf.mxu0
  %v1281 = vadd.f32 %v1112, %v1280
  %v1282 = vpop.f32.mrf.mxu0
  %v1283 = vadd.f32 %v1114, %v1282
  %1284 = vmatmul.bf16.gmra.mxu0 %v815
  %v1285 = vpop.f32.mrf.mxu0
  %v1286 = vadd.f32 %v1117, %v1285
  %v1287 = vpop.f32.mrf.mxu0
  %v1288 = vadd.f32 %v1119, %v1287
  %1289 = vmatmul.bf16.gmra.mxu0 %v818
  %v1290 = vpop.f32.mrf.mxu0
  %v1291 = vadd.f32 %v1122, %v1290
  %v1292 = vpop.f32.mrf.mxu0
  %v1293 = vadd.f32 %v1124, %v1292
  %1294 = vmatmul.bf16.gmra.mxu0 %v821
  %v1295 = vpop.f32.mrf.mxu0
  %v1296 = vadd.f32 %v1127, %v1295
  %v1297 = vpop.f32.mrf.mxu0
  %v1298 = vadd.f32 %v1129, %v1297
  %1299 = vmatmul.bf16.gmra.mxu0 %v824
  %v1300 = vpop.f32.mrf.mxu0
  %v1301 = vadd.f32 %v1132, %v1300
  %v1302 = vpop.f32.mrf.mxu0
  %v1303 = vadd.f32 %v1134, %v1302
  %1304 = vmatmul.bf16.gmra.mxu0 %v827
  %v1305 = vpop.f32.mrf.mxu0
  %v1306 = vadd.f32 %v1137, %v1305
  %v1307 = vpop.f32.mrf.mxu0
  %v1308 = vadd.f32 %v1139, %v1307
  %1309 = vmatmul.bf16.gmra.mxu0 %v830
  %v1310 = vpop.f32.mrf.mxu0
  %v1311 = vadd.f32 %v1142, %v1310
  %v1312 = vpop.f32.mrf.mxu0
  %v1313 = vadd.f32 %v1144, %v1312
  %1314 = vmatmul.bf16.gmra.mxu0 %v833
  %v1315 = vpop.f32.mrf.mxu0
  %v1316 = vadd.f32 %v1147, %v1315
  %v1317 = vpop.f32.mrf.mxu0
  %v1318 = vadd.f32 %v1149, %v1317
  %1319 = vmatmul.bf16.gmra.mxu0 %v836
  %v1320 = vpop.f32.mrf.mxu0
  %v1321 = vadd.f32 %v1152, %v1320
  %v1322 = vpop.f32.mrf.mxu0
  %v1323 = vadd.f32 %v1154, %v1322
  %1324 = vmatmul.bf16.gmra.mxu0 %v839
  %v1325 = vpop.f32.mrf.mxu0
  %v1326 = vadd.f32 %v1157, %v1325
  %v1327 = vpop.f32.mrf.mxu0
  %v1328 = vadd.f32 %v1159, %v1327
  %1329 = vmatmul.bf16.gmra.mxu0 %v842
  %v1330 = vpop.f32.mrf.mxu0
  %v1331 = vadd.f32 %v1162, %v1330
  %v1332 = vpop.f32.mrf.mxu0
  %v1333 = vadd.f32 %v1164, %v1332
  %1334 = vmatmul.bf16.gmra.mxu0 %v845
  %v1335 = vpop.f32.mrf.mxu0
  %v1336 = vadd.f32 %v1167, %v1335
  %v1337 = vpop.f32.mrf.mxu0
  %v1338 = vadd.f32 %v1169, %v1337
  %1339 = vmatmul.bf16.gmra.mxu0 %v848
  %v1340 = vpop.f32.mrf.mxu0
  %v1341 = vadd.f32 %v1172, %v1340
  %v1342 = vpop.f32.mrf.mxu0
  %v1343 = vadd.f32 %v1174, %v1342
  %1344 = vmatmul.bf16.gmra.mxu0 %v851
  %v1345 = vpop.f32.mrf.mxu0
  %v1346 = vadd.f32 %v1177, %v1345
  %v1347 = vpop.f32.mrf.mxu0
  %v1348 = vadd.f32 %v1179, %v1347
  %1349 = vmatmul.bf16.gmra.mxu0 %v854
  %v1350 = vpop.f32.mrf.mxu0
  %v1351 = vadd.f32 %v1182, %v1350
  %v1352 = vpop.f32.mrf.mxu0
  %v1353 = vadd.f32 %v1184, %v1352
  %1354 = vmatmul.bf16.gmra.mxu0 %v857
  %v1355 = vpop.f32.mrf.mxu0
  %v1356 = vadd.f32 %v1187, %v1355
  %v1357 = vpop.f32.mrf.mxu0
  %v1358 = vadd.f32 %v1189, %v1357
  %1359 = vmatmul.bf16.gmra.mxu0 %v860
  %v1360 = vpop.f32.mrf.mxu0
  %v1361 = vadd.f32 %v1192, %v1360
  %v1362 = vpop.f32.mrf.mxu0
  %v1363 = vadd.f32 %v1194, %v1362
  %1364 = vmatmul.bf16.gmra.mxu0 %v863
  %v1365 = vpop.f32.mrf.mxu0
  %v1366 = vadd.f32 %v1197, %v1365
  %v1367 = vpop.f32.mrf.mxu0
  %v1368 = vadd.f32 %v1199, %v1367
  %1369 = vmatmul.bf16.gmra.mxu0 %v866
  %v1370 = vpop.f32.mrf.mxu0
  %v1371 = vadd.f32 %v1202, %v1370
  %v1372 = vpop.f32.mrf.mxu0
  %v1373 = vadd.f32 %v1204, %v1372
  %1374 = vdwg.mxu0
  %v1375 = vsub.f32 0.0, %v1216
  %v1376 = vsub.f32 0.0, %v1218
  %v1377 = vsub.f32 0.0, %v1221
  %v1378 = vsub.f32 0.0, %v1223
  %v1379 = vsub.f32 0.0, %v1226
  %v1380 = vsub.f32 0.0, %v1228
  %v1381 = vsub.f32 0.0, %v1231
  %v1382 = vsub.f32 0.0, %v1233
  %v1383 = vsub.f32 0.0, %v1236
  %v1384 = vsub.f32 0.0, %v1238
  %v1385 = vsub.f32 0.0, %v1241
  %v1386 = vsub.f32 0.0, %v1243
  %v1387 = vsub.f32 0.0, %v1246
  %v1388 = vsub.f32 0.0, %v1248
  %v1389 = vsub.f32 0.0, %v1251
  %v1390 = vsub.f32 0.0, %v1253
  %v1391 = vsub.f32 0.0, %v1256
  %v1392 = vsub.f32 0.0, %v1258
  %v1393 = vsub.f32 0.0, %v1261
  %v1394 = vsub.f32 0.0, %v1263
  %v1395 = vsub.f32 0.0, %v1266
  %v1396 = vsub.f32 0.0, %v1268
  %v1397 = vsub.f32 0.0, %v1271
  %v1398 = vsub.f32 0.0, %v1273
  %v1399 = vsub.f32 0.0, %v1276
  %v1400 = vsub.f32 0.0, %v1278
  %v1401 = vsub.f32 0.0, %v1281
  %v1402 = vsub.f32 0.0, %v1283
  %v1403 = vsub.f32 0.0, %v1286
  %v1404 = vsub.f32 0.0, %v1288
  %v1405 = vsub.f32 0.0, %v1291
  %v1406 = vsub.f32 0.0, %v1293
  %v1407 = vsub.f32 0.0, %v1296
  %v1408 = vsub.f32 0.0, %v1298
  %v1409 = vsub.f32 0.0, %v1301
  %v1410 = vsub.f32 0.0, %v1303
  %v1411 = vsub.f32 0.0, %v1306
  %v1412 = vsub.f32 0.0, %v1308
  %v1413 = vsub.f32 0.0, %v1311
  %v1414 = vsub.f32 0.0, %v1313
  %v1415 = vsub.f32 0.0, %v1316
  %v1416 = vsub.f32 0.0, %v1318
  %v1417 = vsub.f32 0.0, %v1321
  %v1418 = vsub.f32 0.0, %v1323
  %v1419 = vsub.f32 0.0, %v1326
  %v1420 = vsub.f32 0.0, %v1328
  %v1421 = vsub.f32 0.0, %v1331
  %v1422 = vsub.f32 0.0, %v1333
  %v1423 = vsub.f32 0.0, %v1336
  %v1424 = vsub.f32 0.0, %v1338
  %v1425 = vsub.f32 0.0, %v1341
  %v1426 = vsub.f32 0.0, %v1343
  %v1427 = vsub.f32 0.0, %v1346
  %v1428 = vsub.f32 0.0, %v1348
  %v1429 = vsub.f32 0.0, %v1351
  %v1430 = vsub.f32 0.0, %v1353
  %v1431 = vsub.f32 0.0, %v1356
  %v1432 = vsub.f32 0.0, %v1358
  %v1433 = vsub.f32 0.0, %v1361
  %v1434 = vsub.f32 0.0, %v1363
  %v1435 = vsub.f32 0.0, %v1366
  %v1436 = vsub.f32 0.0, %v1368
  %v1437 = vsub.f32 0.0, %v1371
  %v1438 = vsub.f32 0.0, %v1373
  %v1439 = vmul.f32 %v1375, 1.442695
  %v1440 = vpow.pop %v1439
  %v1441 = vmul.f32 %v1376, 1.442695
  %v1442 = vpow.pop %v1441
  %v1443 = vmul.f32 %v1377, 1.442695
  %v1444 = vpow.pop %v1443
  %v1445 = vmul.f32 %v1378, 1.442695
  %v1446 = vpow.pop %v1445
  %v1447 = vmul.f32 %v1379, 1.442695
  %v1448 = vpow.pop %v1447
  %v1449 = vmul.f32 %v1380, 1.442695
  %v1450 = vpow.pop %v1449
  %v1451 = vmul.f32 %v1381, 1.442695
  %v1452 = vpow.pop %v1451
  %v1453 = vmul.f32 %v1382, 1.442695
  %v1454 = vpow.pop %v1453
  %v1455 = vmul.f32 %v1383, 1.442695
  %v1456 = vpow.pop %v1455
  %v1457 = vmul.f32 %v1384, 1.442695
  %v1458 = vpow.pop %v1457
  %v1459 = vmul.f32 %v1385, 1.442695
  %v1460 = vpow.pop %v1459
  %v1461 = vmul.f32 %v1386, 1.442695
  %v1462 = vpow.pop %v1461
  %v1463 = vmul.f32 %v1387, 1.442695
  %v1464 = vpow.pop %v1463
  %v1465 = vmul.f32 %v1388, 1.442695
  %v1466 = vpow.pop %v1465
  %v1467 = vmul.f32 %v1389, 1.442695
  %v1468 = vpow.pop %v1467
  %v1469 = vmul.f32 %v1390, 1.442695
  %v1470 = vpow.pop %v1469
  %v1471 = vmul.f32 %v1391, 1.442695
  %v1472 = vpow.pop %v1471
  %v1473 = vmul.f32 %v1392, 1.442695
  %v1474 = vpow.pop %v1473
  %v1475 = vmul.f32 %v1393, 1.442695
  %v1476 = vpow.pop %v1475
  %v1477 = vmul.f32 %v1394, 1.442695
  %v1478 = vpow.pop %v1477
  %v1479 = vmul.f32 %v1395, 1.442695
  %v1480 = vpow.pop %v1479
  %v1481 = vmul.f32 %v1396, 1.442695
  %v1482 = vpow.pop %v1481
  %v1483 = vmul.f32 %v1397, 1.442695
  %v1484 = vpow.pop %v1483
  %v1485 = vmul.f32 %v1398, 1.442695
  %v1486 = vpow.pop %v1485
  %v1487 = vmul.f32 %v1399, 1.442695
  %v1488 = vpow.pop %v1487
  %v1489 = vmul.f32 %v1400, 1.442695
  %v1490 = vpow.pop %v1489
  %v1491 = vmul.f32 %v1401, 1.442695
  %v1492 = vpow.pop %v1491
  %v1493 = vmul.f32 %v1402, 1.442695
  %v1494 = vpow.pop %v1493
  %v1495 = vmul.f32 %v1403, 1.442695
  %v1496 = vpow.pop %v1495
  %v1497 = vmul.f32 %v1404, 1.442695
  %v1498 = vpow.pop %v1497
  %v1499 = vmul.f32 %v1405, 1.442695
  %v1500 = vpow.pop %v1499
  %v1501 = vmul.f32 %v1406, 1.442695
  %v1502 = vpow.pop %v1501
  %v1503 = vmul.f32 %v1407, 1.442695
  %v1504 = vpow.pop %v1503
  %v1505 = vmul.f32 %v1408, 1.442695
  %v1506 = vpow.pop %v1505
  %v1507 = vmul.f32 %v1409, 1.442695
  %v1508 = vpow.pop %v1507
  %v1509 = vmul.f32 %v1410, 1.442695
  %v1510 = vpow.pop %v1509
  %v1511 = vmul.f32 %v1411, 1.442695
  %v1512 = vpow.pop %v1511
  %v1513 = vmul.f32 %v1412, 1.442695
  %v1514 = vpow.pop %v1513
  %v1515 = vmul.f32 %v1413, 1.442695
  %v1516 = vpow.pop %v1515
  %v1517 = vmul.f32 %v1414, 1.442695
  %v1518 = vpow.pop %v1517
  %v1519 = vmul.f32 %v1415, 1.442695
  %v1520 = vpow.pop %v1519
  %v1521 = vmul.f32 %v1416, 1.442695
  %v1522 = vpow.pop %v1521
  %v1523 = vmul.f32 %v1417, 1.442695
  %v1524 = vpow.pop %v1523
  %v1525 = vmul.f32 %v1418, 1.442695
  %v1526 = vpow.pop %v1525
  %v1527 = vmul.f32 %v1419, 1.442695
  %v1528 = vpow.pop %v1527
  %v1529 = vmul.f32 %v1420, 1.442695
  %v1530 = vpow.pop %v1529
  %v1531 = vmul.f32 %v1421, 1.442695
  %v1532 = vpow.pop %v1531
  %v1533 = vmul.f32 %v1422, 1.442695
  %v1534 = vpow.pop %v1533
  %v1535 = vmul.f32 %v1423, 1.442695
  %v1536 = vpow.pop %v1535
  %v1537 = vmul.f32 %v1424, 1.442695
  %v1538 = vpow.pop %v1537
  %v1539 = vmul.f32 %v1425, 1.442695
  %v1540 = vpow.pop %v1539
  %v1541 = vmul.f32 %v1426, 1.442695
  %v1542 = vpow.pop %v1541
  %v1543 = vmul.f32 %v1427, 1.442695
  %v1544 = vpow.pop %v1543
  %v1545 = vmul.f32 %v1428, 1.442695
  %v1546 = vpow.pop %v1545
  %v1547 = vmul.f32 %v1429, 1.442695
  %v1548 = vpow.pop %v1547
  %v1549 = vmul.f32 %v1430, 1.442695
  %v1550 = vpow.pop %v1549
  %v1551 = vmul.f32 %v1431, 1.442695
  %v1552 = vpow.pop %v1551
  %v1553 = vmul.f32 %v1432, 1.442695
  %v1554 = vpow.pop %v1553
  %v1555 = vmul.f32 %v1433, 1.442695
  %v1556 = vpow.pop %v1555
  %v1557 = vmul.f32 %v1434, 1.442695
  %v1558 = vpow.pop %v1557
  %v1559 = vmul.f32 %v1435, 1.442695
  %v1560 = vpow.pop %v1559
  %v1561 = vmul.f32 %v1436, 1.442695
  %v1562 = vpow.pop %v1561
  %v1563 = vmul.f32 %v1437, 1.442695
  %v1564 = vpow.pop %v1563
  %v1565 = vmul.f32 %v1438, 1.442695
  %v1566 = vpow.pop %v1565
  %v1567 = vadd.f32 %v1440, 1.0
  %v1568 = vadd.f32 %v1442, 1.0
  %v1569 = vadd.f32 %v1444, 1.0
  %v1570 = vadd.f32 %v1446, 1.0
  %v1571 = vadd.f32 %v1448, 1.0
  %v1572 = vadd.f32 %v1450, 1.0
  %v1573 = vadd.f32 %v1452, 1.0
  %v1574 = vadd.f32 %v1454, 1.0
  %v1575 = vadd.f32 %v1456, 1.0
  %v1576 = vadd.f32 %v1458, 1.0
  %v1577 = vadd.f32 %v1460, 1.0
  %v1578 = vadd.f32 %v1462, 1.0
  %v1579 = vadd.f32 %v1464, 1.0
  %v1580 = vadd.f32 %v1466, 1.0
  %v1581 = vadd.f32 %v1468, 1.0
  %v1582 = vadd.f32 %v1470, 1.0
  %v1583 = vadd.f32 %v1472, 1.0
  %v1584 = vadd.f32 %v1474, 1.0
  %v1585 = vadd.f32 %v1476, 1.0
  %v1586 = vadd.f32 %v1478, 1.0
  %v1587 = vadd.f32 %v1480, 1.0
  %v1588 = vadd.f32 %v1482, 1.0
  %v1589 = vadd.f32 %v1484, 1.0
  %v1590 = vadd.f32 %v1486, 1.0
  %v1591 = vadd.f32 %v1488, 1.0
  %v1592 = vadd.f32 %v1490, 1.0
  %v1593 = vadd.f32 %v1492, 1.0
  %v1594 = vadd.f32 %v1494, 1.0
  %v1595 = vadd.f32 %v1496, 1.0
  %v1596 = vadd.f32 %v1498, 1.0
  %v1597 = vadd.f32 %v1500, 1.0
  %v1598 = vadd.f32 %v1502, 1.0
  %v1599 = vadd.f32 %v1504, 1.0
  %v1600 = vadd.f32 %v1506, 1.0
  %v1601 = vadd.f32 %v1508, 1.0
  %v1602 = vadd.f32 %v1510, 1.0
  %v1603 = vadd.f32 %v1512, 1.0
  %v1604 = vadd.f32 %v1514, 1.0
  %v1605 = vadd.f32 %v1516, 1.0
  %v1606 = vadd.f32 %v1518, 1.0
  %v1607 = vadd.f32 %v1520, 1.0
  %v1608 = vadd.f32 %v1522, 1.0
  %v1609 = vadd.f32 %v1524, 1.0
  %v1610 = vadd.f32 %v1526, 1.0
  %v1611 = vadd.f32 %v1528, 1.0
  %v1612 = vadd.f32 %v1530, 1.0
  %v1613 = vadd.f32 %v1532, 1.0
  %v1614 = vadd.f32 %v1534, 1.0
  %v1615 = vadd.f32 %v1536, 1.0
  %v1616 = vadd.f32 %v1538, 1.0
  %v1617 = vadd.f32 %v1540, 1.0
  %v1618 = vadd.f32 %v1542, 1.0
  %v1619 = vadd.f32 %v1544, 1.0
  %v1620 = vadd.f32 %v1546, 1.0
  %v1621 = vadd.f32 %v1548, 1.0
  %v1622 = vadd.f32 %v1550, 1.0
  %v1623 = vadd.f32 %v1552, 1.0
  %v1624 = vadd.f32 %v1554, 1.0
  %v1625 = vadd.f32 %v1556, 1.0
  %v1626 = vadd.f32 %v1558, 1.0
  %v1627 = vadd.f32 %v1560, 1.0
  %v1628 = vadd.f32 %v1562, 1.0
  %v1629 = vadd.f32 %v1564, 1.0
  %v1630 = vadd.f32 %v1566, 1.0
  %v1631 = vrcp.pop %v1567
  %v1632 = vmul.f32 %v1567, %v1631
  %v1633 = vsub.f32 1.0, %v1632
  %v1634 = vmul.f32 %v1631, %v1633
  %v1635 = vadd.f32 %v1631, %v1634
  %vm1636 = vweird.f32 %v1567
  %vm1637 = vweird.f32 %v1631
  %vm1638 = vmor %vm1636, %vm1637
  %v1639 = vsel %vm1638, %v1631, %v1635
  %v1640 = vand.u32 2147483647, %v1567
  %vm1641 = vcmp.eq.f32.partialorder %v1640, 8.507059e+37
  %v1642 = vand.u32 %v1567, 2147483648
  %v1643 = vor.u32 1.1754944e-38, %v1642
  %v1644 = vsel %vm1641, %v1643, %v1639
  %v1645 = vmul.f32 1.0, %v1644
  %v1646 = vrcp.pop %v1568
  %v1647 = vmul.f32 %v1568, %v1646
  %v1648 = vsub.f32 1.0, %v1647
  %v1649 = vmul.f32 %v1646, %v1648
  %v1650 = vadd.f32 %v1646, %v1649
  %vm1651 = vweird.f32 %v1568
  %vm1652 = vweird.f32 %v1646
  %vm1653 = vmor %vm1651, %vm1652
  %v1654 = vsel %vm1653, %v1646, %v1650
  %v1655 = vand.u32 2147483647, %v1568
  %vm1656 = vcmp.eq.f32.partialorder %v1655, 8.507059e+37
  %v1657 = vand.u32 %v1568, 2147483648
  %v1658 = vor.u32 1.1754944e-38, %v1657
  %v1659 = vsel %vm1656, %v1658, %v1654
  %v1660 = vmul.f32 1.0, %v1659
  %v1661 = vrcp.pop %v1569
  %v1662 = vmul.f32 %v1569, %v1661
  %v1663 = vsub.f32 1.0, %v1662
  %v1664 = vmul.f32 %v1661, %v1663
  %v1665 = vadd.f32 %v1661, %v1664
  %vm1666 = vweird.f32 %v1569
  %vm1667 = vweird.f32 %v1661
  %vm1668 = vmor %vm1666, %vm1667
  %v1669 = vsel %vm1668, %v1661, %v1665
  %v1670 = vand.u32 2147483647, %v1569
  %vm1671 = vcmp.eq.f32.partialorder %v1670, 8.507059e+37
  %v1672 = vand.u32 %v1569, 2147483648
  %v1673 = vor.u32 1.1754944e-38, %v1672
  %v1674 = vsel %vm1671, %v1673, %v1669
  %v1675 = vmul.f32 1.0, %v1674
  %v1676 = vrcp.pop %v1570
  %v1677 = vmul.f32 %v1570, %v1676
  %v1678 = vsub.f32 1.0, %v1677
  %v1679 = vmul.f32 %v1676, %v1678
  %v1680 = vadd.f32 %v1676, %v1679
  %vm1681 = vweird.f32 %v1570
  %vm1682 = vweird.f32 %v1676
  %vm1683 = vmor %vm1681, %vm1682
  %v1684 = vsel %vm1683, %v1676, %v1680
  %v1685 = vand.u32 2147483647, %v1570
  %vm1686 = vcmp.eq.f32.partialorder %v1685, 8.507059e+37
  %v1687 = vand.u32 %v1570, 2147483648
  %v1688 = vor.u32 1.1754944e-38, %v1687
  %v1689 = vsel %vm1686, %v1688, %v1684
  %v1690 = vmul.f32 1.0, %v1689
  %v1691 = vrcp.pop %v1571
  %v1692 = vmul.f32 %v1571, %v1691
  %v1693 = vsub.f32 1.0, %v1692
  %v1694 = vmul.f32 %v1691, %v1693
  %v1695 = vadd.f32 %v1691, %v1694
  %vm1696 = vweird.f32 %v1571
  %vm1697 = vweird.f32 %v1691
  %vm1698 = vmor %vm1696, %vm1697
  %v1699 = vsel %vm1698, %v1691, %v1695
  %v1700 = vand.u32 2147483647, %v1571
  %vm1701 = vcmp.eq.f32.partialorder %v1700, 8.507059e+37
  %v1702 = vand.u32 %v1571, 2147483648
  %v1703 = vor.u32 1.1754944e-38, %v1702
  %v1704 = vsel %vm1701, %v1703, %v1699
  %v1705 = vmul.f32 1.0, %v1704
  %v1706 = vrcp.pop %v1572
  %v1707 = vmul.f32 %v1572, %v1706
  %v1708 = vsub.f32 1.0, %v1707
  %v1709 = vmul.f32 %v1706, %v1708
  %v1710 = vadd.f32 %v1706, %v1709
  %vm1711 = vweird.f32 %v1572
  %vm1712 = vweird.f32 %v1706
  %vm1713 = vmor %vm1711, %vm1712
  %v1714 = vsel %vm1713, %v1706, %v1710
  %v1715 = vand.u32 2147483647, %v1572
  %vm1716 = vcmp.eq.f32.partialorder %v1715, 8.507059e+37
  %v1717 = vand.u32 %v1572, 2147483648
  %v1718 = vor.u32 1.1754944e-38, %v1717
  %v1719 = vsel %vm1716, %v1718, %v1714
  %v1720 = vmul.f32 1.0, %v1719
  %v1721 = vrcp.pop %v1573
  %v1722 = vmul.f32 %v1573, %v1721
  %v1723 = vsub.f32 1.0, %v1722
  %v1724 = vmul.f32 %v1721, %v1723
  %v1725 = vadd.f32 %v1721, %v1724
  %vm1726 = vweird.f32 %v1573
  %vm1727 = vweird.f32 %v1721
  %vm1728 = vmor %vm1726, %vm1727
  %v1729 = vsel %vm1728, %v1721, %v1725
  %v1730 = vand.u32 2147483647, %v1573
  %vm1731 = vcmp.eq.f32.partialorder %v1730, 8.507059e+37
  %v1732 = vand.u32 %v1573, 2147483648
  %v1733 = vor.u32 1.1754944e-38, %v1732
  %v1734 = vsel %vm1731, %v1733, %v1729
  %v1735 = vmul.f32 1.0, %v1734
  %v1736 = vrcp.pop %v1574
  %v1737 = vmul.f32 %v1574, %v1736
  %v1738 = vsub.f32 1.0, %v1737
  %v1739 = vmul.f32 %v1736, %v1738
  %v1740 = vadd.f32 %v1736, %v1739
  %vm1741 = vweird.f32 %v1574
  %vm1742 = vweird.f32 %v1736
  %vm1743 = vmor %vm1741, %vm1742
  %v1744 = vsel %vm1743, %v1736, %v1740
  %v1745 = vand.u32 2147483647, %v1574
  %vm1746 = vcmp.eq.f32.partialorder %v1745, 8.507059e+37
  %v1747 = vand.u32 %v1574, 2147483648
  %v1748 = vor.u32 1.1754944e-38, %v1747
  %v1749 = vsel %vm1746, %v1748, %v1744
  %v1750 = vmul.f32 1.0, %v1749
  %v1751 = vrcp.pop %v1575
  %v1752 = vmul.f32 %v1575, %v1751
  %v1753 = vsub.f32 1.0, %v1752
  %v1754 = vmul.f32 %v1751, %v1753
  %v1755 = vadd.f32 %v1751, %v1754
  %vm1756 = vweird.f32 %v1575
  %vm1757 = vweird.f32 %v1751
  %vm1758 = vmor %vm1756, %vm1757
  %v1759 = vsel %vm1758, %v1751, %v1755
  %v1760 = vand.u32 2147483647, %v1575
  %vm1761 = vcmp.eq.f32.partialorder %v1760, 8.507059e+37
  %v1762 = vand.u32 %v1575, 2147483648
  %v1763 = vor.u32 1.1754944e-38, %v1762
  %v1764 = vsel %vm1761, %v1763, %v1759
  %v1765 = vmul.f32 1.0, %v1764
  %v1766 = vrcp.pop %v1576
  %v1767 = vmul.f32 %v1576, %v1766
  %v1768 = vsub.f32 1.0, %v1767
  %v1769 = vmul.f32 %v1766, %v1768
  %v1770 = vadd.f32 %v1766, %v1769
  %vm1771 = vweird.f32 %v1576
  %vm1772 = vweird.f32 %v1766
  %vm1773 = vmor %vm1771, %vm1772
  %v1774 = vsel %vm1773, %v1766, %v1770
  %v1775 = vand.u32 2147483647, %v1576
  %vm1776 = vcmp.eq.f32.partialorder %v1775, 8.507059e+37
  %v1777 = vand.u32 %v1576, 2147483648
  %v1778 = vor.u32 1.1754944e-38, %v1777
  %v1779 = vsel %vm1776, %v1778, %v1774
  %v1780 = vmul.f32 1.0, %v1779
  %v1781 = vrcp.pop %v1577
  %v1782 = vmul.f32 %v1577, %v1781
  %v1783 = vsub.f32 1.0, %v1782
  %v1784 = vmul.f32 %v1781, %v1783
  %v1785 = vadd.f32 %v1781, %v1784
  %vm1786 = vweird.f32 %v1577
  %vm1787 = vweird.f32 %v1781
  %vm1788 = vmor %vm1786, %vm1787
  %v1789 = vsel %vm1788, %v1781, %v1785
  %v1790 = vand.u32 2147483647, %v1577
  %vm1791 = vcmp.eq.f32.partialorder %v1790, 8.507059e+37
  %v1792 = vand.u32 %v1577, 2147483648
  %v1793 = vor.u32 1.1754944e-38, %v1792
  %v1794 = vsel %vm1791, %v1793, %v1789
  %v1795 = vmul.f32 1.0, %v1794
  %v1796 = vrcp.pop %v1578
  %v1797 = vmul.f32 %v1578, %v1796
  %v1798 = vsub.f32 1.0, %v1797
  %v1799 = vmul.f32 %v1796, %v1798
  %v1800 = vadd.f32 %v1796, %v1799
  %vm1801 = vweird.f32 %v1578
  %vm1802 = vweird.f32 %v1796
  %vm1803 = vmor %vm1801, %vm1802
  %v1804 = vsel %vm1803, %v1796, %v1800
  %v1805 = vand.u32 2147483647, %v1578
  %vm1806 = vcmp.eq.f32.partialorder %v1805, 8.507059e+37
  %v1807 = vand.u32 %v1578, 2147483648
  %v1808 = vor.u32 1.1754944e-38, %v1807
  %v1809 = vsel %vm1806, %v1808, %v1804
  %v1810 = vmul.f32 1.0, %v1809
  %v1811 = vrcp.pop %v1579
  %v1812 = vmul.f32 %v1579, %v1811
  %v1813 = vsub.f32 1.0, %v1812
  %v1814 = vmul.f32 %v1811, %v1813
  %v1815 = vadd.f32 %v1811, %v1814
  %vm1816 = vweird.f32 %v1579
  %vm1817 = vweird.f32 %v1811
  %vm1818 = vmor %vm1816, %vm1817
  %v1819 = vsel %vm1818, %v1811, %v1815
  %v1820 = vand.u32 2147483647, %v1579
  %vm1821 = vcmp.eq.f32.partialorder %v1820, 8.507059e+37
  %v1822 = vand.u32 %v1579, 2147483648
  %v1823 = vor.u32 1.1754944e-38, %v1822
  %v1824 = vsel %vm1821, %v1823, %v1819
  %v1825 = vmul.f32 1.0, %v1824
  %v1826 = vrcp.pop %v1580
  %v1827 = vmul.f32 %v1580, %v1826
  %v1828 = vsub.f32 1.0, %v1827
  %v1829 = vmul.f32 %v1826, %v1828
  %v1830 = vadd.f32 %v1826, %v1829
  %vm1831 = vweird.f32 %v1580
  %vm1832 = vweird.f32 %v1826
  %vm1833 = vmor %vm1831, %vm1832
  %v1834 = vsel %vm1833, %v1826, %v1830
  %v1835 = vand.u32 2147483647, %v1580
  %vm1836 = vcmp.eq.f32.partialorder %v1835, 8.507059e+37
  %v1837 = vand.u32 %v1580, 2147483648
  %v1838 = vor.u32 1.1754944e-38, %v1837
  %v1839 = vsel %vm1836, %v1838, %v1834
  %v1840 = vmul.f32 1.0, %v1839
  %v1841 = vrcp.pop %v1581
  %v1842 = vmul.f32 %v1581, %v1841
  %v1843 = vsub.f32 1.0, %v1842
  %v1844 = vmul.f32 %v1841, %v1843
  %v1845 = vadd.f32 %v1841, %v1844
  %vm1846 = vweird.f32 %v1581
  %vm1847 = vweird.f32 %v1841
  %vm1848 = vmor %vm1846, %vm1847
  %v1849 = vsel %vm1848, %v1841, %v1845
  %v1850 = vand.u32 2147483647, %v1581
  %vm1851 = vcmp.eq.f32.partialorder %v1850, 8.507059e+37
  %v1852 = vand.u32 %v1581, 2147483648
  %v1853 = vor.u32 1.1754944e-38, %v1852
  %v1854 = vsel %vm1851, %v1853, %v1849
  %v1855 = vmul.f32 1.0, %v1854
  %v1856 = vrcp.pop %v1582
  %v1857 = vmul.f32 %v1582, %v1856
  %v1858 = vsub.f32 1.0, %v1857
  %v1859 = vmul.f32 %v1856, %v1858
  %v1860 = vadd.f32 %v1856, %v1859
  %vm1861 = vweird.f32 %v1582
  %vm1862 = vweird.f32 %v1856
  %vm1863 = vmor %vm1861, %vm1862
  %v1864 = vsel %vm1863, %v1856, %v1860
  %v1865 = vand.u32 2147483647, %v1582
  %vm1866 = vcmp.eq.f32.partialorder %v1865, 8.507059e+37
  %v1867 = vand.u32 %v1582, 2147483648
  %v1868 = vor.u32 1.1754944e-38, %v1867
  %v1869 = vsel %vm1866, %v1868, %v1864
  %v1870 = vmul.f32 1.0, %v1869
  %v1871 = vrcp.pop %v1583
  %v1872 = vmul.f32 %v1583, %v1871
  %v1873 = vsub.f32 1.0, %v1872
  %v1874 = vmul.f32 %v1871, %v1873
  %v1875 = vadd.f32 %v1871, %v1874
  %vm1876 = vweird.f32 %v1583
  %vm1877 = vweird.f32 %v1871
  %vm1878 = vmor %vm1876, %vm1877
  %v1879 = vsel %vm1878, %v1871, %v1875
  %v1880 = vand.u32 2147483647, %v1583
  %vm1881 = vcmp.eq.f32.partialorder %v1880, 8.507059e+37
  %v1882 = vand.u32 %v1583, 2147483648
  %v1883 = vor.u32 1.1754944e-38, %v1882
  %v1884 = vsel %vm1881, %v1883, %v1879
  %v1885 = vmul.f32 1.0, %v1884
  %v1886 = vrcp.pop %v1584
  %v1887 = vmul.f32 %v1584, %v1886
  %v1888 = vsub.f32 1.0, %v1887
  %v1889 = vmul.f32 %v1886, %v1888
  %v1890 = vadd.f32 %v1886, %v1889
  %vm1891 = vweird.f32 %v1584
  %vm1892 = vweird.f32 %v1886
  %vm1893 = vmor %vm1891, %vm1892
  %v1894 = vsel %vm1893, %v1886, %v1890
  %v1895 = vand.u32 2147483647, %v1584
  %vm1896 = vcmp.eq.f32.partialorder %v1895, 8.507059e+37
  %v1897 = vand.u32 %v1584, 2147483648
  %v1898 = vor.u32 1.1754944e-38, %v1897
  %v1899 = vsel %vm1896, %v1898, %v1894
  %v1900 = vmul.f32 1.0, %v1899
  %v1901 = vrcp.pop %v1585
  %v1902 = vmul.f32 %v1585, %v1901
  %v1903 = vsub.f32 1.0, %v1902
  %v1904 = vmul.f32 %v1901, %v1903
  %v1905 = vadd.f32 %v1901, %v1904
  %vm1906 = vweird.f32 %v1585
  %vm1907 = vweird.f32 %v1901
  %vm1908 = vmor %vm1906, %vm1907
  %v1909 = vsel %vm1908, %v1901, %v1905
  %v1910 = vand.u32 2147483647, %v1585
  %vm1911 = vcmp.eq.f32.partialorder %v1910, 8.507059e+37
  %v1912 = vand.u32 %v1585, 2147483648
  %v1913 = vor.u32 1.1754944e-38, %v1912
  %v1914 = vsel %vm1911, %v1913, %v1909
  %v1915 = vmul.f32 1.0, %v1914
  %v1916 = vrcp.pop %v1586
  %v1917 = vmul.f32 %v1586, %v1916
  %v1918 = vsub.f32 1.0, %v1917
  %v1919 = vmul.f32 %v1916, %v1918
  %v1920 = vadd.f32 %v1916, %v1919
  %vm1921 = vweird.f32 %v1586
  %vm1922 = vweird.f32 %v1916
  %vm1923 = vmor %vm1921, %vm1922
  %v1924 = vsel %vm1923, %v1916, %v1920
  %v1925 = vand.u32 2147483647, %v1586
  %vm1926 = vcmp.eq.f32.partialorder %v1925, 8.507059e+37
  %v1927 = vand.u32 %v1586, 2147483648
  %v1928 = vor.u32 1.1754944e-38, %v1927
  %v1929 = vsel %vm1926, %v1928, %v1924
  %v1930 = vmul.f32 1.0, %v1929
  %v1931 = vrcp.pop %v1587
  %v1932 = vmul.f32 %v1587, %v1931
  %v1933 = vsub.f32 1.0, %v1932
  %v1934 = vmul.f32 %v1931, %v1933
  %v1935 = vadd.f32 %v1931, %v1934
  %vm1936 = vweird.f32 %v1587
  %vm1937 = vweird.f32 %v1931
  %vm1938 = vmor %vm1936, %vm1937
  %v1939 = vsel %vm1938, %v1931, %v1935
  %v1940 = vand.u32 2147483647, %v1587
  %vm1941 = vcmp.eq.f32.partialorder %v1940, 8.507059e+37
  %v1942 = vand.u32 %v1587, 2147483648
  %v1943 = vor.u32 1.1754944e-38, %v1942
  %v1944 = vsel %vm1941, %v1943, %v1939
  %v1945 = vmul.f32 1.0, %v1944
  %v1946 = vrcp.pop %v1588
  %v1947 = vmul.f32 %v1588, %v1946
  %v1948 = vsub.f32 1.0, %v1947
  %v1949 = vmul.f32 %v1946, %v1948
  %v1950 = vadd.f32 %v1946, %v1949
  %vm1951 = vweird.f32 %v1588
  %vm1952 = vweird.f32 %v1946
  %vm1953 = vmor %vm1951, %vm1952
  %v1954 = vsel %vm1953, %v1946, %v1950
  %v1955 = vand.u32 2147483647, %v1588
  %vm1956 = vcmp.eq.f32.partialorder %v1955, 8.507059e+37
  %v1957 = vand.u32 %v1588, 2147483648
  %v1958 = vor.u32 1.1754944e-38, %v1957
  %v1959 = vsel %vm1956, %v1958, %v1954
  %v1960 = vmul.f32 1.0, %v1959
  %v1961 = vrcp.pop %v1589
  %v1962 = vmul.f32 %v1589, %v1961
  %v1963 = vsub.f32 1.0, %v1962
  %v1964 = vmul.f32 %v1961, %v1963
  %v1965 = vadd.f32 %v1961, %v1964
  %vm1966 = vweird.f32 %v1589
  %vm1967 = vweird.f32 %v1961
  %vm1968 = vmor %vm1966, %vm1967
  %v1969 = vsel %vm1968, %v1961, %v1965
  %v1970 = vand.u32 2147483647, %v1589
  %vm1971 = vcmp.eq.f32.partialorder %v1970, 8.507059e+37
  %v1972 = vand.u32 %v1589, 2147483648
  %v1973 = vor.u32 1.1754944e-38, %v1972
  %v1974 = vsel %vm1971, %v1973, %v1969
  %v1975 = vmul.f32 1.0, %v1974
  %v1976 = vrcp.pop %v1590
  %v1977 = vmul.f32 %v1590, %v1976
  %v1978 = vsub.f32 1.0, %v1977
  %v1979 = vmul.f32 %v1976, %v1978
  %v1980 = vadd.f32 %v1976, %v1979
  %vm1981 = vweird.f32 %v1590
  %vm1982 = vweird.f32 %v1976
  %vm1983 = vmor %vm1981, %vm1982
  %v1984 = vsel %vm1983, %v1976, %v1980
  %v1985 = vand.u32 2147483647, %v1590
  %vm1986 = vcmp.eq.f32.partialorder %v1985, 8.507059e+37
  %v1987 = vand.u32 %v1590, 2147483648
  %v1988 = vor.u32 1.1754944e-38, %v1987
  %v1989 = vsel %vm1986, %v1988, %v1984
  %v1990 = vmul.f32 1.0, %v1989
  %v1991 = vrcp.pop %v1591
  %v1992 = vmul.f32 %v1591, %v1991
  %v1993 = vsub.f32 1.0, %v1992
  %v1994 = vmul.f32 %v1991, %v1993
  %v1995 = vadd.f32 %v1991, %v1994
  %vm1996 = vweird.f32 %v1591
  %vm1997 = vweird.f32 %v1991
  %vm1998 = vmor %vm1996, %vm1997
  %v1999 = vsel %vm1998, %v1991, %v1995
  %v2000 = vand.u32 2147483647, %v1591
  %vm2001 = vcmp.eq.f32.partialorder %v2000, 8.507059e+37
  %v2002 = vand.u32 %v1591, 2147483648
  %v2003 = vor.u32 1.1754944e-38, %v2002
  %v2004 = vsel %vm2001, %v2003, %v1999
  %v2005 = vmul.f32 1.0, %v2004
  %v2006 = vrcp.pop %v1592
  %v2007 = vmul.f32 %v1592, %v2006
  %v2008 = vsub.f32 1.0, %v2007
  %v2009 = vmul.f32 %v2006, %v2008
  %v2010 = vadd.f32 %v2006, %v2009
  %vm2011 = vweird.f32 %v1592
  %vm2012 = vweird.f32 %v2006
  %vm2013 = vmor %vm2011, %vm2012
  %v2014 = vsel %vm2013, %v2006, %v2010
  %v2015 = vand.u32 2147483647, %v1592
  %vm2016 = vcmp.eq.f32.partialorder %v2015, 8.507059e+37
  %v2017 = vand.u32 %v1592, 2147483648
  %v2018 = vor.u32 1.1754944e-38, %v2017
  %v2019 = vsel %vm2016, %v2018, %v2014
  %v2020 = vmul.f32 1.0, %v2019
  %v2021 = vrcp.pop %v1593
  %v2022 = vmul.f32 %v1593, %v2021
  %v2023 = vsub.f32 1.0, %v2022
  %v2024 = vmul.f32 %v2021, %v2023
  %v2025 = vadd.f32 %v2021, %v2024
  %vm2026 = vweird.f32 %v1593
  %vm2027 = vweird.f32 %v2021
  %vm2028 = vmor %vm2026, %vm2027
  %v2029 = vsel %vm2028, %v2021, %v2025
  %v2030 = vand.u32 2147483647, %v1593
  %vm2031 = vcmp.eq.f32.partialorder %v2030, 8.507059e+37
  %v2032 = vand.u32 %v1593, 2147483648
  %v2033 = vor.u32 1.1754944e-38, %v2032
  %v2034 = vsel %vm2031, %v2033, %v2029
  %v2035 = vmul.f32 1.0, %v2034
  %v2036 = vrcp.pop %v1594
  %v2037 = vmul.f32 %v1594, %v2036
  %v2038 = vsub.f32 1.0, %v2037
  %v2039 = vmul.f32 %v2036, %v2038
  %v2040 = vadd.f32 %v2036, %v2039
  %vm2041 = vweird.f32 %v1594
  %vm2042 = vweird.f32 %v2036
  %vm2043 = vmor %vm2041, %vm2042
  %v2044 = vsel %vm2043, %v2036, %v2040
  %v2045 = vand.u32 2147483647, %v1594
  %vm2046 = vcmp.eq.f32.partialorder %v2045, 8.507059e+37
  %v2047 = vand.u32 %v1594, 2147483648
  %v2048 = vor.u32 1.1754944e-38, %v2047
  %v2049 = vsel %vm2046, %v2048, %v2044
  %v2050 = vmul.f32 1.0, %v2049
  %v2051 = vrcp.pop %v1595
  %v2052 = vmul.f32 %v1595, %v2051
  %v2053 = vsub.f32 1.0, %v2052
  %v2054 = vmul.f32 %v2051, %v2053
  %v2055 = vadd.f32 %v2051, %v2054
  %vm2056 = vweird.f32 %v1595
  %vm2057 = vweird.f32 %v2051
  %vm2058 = vmor %vm2056, %vm2057
  %v2059 = vsel %vm2058, %v2051, %v2055
  %v2060 = vand.u32 2147483647, %v1595
  %vm2061 = vcmp.eq.f32.partialorder %v2060, 8.507059e+37
  %v2062 = vand.u32 %v1595, 2147483648
  %v2063 = vor.u32 1.1754944e-38, %v2062
  %v2064 = vsel %vm2061, %v2063, %v2059
  %v2065 = vmul.f32 1.0, %v2064
  %v2066 = vrcp.pop %v1596
  %v2067 = vmul.f32 %v1596, %v2066
  %v2068 = vsub.f32 1.0, %v2067
  %v2069 = vmul.f32 %v2066, %v2068
  %v2070 = vadd.f32 %v2066, %v2069
  %vm2071 = vweird.f32 %v1596
  %vm2072 = vweird.f32 %v2066
  %vm2073 = vmor %vm2071, %vm2072
  %v2074 = vsel %vm2073, %v2066, %v2070
  %v2075 = vand.u32 2147483647, %v1596
  %vm2076 = vcmp.eq.f32.partialorder %v2075, 8.507059e+37
  %v2077 = vand.u32 %v1596, 2147483648
  %v2078 = vor.u32 1.1754944e-38, %v2077
  %v2079 = vsel %vm2076, %v2078, %v2074
  %v2080 = vmul.f32 1.0, %v2079
  %v2081 = vrcp.pop %v1597
  %v2082 = vmul.f32 %v1597, %v2081
  %v2083 = vsub.f32 1.0, %v2082
  %v2084 = vmul.f32 %v2081, %v2083
  %v2085 = vadd.f32 %v2081, %v2084
  %vm2086 = vweird.f32 %v1597
  %vm2087 = vweird.f32 %v2081
  %vm2088 = vmor %vm2086, %vm2087
  %v2089 = vsel %vm2088, %v2081, %v2085
  %v2090 = vand.u32 2147483647, %v1597
  %vm2091 = vcmp.eq.f32.partialorder %v2090, 8.507059e+37
  %v2092 = vand.u32 %v1597, 2147483648
  %v2093 = vor.u32 1.1754944e-38, %v2092
  %v2094 = vsel %vm2091, %v2093, %v2089
  %v2095 = vmul.f32 1.0, %v2094
  %v2096 = vrcp.pop %v1598
  %v2097 = vmul.f32 %v1598, %v2096
  %v2098 = vsub.f32 1.0, %v2097
  %v2099 = vmul.f32 %v2096, %v2098
  %v2100 = vadd.f32 %v2096, %v2099
  %vm2101 = vweird.f32 %v1598
  %vm2102 = vweird.f32 %v2096
  %vm2103 = vmor %vm2101, %vm2102
  %v2104 = vsel %vm2103, %v2096, %v2100
  %v2105 = vand.u32 2147483647, %v1598
  %vm2106 = vcmp.eq.f32.partialorder %v2105, 8.507059e+37
  %v2107 = vand.u32 %v1598, 2147483648
  %v2108 = vor.u32 1.1754944e-38, %v2107
  %v2109 = vsel %vm2106, %v2108, %v2104
  %v2110 = vmul.f32 1.0, %v2109
  %v2111 = vrcp.pop %v1599
  %v2112 = vmul.f32 %v1599, %v2111
  %v2113 = vsub.f32 1.0, %v2112
  %v2114 = vmul.f32 %v2111, %v2113
  %v2115 = vadd.f32 %v2111, %v2114
  %vm2116 = vweird.f32 %v1599
  %vm2117 = vweird.f32 %v2111
  %vm2118 = vmor %vm2116, %vm2117
  %v2119 = vsel %vm2118, %v2111, %v2115
  %v2120 = vand.u32 2147483647, %v1599
  %vm2121 = vcmp.eq.f32.partialorder %v2120, 8.507059e+37
  %v2122 = vand.u32 %v1599, 2147483648
  %v2123 = vor.u32 1.1754944e-38, %v2122
  %v2124 = vsel %vm2121, %v2123, %v2119
  %v2125 = vmul.f32 1.0, %v2124
  %v2126 = vrcp.pop %v1600
  %v2127 = vmul.f32 %v1600, %v2126
  %v2128 = vsub.f32 1.0, %v2127
  %v2129 = vmul.f32 %v2126, %v2128
  %v2130 = vadd.f32 %v2126, %v2129
  %vm2131 = vweird.f32 %v1600
  %vm2132 = vweird.f32 %v2126
  %vm2133 = vmor %vm2131, %vm2132
  %v2134 = vsel %vm2133, %v2126, %v2130
  %v2135 = vand.u32 2147483647, %v1600
  %vm2136 = vcmp.eq.f32.partialorder %v2135, 8.507059e+37
  %v2137 = vand.u32 %v1600, 2147483648
  %v2138 = vor.u32 1.1754944e-38, %v2137
  %v2139 = vsel %vm2136, %v2138, %v2134
  %v2140 = vmul.f32 1.0, %v2139
  %v2141 = vrcp.pop %v1601
  %v2142 = vmul.f32 %v1601, %v2141
  %v2143 = vsub.f32 1.0, %v2142
  %v2144 = vmul.f32 %v2141, %v2143
  %v2145 = vadd.f32 %v2141, %v2144
  %vm2146 = vweird.f32 %v1601
  %vm2147 = vweird.f32 %v2141
  %vm2148 = vmor %vm2146, %vm2147
  %v2149 = vsel %vm2148, %v2141, %v2145
  %v2150 = vand.u32 2147483647, %v1601
  %vm2151 = vcmp.eq.f32.partialorder %v2150, 8.507059e+37
  %v2152 = vand.u32 %v1601, 2147483648
  %v2153 = vor.u32 1.1754944e-38, %v2152
  %v2154 = vsel %vm2151, %v2153, %v2149
  %v2155 = vmul.f32 1.0, %v2154
  %v2156 = vrcp.pop %v1602
  %v2157 = vmul.f32 %v1602, %v2156
  %v2158 = vsub.f32 1.0, %v2157
  %v2159 = vmul.f32 %v2156, %v2158
  %v2160 = vadd.f32 %v2156, %v2159
  %vm2161 = vweird.f32 %v1602
  %vm2162 = vweird.f32 %v2156
  %vm2163 = vmor %vm2161, %vm2162
  %v2164 = vsel %vm2163, %v2156, %v2160
  %v2165 = vand.u32 2147483647, %v1602
  %vm2166 = vcmp.eq.f32.partialorder %v2165, 8.507059e+37
  %v2167 = vand.u32 %v1602, 2147483648
  %v2168 = vor.u32 1.1754944e-38, %v2167
  %v2169 = vsel %vm2166, %v2168, %v2164
  %v2170 = vmul.f32 1.0, %v2169
  %v2171 = vrcp.pop %v1603
  %v2172 = vmul.f32 %v1603, %v2171
  %v2173 = vsub.f32 1.0, %v2172
  %v2174 = vmul.f32 %v2171, %v2173
  %v2175 = vadd.f32 %v2171, %v2174
  %vm2176 = vweird.f32 %v1603
  %vm2177 = vweird.f32 %v2171
  %vm2178 = vmor %vm2176, %vm2177
  %v2179 = vsel %vm2178, %v2171, %v2175
  %v2180 = vand.u32 2147483647, %v1603
  %vm2181 = vcmp.eq.f32.partialorder %v2180, 8.507059e+37
  %v2182 = vand.u32 %v1603, 2147483648
  %v2183 = vor.u32 1.1754944e-38, %v2182
  %v2184 = vsel %vm2181, %v2183, %v2179
  %v2185 = vmul.f32 1.0, %v2184
  %v2186 = vrcp.pop %v1604
  %v2187 = vmul.f32 %v1604, %v2186
  %v2188 = vsub.f32 1.0, %v2187
  %v2189 = vmul.f32 %v2186, %v2188
  %v2190 = vadd.f32 %v2186, %v2189
  %vm2191 = vweird.f32 %v1604
  %vm2192 = vweird.f32 %v2186
  %vm2193 = vmor %vm2191, %vm2192
  %v2194 = vsel %vm2193, %v2186, %v2190
  %v2195 = vand.u32 2147483647, %v1604
  %vm2196 = vcmp.eq.f32.partialorder %v2195, 8.507059e+37
  %v2197 = vand.u32 %v1604, 2147483648
  %v2198 = vor.u32 1.1754944e-38, %v2197
  %v2199 = vsel %vm2196, %v2198, %v2194
  %v2200 = vmul.f32 1.0, %v2199
  %v2201 = vrcp.pop %v1605
  %v2202 = vmul.f32 %v1605, %v2201
  %v2203 = vsub.f32 1.0, %v2202
  %v2204 = vmul.f32 %v2201, %v2203
  %v2205 = vadd.f32 %v2201, %v2204
  %vm2206 = vweird.f32 %v1605
  %vm2207 = vweird.f32 %v2201
  %vm2208 = vmor %vm2206, %vm2207
  %v2209 = vsel %vm2208, %v2201, %v2205
  %v2210 = vand.u32 2147483647, %v1605
  %vm2211 = vcmp.eq.f32.partialorder %v2210, 8.507059e+37
  %v2212 = vand.u32 %v1605, 2147483648
  %v2213 = vor.u32 1.1754944e-38, %v2212
  %v2214 = vsel %vm2211, %v2213, %v2209
  %v2215 = vmul.f32 1.0, %v2214
  %v2216 = vrcp.pop %v1606
  %v2217 = vmul.f32 %v1606, %v2216
  %v2218 = vsub.f32 1.0, %v2217
  %v2219 = vmul.f32 %v2216, %v2218
  %v2220 = vadd.f32 %v2216, %v2219
  %vm2221 = vweird.f32 %v1606
  %vm2222 = vweird.f32 %v2216
  %vm2223 = vmor %vm2221, %vm2222
  %v2224 = vsel %vm2223, %v2216, %v2220
  %v2225 = vand.u32 2147483647, %v1606
  %vm2226 = vcmp.eq.f32.partialorder %v2225, 8.507059e+37
  %v2227 = vand.u32 %v1606, 2147483648
  %v2228 = vor.u32 1.1754944e-38, %v2227
  %v2229 = vsel %vm2226, %v2228, %v2224
  %v2230 = vmul.f32 1.0, %v2229
  %v2231 = vrcp.pop %v1607
  %v2232 = vmul.f32 %v1607, %v2231
  %v2233 = vsub.f32 1.0, %v2232
  %v2234 = vmul.f32 %v2231, %v2233
  %v2235 = vadd.f32 %v2231, %v2234
  %vm2236 = vweird.f32 %v1607
  %vm2237 = vweird.f32 %v2231
  %vm2238 = vmor %vm2236, %vm2237
  %v2239 = vsel %vm2238, %v2231, %v2235
  %v2240 = vand.u32 2147483647, %v1607
  %vm2241 = vcmp.eq.f32.partialorder %v2240, 8.507059e+37
  %v2242 = vand.u32 %v1607, 2147483648
  %v2243 = vor.u32 1.1754944e-38, %v2242
  %v2244 = vsel %vm2241, %v2243, %v2239
  %v2245 = vmul.f32 1.0, %v2244
  %v2246 = vrcp.pop %v1608
  %v2247 = vmul.f32 %v1608, %v2246
  %v2248 = vsub.f32 1.0, %v2247
  %v2249 = vmul.f32 %v2246, %v2248
  %v2250 = vadd.f32 %v2246, %v2249
  %vm2251 = vweird.f32 %v1608
  %vm2252 = vweird.f32 %v2246
  %vm2253 = vmor %vm2251, %vm2252
  %v2254 = vsel %vm2253, %v2246, %v2250
  %v2255 = vand.u32 2147483647, %v1608
  %vm2256 = vcmp.eq.f32.partialorder %v2255, 8.507059e+37
  %v2257 = vand.u32 %v1608, 2147483648
  %v2258 = vor.u32 1.1754944e-38, %v2257
  %v2259 = vsel %vm2256, %v2258, %v2254
  %v2260 = vmul.f32 1.0, %v2259
  %v2261 = vrcp.pop %v1609
  %v2262 = vmul.f32 %v1609, %v2261
  %v2263 = vsub.f32 1.0, %v2262
  %v2264 = vmul.f32 %v2261, %v2263
  %v2265 = vadd.f32 %v2261, %v2264
  %vm2266 = vweird.f32 %v1609
  %vm2267 = vweird.f32 %v2261
  %vm2268 = vmor %vm2266, %vm2267
  %v2269 = vsel %vm2268, %v2261, %v2265
  %v2270 = vand.u32 2147483647, %v1609
  %vm2271 = vcmp.eq.f32.partialorder %v2270, 8.507059e+37
  %v2272 = vand.u32 %v1609, 2147483648
  %v2273 = vor.u32 1.1754944e-38, %v2272
  %v2274 = vsel %vm2271, %v2273, %v2269
  %v2275 = vmul.f32 1.0, %v2274
  %v2276 = vrcp.pop %v1610
  %v2277 = vmul.f32 %v1610, %v2276
  %v2278 = vsub.f32 1.0, %v2277
  %v2279 = vmul.f32 %v2276, %v2278
  %v2280 = vadd.f32 %v2276, %v2279
  %vm2281 = vweird.f32 %v1610
  %vm2282 = vweird.f32 %v2276
  %vm2283 = vmor %vm2281, %vm2282
  %v2284 = vsel %vm2283, %v2276, %v2280
  %v2285 = vand.u32 2147483647, %v1610
  %vm2286 = vcmp.eq.f32.partialorder %v2285, 8.507059e+37
  %v2287 = vand.u32 %v1610, 2147483648
  %v2288 = vor.u32 1.1754944e-38, %v2287
  %v2289 = vsel %vm2286, %v2288, %v2284
  %v2290 = vmul.f32 1.0, %v2289
  %v2291 = vrcp.pop %v1611
  %v2292 = vmul.f32 %v1611, %v2291
  %v2293 = vsub.f32 1.0, %v2292
  %v2294 = vmul.f32 %v2291, %v2293
  %v2295 = vadd.f32 %v2291, %v2294
  %vm2296 = vweird.f32 %v1611
  %vm2297 = vweird.f32 %v2291
  %vm2298 = vmor %vm2296, %vm2297
  %v2299 = vsel %vm2298, %v2291, %v2295
  %v2300 = vand.u32 2147483647, %v1611
  %vm2301 = vcmp.eq.f32.partialorder %v2300, 8.507059e+37
  %v2302 = vand.u32 %v1611, 2147483648
  %v2303 = vor.u32 1.1754944e-38, %v2302
  %v2304 = vsel %vm2301, %v2303, %v2299
  %v2305 = vmul.f32 1.0, %v2304
  %v2306 = vrcp.pop %v1612
  %v2307 = vmul.f32 %v1612, %v2306
  %v2308 = vsub.f32 1.0, %v2307
  %v2309 = vmul.f32 %v2306, %v2308
  %v2310 = vadd.f32 %v2306, %v2309
  %vm2311 = vweird.f32 %v1612
  %vm2312 = vweird.f32 %v2306
  %vm2313 = vmor %vm2311, %vm2312
  %v2314 = vsel %vm2313, %v2306, %v2310
  %v2315 = vand.u32 2147483647, %v1612
  %vm2316 = vcmp.eq.f32.partialorder %v2315, 8.507059e+37
  %v2317 = vand.u32 %v1612, 2147483648
  %v2318 = vor.u32 1.1754944e-38, %v2317
  %v2319 = vsel %vm2316, %v2318, %v2314
  %v2320 = vmul.f32 1.0, %v2319
  %v2321 = vrcp.pop %v1613
  %v2322 = vmul.f32 %v1613, %v2321
  %v2323 = vsub.f32 1.0, %v2322
  %v2324 = vmul.f32 %v2321, %v2323
  %v2325 = vadd.f32 %v2321, %v2324
  %vm2326 = vweird.f32 %v1613
  %vm2327 = vweird.f32 %v2321
  %vm2328 = vmor %vm2326, %vm2327
  %v2329 = vsel %vm2328, %v2321, %v2325
  %v2330 = vand.u32 2147483647, %v1613
  %vm2331 = vcmp.eq.f32.partialorder %v2330, 8.507059e+37
  %v2332 = vand.u32 %v1613, 2147483648
  %v2333 = vor.u32 1.1754944e-38, %v2332
  %v2334 = vsel %vm2331, %v2333, %v2329
  %v2335 = vmul.f32 1.0, %v2334
  %v2336 = vrcp.pop %v1614
  %v2337 = vmul.f32 %v1614, %v2336
  %v2338 = vsub.f32 1.0, %v2337
  %v2339 = vmul.f32 %v2336, %v2338
  %v2340 = vadd.f32 %v2336, %v2339
  %vm2341 = vweird.f32 %v1614
  %vm2342 = vweird.f32 %v2336
  %vm2343 = vmor %vm2341, %vm2342
  %v2344 = vsel %vm2343, %v2336, %v2340
  %v2345 = vand.u32 2147483647, %v1614
  %vm2346 = vcmp.eq.f32.partialorder %v2345, 8.507059e+37
  %v2347 = vand.u32 %v1614, 2147483648
  %v2348 = vor.u32 1.1754944e-38, %v2347
  %v2349 = vsel %vm2346, %v2348, %v2344
  %v2350 = vmul.f32 1.0, %v2349
  %v2351 = vrcp.pop %v1615
  %v2352 = vmul.f32 %v1615, %v2351
  %v2353 = vsub.f32 1.0, %v2352
  %v2354 = vmul.f32 %v2351, %v2353
  %v2355 = vadd.f32 %v2351, %v2354
  %vm2356 = vweird.f32 %v1615
  %vm2357 = vweird.f32 %v2351
  %vm2358 = vmor %vm2356, %vm2357
  %v2359 = vsel %vm2358, %v2351, %v2355
  %v2360 = vand.u32 2147483647, %v1615
  %vm2361 = vcmp.eq.f32.partialorder %v2360, 8.507059e+37
  %v2362 = vand.u32 %v1615, 2147483648
  %v2363 = vor.u32 1.1754944e-38, %v2362
  %v2364 = vsel %vm2361, %v2363, %v2359
  %v2365 = vmul.f32 1.0, %v2364
  %v2366 = vrcp.pop %v1616
  %v2367 = vmul.f32 %v1616, %v2366
  %v2368 = vsub.f32 1.0, %v2367
  %v2369 = vmul.f32 %v2366, %v2368
  %v2370 = vadd.f32 %v2366, %v2369
  %vm2371 = vweird.f32 %v1616
  %vm2372 = vweird.f32 %v2366
  %vm2373 = vmor %vm2371, %vm2372
  %v2374 = vsel %vm2373, %v2366, %v2370
  %v2375 = vand.u32 2147483647, %v1616
  %vm2376 = vcmp.eq.f32.partialorder %v2375, 8.507059e+37
  %v2377 = vand.u32 %v1616, 2147483648
  %v2378 = vor.u32 1.1754944e-38, %v2377
  %v2379 = vsel %vm2376, %v2378, %v2374
  %v2380 = vmul.f32 1.0, %v2379
  %v2381 = vrcp.pop %v1617
  %v2382 = vmul.f32 %v1617, %v2381
  %v2383 = vsub.f32 1.0, %v2382
  %v2384 = vmul.f32 %v2381, %v2383
  %v2385 = vadd.f32 %v2381, %v2384
  %vm2386 = vweird.f32 %v1617
  %vm2387 = vweird.f32 %v2381
  %vm2388 = vmor %vm2386, %vm2387
  %v2389 = vsel %vm2388, %v2381, %v2385
  %v2390 = vand.u32 2147483647, %v1617
  %vm2391 = vcmp.eq.f32.partialorder %v2390, 8.507059e+37
  %v2392 = vand.u32 %v1617, 2147483648
  %v2393 = vor.u32 1.1754944e-38, %v2392
  %v2394 = vsel %vm2391, %v2393, %v2389
  %v2395 = vmul.f32 1.0, %v2394
  %v2396 = vrcp.pop %v1618
  %v2397 = vmul.f32 %v1618, %v2396
  %v2398 = vsub.f32 1.0, %v2397
  %v2399 = vmul.f32 %v2396, %v2398
  %v2400 = vadd.f32 %v2396, %v2399
  %vm2401 = vweird.f32 %v1618
  %vm2402 = vweird.f32 %v2396
  %vm2403 = vmor %vm2401, %vm2402
  %v2404 = vsel %vm2403, %v2396, %v2400
  %v2405 = vand.u32 2147483647, %v1618
  %vm2406 = vcmp.eq.f32.partialorder %v2405, 8.507059e+37
  %v2407 = vand.u32 %v1618, 2147483648
  %v2408 = vor.u32 1.1754944e-38, %v2407
  %v2409 = vsel %vm2406, %v2408, %v2404
  %v2410 = vmul.f32 1.0, %v2409
  %v2411 = vrcp.pop %v1619
  %v2412 = vmul.f32 %v1619, %v2411
  %v2413 = vsub.f32 1.0, %v2412
  %v2414 = vmul.f32 %v2411, %v2413
  %v2415 = vadd.f32 %v2411, %v2414
  %vm2416 = vweird.f32 %v1619
  %vm2417 = vweird.f32 %v2411
  %vm2418 = vmor %vm2416, %vm2417
  %v2419 = vsel %vm2418, %v2411, %v2415
  %v2420 = vand.u32 2147483647, %v1619
  %vm2421 = vcmp.eq.f32.partialorder %v2420, 8.507059e+37
  %v2422 = vand.u32 %v1619, 2147483648
  %v2423 = vor.u32 1.1754944e-38, %v2422
  %v2424 = vsel %vm2421, %v2423, %v2419
  %v2425 = vmul.f32 1.0, %v2424
  %v2426 = vrcp.pop %v1620
  %v2427 = vmul.f32 %v1620, %v2426
  %v2428 = vsub.f32 1.0, %v2427
  %v2429 = vmul.f32 %v2426, %v2428
  %v2430 = vadd.f32 %v2426, %v2429
  %vm2431 = vweird.f32 %v1620
  %vm2432 = vweird.f32 %v2426
  %vm2433 = vmor %vm2431, %vm2432
  %v2434 = vsel %vm2433, %v2426, %v2430
  %v2435 = vand.u32 2147483647, %v1620
  %vm2436 = vcmp.eq.f32.partialorder %v2435, 8.507059e+37
  %v2437 = vand.u32 %v1620, 2147483648
  %v2438 = vor.u32 1.1754944e-38, %v2437
  %v2439 = vsel %vm2436, %v2438, %v2434
  %v2440 = vmul.f32 1.0, %v2439
  %v2441 = vrcp.pop %v1621
  %v2442 = vmul.f32 %v1621, %v2441
  %v2443 = vsub.f32 1.0, %v2442
  %v2444 = vmul.f32 %v2441, %v2443
  %v2445 = vadd.f32 %v2441, %v2444
  %vm2446 = vweird.f32 %v1621
  %vm2447 = vweird.f32 %v2441
  %vm2448 = vmor %vm2446, %vm2447
  %v2449 = vsel %vm2448, %v2441, %v2445
  %v2450 = vand.u32 2147483647, %v1621
  %vm2451 = vcmp.eq.f32.partialorder %v2450, 8.507059e+37
  %v2452 = vand.u32 %v1621, 2147483648
  %v2453 = vor.u32 1.1754944e-38, %v2452
  %v2454 = vsel %vm2451, %v2453, %v2449
  %v2455 = vmul.f32 1.0, %v2454
  %v2456 = vrcp.pop %v1622
  %v2457 = vmul.f32 %v1622, %v2456
  %v2458 = vsub.f32 1.0, %v2457
  %v2459 = vmul.f32 %v2456, %v2458
  %v2460 = vadd.f32 %v2456, %v2459
  %vm2461 = vweird.f32 %v1622
  %vm2462 = vweird.f32 %v2456
  %vm2463 = vmor %vm2461, %vm2462
  %v2464 = vsel %vm2463, %v2456, %v2460
  %v2465 = vand.u32 2147483647, %v1622
  %vm2466 = vcmp.eq.f32.partialorder %v2465, 8.507059e+37
  %v2467 = vand.u32 %v1622, 2147483648
  %v2468 = vor.u32 1.1754944e-38, %v2467
  %v2469 = vsel %vm2466, %v2468, %v2464
  %v2470 = vmul.f32 1.0, %v2469
  %v2471 = vrcp.pop %v1623
  %v2472 = vmul.f32 %v1623, %v2471
  %v2473 = vsub.f32 1.0, %v2472
  %v2474 = vmul.f32 %v2471, %v2473
  %v2475 = vadd.f32 %v2471, %v2474
  %vm2476 = vweird.f32 %v1623
  %vm2477 = vweird.f32 %v2471
  %vm2478 = vmor %vm2476, %vm2477
  %v2479 = vsel %vm2478, %v2471, %v2475
  %v2480 = vand.u32 2147483647, %v1623
  %vm2481 = vcmp.eq.f32.partialorder %v2480, 8.507059e+37
  %v2482 = vand.u32 %v1623, 2147483648
  %v2483 = vor.u32 1.1754944e-38, %v2482
  %v2484 = vsel %vm2481, %v2483, %v2479
  %v2485 = vmul.f32 1.0, %v2484
  %v2486 = vrcp.pop %v1624
  %v2487 = vmul.f32 %v1624, %v2486
  %v2488 = vsub.f32 1.0, %v2487
  %v2489 = vmul.f32 %v2486, %v2488
  %v2490 = vadd.f32 %v2486, %v2489
  %vm2491 = vweird.f32 %v1624
  %vm2492 = vweird.f32 %v2486
  %vm2493 = vmor %vm2491, %vm2492
  %v2494 = vsel %vm2493, %v2486, %v2490
  %v2495 = vand.u32 2147483647, %v1624
  %vm2496 = vcmp.eq.f32.partialorder %v2495, 8.507059e+37
  %v2497 = vand.u32 %v1624, 2147483648
  %v2498 = vor.u32 1.1754944e-38, %v2497
  %v2499 = vsel %vm2496, %v2498, %v2494
  %v2500 = vmul.f32 1.0, %v2499
  %v2501 = vrcp.pop %v1625
  %v2502 = vmul.f32 %v1625, %v2501
  %v2503 = vsub.f32 1.0, %v2502
  %v2504 = vmul.f32 %v2501, %v2503
  %v2505 = vadd.f32 %v2501, %v2504
  %vm2506 = vweird.f32 %v1625
  %vm2507 = vweird.f32 %v2501
  %vm2508 = vmor %vm2506, %vm2507
  %v2509 = vsel %vm2508, %v2501, %v2505
  %v2510 = vand.u32 2147483647, %v1625
  %vm2511 = vcmp.eq.f32.partialorder %v2510, 8.507059e+37
  %v2512 = vand.u32 %v1625, 2147483648
  %v2513 = vor.u32 1.1754944e-38, %v2512
  %v2514 = vsel %vm2511, %v2513, %v2509
  %v2515 = vmul.f32 1.0, %v2514
  %v2516 = vrcp.pop %v1626
  %v2517 = vmul.f32 %v1626, %v2516
  %v2518 = vsub.f32 1.0, %v2517
  %v2519 = vmul.f32 %v2516, %v2518
  %v2520 = vadd.f32 %v2516, %v2519
  %vm2521 = vweird.f32 %v1626
  %vm2522 = vweird.f32 %v2516
  %vm2523 = vmor %vm2521, %vm2522
  %v2524 = vsel %vm2523, %v2516, %v2520
  %v2525 = vand.u32 2147483647, %v1626
  %vm2526 = vcmp.eq.f32.partialorder %v2525, 8.507059e+37
  %v2527 = vand.u32 %v1626, 2147483648
  %v2528 = vor.u32 1.1754944e-38, %v2527
  %v2529 = vsel %vm2526, %v2528, %v2524
  %v2530 = vmul.f32 1.0, %v2529
  %v2531 = vrcp.pop %v1627
  %v2532 = vmul.f32 %v1627, %v2531
  %v2533 = vsub.f32 1.0, %v2532
  %v2534 = vmul.f32 %v2531, %v2533
  %v2535 = vadd.f32 %v2531, %v2534
  %vm2536 = vweird.f32 %v1627
  %vm2537 = vweird.f32 %v2531
  %vm2538 = vmor %vm2536, %vm2537
  %v2539 = vsel %vm2538, %v2531, %v2535
  %v2540 = vand.u32 2147483647, %v1627
  %vm2541 = vcmp.eq.f32.partialorder %v2540, 8.507059e+37
  %v2542 = vand.u32 %v1627, 2147483648
  %v2543 = vor.u32 1.1754944e-38, %v2542
  %v2544 = vsel %vm2541, %v2543, %v2539
  %v2545 = vmul.f32 1.0, %v2544
  %v2546 = vrcp.pop %v1628
  %v2547 = vmul.f32 %v1628, %v2546
  %v2548 = vsub.f32 1.0, %v2547
  %v2549 = vmul.f32 %v2546, %v2548
  %v2550 = vadd.f32 %v2546, %v2549
  %vm2551 = vweird.f32 %v1628
  %vm2552 = vweird.f32 %v2546
  %vm2553 = vmor %vm2551, %vm2552
  %v2554 = vsel %vm2553, %v2546, %v2550
  %v2555 = vand.u32 2147483647, %v1628
  %vm2556 = vcmp.eq.f32.partialorder %v2555, 8.507059e+37
  %v2557 = vand.u32 %v1628, 2147483648
  %v2558 = vor.u32 1.1754944e-38, %v2557
  %v2559 = vsel %vm2556, %v2558, %v2554
  %v2560 = vmul.f32 1.0, %v2559
  %v2561 = vrcp.pop %v1629
  %v2562 = vmul.f32 %v1629, %v2561
  %v2563 = vsub.f32 1.0, %v2562
  %v2564 = vmul.f32 %v2561, %v2563
  %v2565 = vadd.f32 %v2561, %v2564
  %vm2566 = vweird.f32 %v1629
  %vm2567 = vweird.f32 %v2561
  %vm2568 = vmor %vm2566, %vm2567
  %v2569 = vsel %vm2568, %v2561, %v2565
  %v2570 = vand.u32 2147483647, %v1629
  %vm2571 = vcmp.eq.f32.partialorder %v2570, 8.507059e+37
  %v2572 = vand.u32 %v1629, 2147483648
  %v2573 = vor.u32 1.1754944e-38, %v2572
  %v2574 = vsel %vm2571, %v2573, %v2569
  %v2575 = vmul.f32 1.0, %v2574
  %v2576 = vrcp.pop %v1630
  %v2577 = vmul.f32 %v1630, %v2576
  %v2578 = vsub.f32 1.0, %v2577
  %v2579 = vmul.f32 %v2576, %v2578
  %v2580 = vadd.f32 %v2576, %v2579
  %vm2581 = vweird.f32 %v1630
  %vm2582 = vweird.f32 %v2576
  %vm2583 = vmor %vm2581, %vm2582
  %v2584 = vsel %vm2583, %v2576, %v2580
  %v2585 = vand.u32 2147483647, %v1630
  %vm2586 = vcmp.eq.f32.partialorder %v2585, 8.507059e+37
  %v2587 = vand.u32 %v1630, 2147483648
  %v2588 = vor.u32 1.1754944e-38, %v2587
  %v2589 = vsel %vm2586, %v2588, %v2584
  %v2590 = vmul.f32 1.0, %v2589
  %vm2591 = vcmask 97280
  %2592 = vst.msk [vmem:[%s3] sm:$0xff] %vm2591, %v1645
  %2593 = vst.msk [vmem:[%s3 + $0x8] sm:$0xff] %vm2591, %v1660
  %2594 = vst.msk [vmem:[%s3 + $0x10] sm:$0xff] %vm2591, %v1675
  %2595 = vst.msk [vmem:[%s3 + $0x18] sm:$0xff] %vm2591, %v1690
  %2596 = vst.msk [vmem:[%s3 + $0x20] sm:$0xff] %vm2591, %v1705
  %2597 = vst.msk [vmem:[%s3 + $0x28] sm:$0xff] %vm2591, %v1720
  %2598 = vst.msk [vmem:[%s3 + $0x30] sm:$0xff] %vm2591, %v1735
  %2599 = vst.msk [vmem:[%s3 + $0x38] sm:$0xff] %vm2591, %v1750
  %2600 = vst.msk [vmem:[%s3 + $0x40] sm:$0xff] %vm2591, %v1765
  %2601 = vst.msk [vmem:[%s3 + $0x48] sm:$0xff] %vm2591, %v1780
  %2602 = vst.msk [vmem:[%s3 + $0x50] sm:$0xff] %vm2591, %v1795
  %2603 = vst.msk [vmem:[%s3 + $0x58] sm:$0xff] %vm2591, %v1810
  %2604 = vst.msk [vmem:[%s3 + $0x60] sm:$0xff] %vm2591, %v1825
  %2605 = vst.msk [vmem:[%s3 + $0x68] sm:$0xff] %vm2591, %v1840
  %2606 = vst.msk [vmem:[%s3 + $0x70] sm:$0xff] %vm2591, %v1855
  %2607 = vst.msk [vmem:[%s3 + $0x78] sm:$0xff] %vm2591, %v1870
  %2608 = vst.msk [vmem:[%s3 + $0x80] sm:$0xff] %vm2591, %v1885
  %2609 = vst.msk [vmem:[%s3 + $0x88] sm:$0xff] %vm2591, %v1900
  %2610 = vst.msk [vmem:[%s3 + $0x90] sm:$0xff] %vm2591, %v1915
  %2611 = vst.msk [vmem:[%s3 + $0x98] sm:$0xff] %vm2591, %v1930
  %2612 = vst.msk [vmem:[%s3 + $0xa0] sm:$0xff] %vm2591, %v1945
  %2613 = vst.msk [vmem:[%s3 + $0xa8] sm:$0xff] %vm2591, %v1960
  %2614 = vst.msk [vmem:[%s3 + $0xb0] sm:$0xff] %vm2591, %v1975
  %2615 = vst.msk [vmem:[%s3 + $0xb8] sm:$0xff] %vm2591, %v1990
  %2616 = vst.msk [vmem:[%s3 + $0xc0] sm:$0xff] %vm2591, %v2005
  %2617 = vst.msk [vmem:[%s3 + $0xc8] sm:$0xff] %vm2591, %v2020
  %2618 = vst.msk [vmem:[%s3 + $0xd0] sm:$0xff] %vm2591, %v2035
  %2619 = vst.msk [vmem:[%s3 + $0xd8] sm:$0xff] %vm2591, %v2050
  %2620 = vst.msk [vmem:[%s3 + $0xe0] sm:$0xff] %vm2591, %v2065
  %2621 = vst.msk [vmem:[%s3 + $0xe8] sm:$0xff] %vm2591, %v2080
  %2622 = vst.msk [vmem:[%s3 + $0xf0] sm:$0xff] %vm2591, %v2095
  %2623 = vst.msk [vmem:[%s3 + $0xf8] sm:$0xff] %vm2591, %v2110
  %2624 = vst.msk [vmem:[%s3 + $0x100] sm:$0xff] %vm2591, %v2125
  %2625 = vst.msk [vmem:[%s3 + $0x108] sm:$0xff] %vm2591, %v2140
  %2626 = vst.msk [vmem:[%s3 + $0x110] sm:$0xff] %vm2591, %v2155
  %2627 = vst.msk [vmem:[%s3 + $0x118] sm:$0xff] %vm2591, %v2170
  %2628 = vst.msk [vmem:[%s3 + $0x120] sm:$0xff] %vm2591, %v2185
  %2629 = vst.msk [vmem:[%s3 + $0x128] sm:$0xff] %vm2591, %v2200
  %2630 = vst.msk [vmem:[%s3 + $0x130] sm:$0xff] %vm2591, %v2215
  %2631 = vst.msk [vmem:[%s3 + $0x138] sm:$0xff] %vm2591, %v2230
  %2632 = vst.msk [vmem:[%s3 + $0x140] sm:$0xff] %vm2591, %v2245
  %2633 = vst.msk [vmem:[%s3 + $0x148] sm:$0xff] %vm2591, %v2260
  %2634 = vst.msk [vmem:[%s3 + $0x150] sm:$0xff] %vm2591, %v2275
  %2635 = vst.msk [vmem:[%s3 + $0x158] sm:$0xff] %vm2591, %v2290
  %2636 = vst.msk [vmem:[%s3 + $0x160] sm:$0xff] %vm2591, %v2305
  %2637 = vst.msk [vmem:[%s3 + $0x168] sm:$0xff] %vm2591, %v2320
  %2638 = vst.msk [vmem:[%s3 + $0x170] sm:$0xff] %vm2591, %v2335
  %2639 = vst.msk [vmem:[%s3 + $0x178] sm:$0xff] %vm2591, %v2350
  %2640 = vst.msk [vmem:[%s3 + $0x180] sm:$0xff] %vm2591, %v2365
  %2641 = vst.msk [vmem:[%s3 + $0x188] sm:$0xff] %vm2591, %v2380
  %2642 = vst.msk [vmem:[%s3 + $0x190] sm:$0xff] %vm2591, %v2395
  %2643 = vst.msk [vmem:[%s3 + $0x198] sm:$0xff] %vm2591, %v2410
  %2644 = vst.msk [vmem:[%s3 + $0x1a0] sm:$0xff] %vm2591, %v2425
  %2645 = vst.msk [vmem:[%s3 + $0x1a8] sm:$0xff] %vm2591, %v2440
  %2646 = vst.msk [vmem:[%s3 + $0x1b0] sm:$0xff] %vm2591, %v2455
  %2647 = vst.msk [vmem:[%s3 + $0x1b8] sm:$0xff] %vm2591, %v2470
  %2648 = vst.msk [vmem:[%s3 + $0x1c0] sm:$0xff] %vm2591, %v2485
  %2649 = vst.msk [vmem:[%s3 + $0x1c8] sm:$0xff] %vm2591, %v2500
  %2650 = vst.msk [vmem:[%s3 + $0x1d0] sm:$0xff] %vm2591, %v2515
  %2651 = vst.msk [vmem:[%s3 + $0x1d8] sm:$0xff] %vm2591, %v2530
  %2652 = vst.msk [vmem:[%s3 + $0x1e0] sm:$0xff] %vm2591, %v2545
  %2653 = vst.msk [vmem:[%s3 + $0x1e8] sm:$0xff] %vm2591, %v2560
  %2654 = vst.msk [vmem:[%s3 + $0x1f0] sm:$0xff] %vm2591, %v2575
  %2655 = vst.msk [vmem:[%s3 + $0x1f8] sm:$0xff] %vm2591, %v2590
  // Predicated region
  $region14: #{cifar_decoder_forward.7} parent=0 // pred_check
    _
  $region15: #{cifar_decoder_forward.7} parent=0 // pred_check_branch
    %2657 = sbr.rel (0) target = $region17
  $region16: #{cifar_decoder_forward.7} parent=0 // pred_region
    _
  $region17: #{cifar_decoder_forward.7} parent=0 // pred_fallthru
    _
  // Predicated region
  $region18: #{cifar_decoder_forward.7} parent=0 // pred_check
    _
  $region19: #{cifar_decoder_forward.7} parent=0 // pred_check_branch
    %2659 = sbr.rel (0) target = $region21
  $region20: #{cifar_decoder_forward.7} parent=0 // pred_region
    _
  $region21: #{cifar_decoder_forward.7} parent=0 // pred_fallthru
    _

</llo_original>
